<compile_context>
chip_gen: v5e
topology: v5e:2x2
jax: 0.10.0
libtpu: 0.0.40
codegen_flags: <defaults>
</compile_context>

<pallas_src>
import functools

import numpy as np
import jax
import jax.numpy as jnp
from jax.experimental import pallas as pl
from jax.experimental.pallas import tpu as pltpu

_EPS = 1e-5


# --------------------------- fused Pallas kernel -----------------------------

def _make_fused_kernel(step_flags):
    """step_flags: tuple of (relu, save_residual, add_residual) per conv layer."""

    def kernel(x_ref, *refs):
        out_ref = refs[-1]                       # last ref is the output tile
        h = x_ref[...]                           # (TM, L0*C0) f32, stays in VMEM
        block_in = None
        for i, (relu, save, add) in enumerate(step_flags):
            m_ref = refs[2 * i]                  # (L_in*C_in, L_out*C_out) bf16
            shift = refs[2 * i + 1][...]         # (1, L_out*C_out) f32
            if save:                             # input of a BaseConv block
                block_in = h
            # bf16 weights + bf16 activations into the MXU, f32 accumulation.
            y = jnp.dot(h.astype(jnp.bfloat16), m_ref[...],
                        preferred_element_type=jnp.float32)
            y = y + shift                        # conv bias + folded BN shift
            if add:                              # BaseConv residual skip (f32)
                y = y + block_in
            if relu:
                y = jnp.maximum(y, 0.0)
            h = y
        out_ref[...] = h.astype(out_ref.dtype)

    return kernel


def fcn_forward(arrays, x_ids, *, step_flags, dim_out):
    # embedding lookup (wrapper-side gather): (B,) int32 -> (B, dim_emb)
    cell = arrays["cell_embed"][x_ids[:, 0]]
    comp = arrays["comp_embed"][x_ids[:, 1]]
    B = cell.shape[0]
    # torch: cat([cell.unsqueeze(1), comp.unsqueeze(1)], dim=1) -> (B, C=2, L)
    # channels-last flattened here: feature index = l*2 + c
    x0 = jnp.stack([cell, comp], axis=-1).reshape(B, -1).astype(jnp.float32)
    f0 = x0.shape[1]

    # Batch tile: sublane-aligned (8) for tiny batches, MXU-sized for big ones.
    tile_m = 128 if B >= 128 else 8
    b_pad = ((B + tile_m - 1) // tile_m) * tile_m
    if b_pad != B:
        x0 = jnp.pad(x0, ((0, b_pad - B), (0, 0)))

    args = [x0]
    in_specs = [pl.BlockSpec((tile_m, f0), lambda i: (i, 0))]
    for m, sh in zip(arrays["mats"], arrays["shifts"]):
        args.append(m)
        in_specs.append(pl.BlockSpec(m.shape, lambda i: (0, 0)))   # resident
        args.append(sh)
        in_specs.append(pl.BlockSpec(sh.shape, lambda i: (0, 0)))  # resident

    out = pl.pallas_call(
        _make_fused_kernel(step_flags),
        out_shape=jax.ShapeDtypeStruct((b_pad, dim_out), jnp.float32),
        grid_spec=pltpu.PrefetchScalarGridSpec(
            num_scalar_prefetch=0,
            grid=(b_pad // tile_m,),
            in_specs=in_specs,
            out_specs=pl.BlockSpec((tile_m, dim_out), lambda i: (i, 0)),
        ),
        compiler_params=pltpu.CompilerParams(
            dimension_semantics=("parallel",),
            vmem_limit_bytes=32 * 1024 * 1024,
        ),
    )(*args)
    return out[:B]


# --------------------------- parameter init ---------------------------------

def _conv_params(key, cin, cout, k):
    kw, kb = jax.random.split(key)
    bound = 1.0 / (cin * k) ** 0.5
    return {"w": jax.random.uniform(kw, (cout, cin, k), jnp.float32, -bound, bound),
            "b": jax.random.uniform(kb, (cout,), jnp.float32, -bound, bound)}


def _bn_params(key, c):
    kg, kb = jax.random.split(key)
    return {"gamma": 1.0 + 0.1 * jax.random.normal(kg, (c,), jnp.float32),
            "beta": 0.1 * jax.random.normal(kb, (c,), jnp.float32),
            "mean": jnp.zeros((c,), jnp.float32),    # eval-mode running stats
            "var": jnp.ones((c,), jnp.float32)}


def init_fcn_params(key, dim_emb, dim_model, dim_out, num_layers):
    it = iter(jax.random.split(key, 1024))

    def base_conv(cin, mid, cout):
        return {"conv1": _conv_params(next(it), cin, mid, 3),
                "bn1": _bn_params(next(it), mid),
                "conv2": _conv_params(next(it), mid, cout, 3),
                "bn2": _bn_params(next(it), cout)}

    def down(cin):
        return {"conv": _conv_params(next(it), cin, 2 * cin, 4),
                "bn": _bn_params(next(it), 2 * cin)}

    p = {}
    p["cell_embed"] = jax.random.normal(next(it), (6, dim_emb), jnp.float32)
    p["comp_embed"] = jax.random.normal(next(it), (146, dim_emb), jnp.float32)
    p["conv1"] = _conv_params(next(it), 2, dim_model, 3)
    p["layer1"] = [base_conv(dim_model, 2 * dim_model, dim_model)
                   for _ in range(num_layers)]
    p["upsam1"] = down(dim_model)
    p["layer2"] = [base_conv(2 * dim_model, 4 * dim_model, 2 * dim_model)
                   for _ in range(num_layers)]
    p["upsam2"] = down(2 * dim_model)
    p["layer3"] = [base_conv(4 * dim_model, 8 * dim_model, 4 * dim_model)
                   for _ in range(num_layers)]
    p["upsam3"] = down(4 * dim_model)
    p["layer4"] = [base_conv(8 * dim_model, 16 * dim_model, 8 * dim_model)
                   for _ in range(num_layers)]
    # PyTorch: nn.Conv1d(8*dm, dim_out, dim_emb//8, stride=dim_emb//8, pad=0)
    p["conv2"] = _conv_params(next(it), 8 * dim_model, dim_out, dim_emb // 8)
    return p


# ----------------------- one-time parameter folding --------------------------

def _banded_conv_matrix(w, l_in, stride, pad):
    """Conv1d (torch weight layout (C_out, C_in, K)) as a dense block-banded
    matrix acting on the channels-last flattened signal (L_in*C_in,)."""
    w = np.asarray(w, dtype=np.float32)
    c_out, c_in, k = w.shape
    l_out = (l_in + 2 * pad - k) // stride + 1
    m = np.zeros((l_in * c_in, l_out * c_out), np.float32)
    for lo in range(l_out):
        for kk in range(k):
            li = lo * stride + kk - pad
            if 0 <= li < l_in:
                m[li * c_in:(li + 1) * c_in,
                  lo * c_out:(lo + 1) * c_out] = w[:, :, kk].T
    return m, l_out


def fold_fcn_params(params, dim_emb, dim_model, dim_out, num_layers):
    mats, shifts, flags = [], [], []

    def add_conv(conv, bn, l_in, stride, pad, relu, save=False, add=False):
        m, l_out = _banded_conv_matrix(conv["w"], l_in, stride, pad)
        c_out = int(conv["w"].shape[0])
        bias = np.asarray(conv["b"], np.float32)
        if bn is None:
            scale = np.ones((c_out,), np.float32)
            bshift = np.zeros((c_out,), np.float32)
        else:
            gamma = np.asarray(bn["gamma"], np.float32)
            beta = np.asarray(bn["beta"], np.float32)
            mean = np.asarray(bn["mean"], np.float32)
            var = np.asarray(bn["var"], np.float32)
            scale = gamma / np.sqrt(var + _EPS)
            bshift = beta - mean * scale
        # Fold the BN scale into the matrix columns (kernel epilogue = y + shift)
        m = m * np.tile(scale, l_out)[None, :]
        sh = np.tile(bias * scale + bshift, l_out)[None, :]
        mats.append(jnp.asarray(m, dtype=jnp.bfloat16))    # bf16 weights
        shifts.append(jnp.asarray(sh, dtype=jnp.float32))  # f32 shift row
        flags.append((relu, save, add))
        return l_out

    L = dim_emb
    L = add_conv(params["conv1"], None, L, 1, 1, relu=False)
    for stage, upsam in (("layer1", "upsam1"), ("layer2", "upsam2"),
                         ("layer3", "upsam3"), ("layer4", None)):
        for p in params[stage]:
            add_conv(p["conv1"], p["bn1"], L, 1, 1, relu=True, save=True)
            L = add_conv(p["conv2"], p["bn2"], L, 1, 1, relu=True, add=True)
        if upsam is not None:
            L = add_conv(params[upsam]["conv"], params[upsam]["bn"],
                         L, 2, 1, relu=True)
    # Final conv: kernel = stride = dim_emb // 8, pad = 0 (matches PyTorch ctor)
    L = add_conv(params["conv2"], None, L, dim_emb // 8, 0, relu=False)
    assert L == 1, L

    arrays = {"cell_embed": params["cell_embed"],
              "comp_embed": params["comp_embed"],
              "mats": mats, "shifts": shifts}
    return arrays, tuple(flags)


# ------------------------------ main -----------------------------------------

if __name__ == "__main__":
    dim_emb, dim_model, dim_out, num_layers = 32, 8, 16, 1
    B = 4

    key = jax.random.PRNGKey(0)
    kp, k0, k1 = jax.random.split(key, 3)
    params = init_fcn_params(kp, dim_emb, dim_model, dim_out, num_layers)
    arrays, step_flags = fold_fcn_params(params, dim_emb, dim_model,
                                         dim_out, num_layers)

    cell_ids = jax.random.randint(k0, (B,), 0, 6)
    comp_ids = jax.random.randint(k1, (B,), 0, 146)
    x_ids = jnp.stack([cell_ids, comp_ids], axis=1).astype(jnp.int32)  # (B, 2)

    fwd = jax.jit(functools.partial(fcn_forward, step_flags=step_flags,
                                    dim_out=dim_out))
    out = fwd(arrays, x_ids)
    jax.block_until_ready(out)
    assert out.shape == (B, dim_out), out.shape
    assert out.dtype == jnp.float32
    print("KERNEL_OK")
</pallas_src>

<mosaic_0001>
module attributes {stable_mosaic.version = 11 : i64} {
  func.func @kernel(%arg0: i32, %arg1: memref<8x64xf32, #tpu.memory_space<vmem>>, %arg2: memref<64x256xbf16, #tpu.memory_space<vmem>>, %arg3: memref<1x256xf32, #tpu.memory_space<vmem>>, %arg4: memref<256x512xbf16, #tpu.memory_space<vmem>>, %arg5: memref<1x512xf32, #tpu.memory_space<vmem>>, %arg6: memref<512x256xbf16, #tpu.memory_space<vmem>>, %arg7: memref<1x256xf32, #tpu.memory_space<vmem>>, %arg8: memref<256x256xbf16, #tpu.memory_space<vmem>>, %arg9: memref<1x256xf32, #tpu.memory_space<vmem>>, %arg10: memref<256x512xbf16, #tpu.memory_space<vmem>>, %arg11: memref<1x512xf32, #tpu.memory_space<vmem>>, %arg12: memref<512x256xbf16, #tpu.memory_space<vmem>>, %arg13: memref<1x256xf32, #tpu.memory_space<vmem>>, %arg14: memref<256x256xbf16, #tpu.memory_space<vmem>>, %arg15: memref<1x256xf32, #tpu.memory_space<vmem>>, %arg16: memref<256x512xbf16, #tpu.memory_space<vmem>>, %arg17: memref<1x512xf32, #tpu.memory_space<vmem>>, %arg18: memref<512x256xbf16, #tpu.memory_space<vmem>>, %arg19: memref<1x256xf32, #tpu.memory_space<vmem>>, %arg20: memref<256x256xbf16, #tpu.memory_space<vmem>>, %arg21: memref<1x256xf32, #tpu.memory_space<vmem>>, %arg22: memref<256x512xbf16, #tpu.memory_space<vmem>>, %arg23: memref<1x512xf32, #tpu.memory_space<vmem>>, %arg24: memref<512x256xbf16, #tpu.memory_space<vmem>>, %arg25: memref<1x256xf32, #tpu.memory_space<vmem>>, %arg26: memref<256x16xbf16, #tpu.memory_space<vmem>>, %arg27: memref<1x16xf32, #tpu.memory_space<vmem>>, %arg28: memref<8x16xf32, #tpu.memory_space<vmem>>) attributes {dimension_semantics = [#tpu.dimension_semantics<parallel>], iteration_bounds = array<i64: 1>, scalar_prefetch = 0 : i64, scratch_operands = 0 : i64, tpu.core_type = #tpu.core_type<tc>, window_params = [{transform_indices = @transform_0, window_bounds = array<i64: 8, 64>}, {pipeline_mode = #tpu.pipeline_mode<synchronous>, transform_indices = @transform_1, window_bounds = array<i64: 64, 256>}, {pipeline_mode = #tpu.pipeline_mode<synchronous>, transform_indices = @transform_2, window_bounds = array<i64: 1, 256>}, {pipeline_mode = #tpu.pipeline_mode<synchronous>, transform_indices = @transform_3, window_bounds = array<i64: 256, 512>}, {pipeline_mode = #tpu.pipeline_mode<synchronous>, transform_indices = @transform_4, window_bounds = array<i64: 1, 512>}, {pipeline_mode = #tpu.pipeline_mode<synchronous>, transform_indices = @transform_5, window_bounds = array<i64: 512, 256>}, {pipeline_mode = #tpu.pipeline_mode<synchronous>, transform_indices = @transform_6, window_bounds = array<i64: 1, 256>}, {pipeline_mode = #tpu.pipeline_mode<synchronous>, transform_indices = @transform_7, window_bounds = array<i64: 256, 256>}, {pipeline_mode = #tpu.pipeline_mode<synchronous>, transform_indices = @transform_8, window_bounds = array<i64: 1, 256>}, {pipeline_mode = #tpu.pipeline_mode<synchronous>, transform_indices = @transform_9, window_bounds = array<i64: 256, 512>}, {pipeline_mode = #tpu.pipeline_mode<synchronous>, transform_indices = @transform_10, window_bounds = array<i64: 1, 512>}, {pipeline_mode = #tpu.pipeline_mode<synchronous>, transform_indices = @transform_11, window_bounds = array<i64: 512, 256>}, {pipeline_mode = #tpu.pipeline_mode<synchronous>, transform_indices = @transform_12, window_bounds = array<i64: 1, 256>}, {pipeline_mode = #tpu.pipeline_mode<synchronous>, transform_indices = @transform_13, window_bounds = array<i64: 256, 256>}, {pipeline_mode = #tpu.pipeline_mode<synchronous>, transform_indices = @transform_14, window_bounds = array<i64: 1, 256>}, {pipeline_mode = #tpu.pipeline_mode<synchronous>, transform_indices = @transform_15, window_bounds = array<i64: 256, 512>}, {pipeline_mode = #tpu.pipeline_mode<synchronous>, transform_indices = @transform_16, window_bounds = array<i64: 1, 512>}, {pipeline_mode = #tpu.pipeline_mode<synchronous>, transform_indices = @transform_17, window_bounds = array<i64: 512, 256>}, {pipeline_mode = #tpu.pipeline_mode<synchronous>, transform_indices = @transform_18, window_bounds = array<i64: 1, 256>}, {pipeline_mode = #tpu.pipeline_mode<synchronous>, transform_indices = @transform_19, window_bounds = array<i64: 256, 256>}, {pipeline_mode = #tpu.pipeline_mode<synchronous>, transform_indices = @transform_20, window_bounds = array<i64: 1, 256>}, {pipeline_mode = #tpu.pipeline_mode<synchronous>, transform_indices = @transform_21, window_bounds = array<i64: 256, 512>}, {pipeline_mode = #tpu.pipeline_mode<synchronous>, transform_indices = @transform_22, window_bounds = array<i64: 1, 512>}, {pipeline_mode = #tpu.pipeline_mode<synchronous>, transform_indices = @transform_23, window_bounds = array<i64: 512, 256>}, {pipeline_mode = #tpu.pipeline_mode<synchronous>, transform_indices = @transform_24, window_bounds = array<i64: 1, 256>}, {pipeline_mode = #tpu.pipeline_mode<synchronous>, transform_indices = @transform_25, window_bounds = array<i64: 256, 16>}, {pipeline_mode = #tpu.pipeline_mode<synchronous>, transform_indices = @transform_26, window_bounds = array<i64: 1, 16>}, {transform_indices = @transform_27, window_bounds = array<i64: 8, 16>}]} {
    %c0 = arith.constant 0 : index
    %c0_0 = arith.constant 0 : index
    %0 = vector.load %arg1[%c0, %c0_0] : memref<8x64xf32, #tpu.memory_space<vmem>>, vector<8x64xf32>
    %c0_1 = arith.constant 0 : index
    %c0_2 = arith.constant 0 : index
    %1 = vector.load %arg3[%c0_1, %c0_2] : memref<1x256xf32, #tpu.memory_space<vmem>>, vector<1x256xf32>
    %2 = arith.truncf %0 : vector<8x64xf32> to vector<8x64xbf16>
    %c0_3 = arith.constant 0 : index
    %c0_4 = arith.constant 0 : index
    %3 = vector.load %arg2[%c0_3, %c0_4] : memref<64x256xbf16, #tpu.memory_space<vmem>>, vector<64x256xbf16>
    %cst = arith.constant dense<0.000000e+00> : vector<8x256xf32>
    %4 = tpu.matmul %2, %3, %cst {dimension_numbers = #tpu.dot_dimension_numbers<[1], [0], [0], [1], [0, 0, 1, 1], [], []>} : vector<8x64xbf16>, vector<64x256xbf16>, vector<8x256xf32> -> vector<8x256xf32>
    %5 = vector.broadcast %1 : vector<1x256xf32> to vector<8x256xf32>
    %6 = arith.addf %4, %5 : vector<8x256xf32>
    %c0_5 = arith.constant 0 : index
    %c0_6 = arith.constant 0 : index
    %7 = vector.load %arg5[%c0_5, %c0_6] : memref<1x512xf32, #tpu.memory_space<vmem>>, vector<1x512xf32>
    %8 = arith.truncf %6 : vector<8x256xf32> to vector<8x256xbf16>
    %c0_7 = arith.constant 0 : index
    %c0_8 = arith.constant 0 : index
    %9 = vector.load %arg4[%c0_7, %c0_8] : memref<256x512xbf16, #tpu.memory_space<vmem>>, vector<256x512xbf16>
    %cst_9 = arith.constant dense<0.000000e+00> : vector<8x512xf32>
    %10 = tpu.matmul %8, %9, %cst_9 {dimension_numbers = #tpu.dot_dimension_numbers<[1], [0], [0], [1], [0, 0, 1, 1], [], []>} : vector<8x256xbf16>, vector<256x512xbf16>, vector<8x512xf32> -> vector<8x512xf32>
    %11 = vector.broadcast %7 : vector<1x512xf32> to vector<8x512xf32>
    %12 = arith.addf %10, %11 : vector<8x512xf32>
    %cst_10 = arith.constant 0.000000e+00 : f32
    %13 = vector.broadcast %cst_10 : f32 to vector<8x512xf32>
    %14 = arith.maximumf %12, %13 : vector<8x512xf32>
    %c0_11 = arith.constant 0 : index
    %c0_12 = arith.constant 0 : index
    %15 = vector.load %arg7[%c0_11, %c0_12] : memref<1x256xf32, #tpu.memory_space<vmem>>, vector<1x256xf32>
    %16 = arith.truncf %14 : vector<8x512xf32> to vector<8x512xbf16>
    %c0_13 = arith.constant 0 : index
    %c0_14 = arith.constant 0 : index
    %17 = vector.load %arg6[%c0_13, %c0_14] : memref<512x256xbf16, #tpu.memory_space<vmem>>, vector<512x256xbf16>
    %cst_15 = arith.constant dense<0.000000e+00> : vector<8x256xf32>
    %18 = tpu.matmul %16, %17, %cst_15 {dimension_numbers = #tpu.dot_dimension_numbers<[1], [0], [0], [1], [0, 0, 1, 1], [], []>} : vector<8x512xbf16>, vector<512x256xbf16>, vector<8x256xf32> -> vector<8x256xf32>
    %19 = vector.broadcast %15 : vector<1x256xf32> to vector<8x256xf32>
    %20 = arith.addf %18, %19 : vector<8x256xf32>
    %21 = arith.addf %20, %6 : vector<8x256xf32>
    %cst_16 = arith.constant 0.000000e+00 : f32
    %22 = vector.broadcast %cst_16 : f32 to vector<8x256xf32>
    %23 = arith.maximumf %21, %22 : vector<8x256xf32>
    %c0_17 = arith.constant 0 : index
    %c0_18 = arith.constant 0 : index
    %24 = vector.load %arg9[%c0_17, %c0_18] : memref<1x256xf32, #tpu.memory_space<vmem>>, vector<1x256xf32>
    %25 = arith.truncf %23 : vector<8x256xf32> to vector<8x256xbf16>
    %c0_19 = arith.constant 0 : index
    %c0_20 = arith.constant 0 : index
    %26 = vector.load %arg8[%c0_19, %c0_20] : memref<256x256xbf16, #tpu.memory_space<vmem>>, vector<256x256xbf16>
    %cst_21 = arith.constant dense<0.000000e+00> : vector<8x256xf32>
    %27 = tpu.matmul %25, %26, %cst_21 {dimension_numbers = #tpu.dot_dimension_numbers<[1], [0], [0], [1], [0, 0, 1, 1], [], []>} : vector<8x256xbf16>, vector<256x256xbf16>, vector<8x256xf32> -> vector<8x256xf32>
    %28 = vector.broadcast %24 : vector<1x256xf32> to vector<8x256xf32>
    %29 = arith.addf %27, %28 : vector<8x256xf32>
    %cst_22 = arith.constant 0.000000e+00 : f32
    %30 = vector.broadcast %cst_22 : f32 to vector<8x256xf32>
    %31 = arith.maximumf %29, %30 : vector<8x256xf32>
    %c0_23 = arith.constant 0 : index
    %c0_24 = arith.constant 0 : index
    %32 = vector.load %arg11[%c0_23, %c0_24] : memref<1x512xf32, #tpu.memory_space<vmem>>, vector<1x512xf32>
    %33 = arith.truncf %31 : vector<8x256xf32> to vector<8x256xbf16>
    %c0_25 = arith.constant 0 : index
    %c0_26 = arith.constant 0 : index
    %34 = vector.load %arg10[%c0_25, %c0_26] : memref<256x512xbf16, #tpu.memory_space<vmem>>, vector<256x512xbf16>
    %cst_27 = arith.constant dense<0.000000e+00> : vector<8x512xf32>
    %35 = tpu.matmul %33, %34, %cst_27 {dimension_numbers = #tpu.dot_dimension_numbers<[1], [0], [0], [1], [0, 0, 1, 1], [], []>} : vector<8x256xbf16>, vector<256x512xbf16>, vector<8x512xf32> -> vector<8x512xf32>
    %36 = vector.broadcast %32 : vector<1x512xf32> to vector<8x512xf32>
    %37 = arith.addf %35, %36 : vector<8x512xf32>
    %cst_28 = arith.constant 0.000000e+00 : f32
    %38 = vector.broadcast %cst_28 : f32 to vector<8x512xf32>
    %39 = arith.maximumf %37, %38 : vector<8x512xf32>
    %c0_29 = arith.constant 0 : index
    %c0_30 = arith.constant 0 : index
    %40 = vector.load %arg13[%c0_29, %c0_30] : memref<1x256xf32, #tpu.memory_space<vmem>>, vector<1x256xf32>
    %41 = arith.truncf %39 : vector<8x512xf32> to vector<8x512xbf16>
    %c0_31 = arith.constant 0 : index
    %c0_32 = arith.constant 0 : index
    %42 = vector.load %arg12[%c0_31, %c0_32] : memref<512x256xbf16, #tpu.memory_space<vmem>>, vector<512x256xbf16>
    %cst_33 = arith.constant dense<0.000000e+00> : vector<8x256xf32>
    %43 = tpu.matmul %41, %42, %cst_33 {dimension_numbers = #tpu.dot_dimension_numbers<[1], [0], [0], [1], [0, 0, 1, 1], [], []>} : vector<8x512xbf16>, vector<512x256xbf16>, vector<8x256xf32> -> vector<8x256xf32>
    %44 = vector.broadcast %40 : vector<1x256xf32> to vector<8x256xf32>
    %45 = arith.addf %43, %44 : vector<8x256xf32>
    %46 = arith.addf %45, %31 : vector<8x256xf32>
    %cst_34 = arith.constant 0.000000e+00 : f32
    %47 = vector.broadcast %cst_34 : f32 to vector<8x256xf32>
    %48 = arith.maximumf %46, %47 : vector<8x256xf32>
    %c0_35 = arith.constant 0 : index
    %c0_36 = arith.constant 0 : index
    %49 = vector.load %arg15[%c0_35, %c0_36] : memref<1x256xf32, #tpu.memory_space<vmem>>, vector<1x256xf32>
    %50 = arith.truncf %48 : vector<8x256xf32> to vector<8x256xbf16>
    %c0_37 = arith.constant 0 : index
    %c0_38 = arith.constant 0 : index
    %51 = vector.load %arg14[%c0_37, %c0_38] : memref<256x256xbf16, #tpu.memory_space<vmem>>, vector<256x256xbf16>
    %cst_39 = arith.constant dense<0.000000e+00> : vector<8x256xf32>
    %52 = tpu.matmul %50, %51, %cst_39 {dimension_numbers = #tpu.dot_dimension_numbers<[1], [0], [0], [1], [0, 0, 1, 1], [], []>} : vector<8x256xbf16>, vector<256x256xbf16>, vector<8x256xf32> -> vector<8x256xf32>
    %53 = vector.broadcast %49 : vector<1x256xf32> to vector<8x256xf32>
    %54 = arith.addf %52, %53 : vector<8x256xf32>
    %cst_40 = arith.constant 0.000000e+00 : f32
    %55 = vector.broadcast %cst_40 : f32 to vector<8x256xf32>
    %56 = arith.maximumf %54, %55 : vector<8x256xf32>
    %c0_41 = arith.constant 0 : index
    %c0_42 = arith.constant 0 : index
    %57 = vector.load %arg17[%c0_41, %c0_42] : memref<1x512xf32, #tpu.memory_space<vmem>>, vector<1x512xf32>
    %58 = arith.truncf %56 : vector<8x256xf32> to vector<8x256xbf16>
    %c0_43 = arith.constant 0 : index
    %c0_44 = arith.constant 0 : index
    %59 = vector.load %arg16[%c0_43, %c0_44] : memref<256x512xbf16, #tpu.memory_space<vmem>>, vector<256x512xbf16>
    %cst_45 = arith.constant dense<0.000000e+00> : vector<8x512xf32>
    %60 = tpu.matmul %58, %59, %cst_45 {dimension_numbers = #tpu.dot_dimension_numbers<[1], [0], [0], [1], [0, 0, 1, 1], [], []>} : vector<8x256xbf16>, vector<256x512xbf16>, vector<8x512xf32> -> vector<8x512xf32>
    %61 = vector.broadcast %57 : vector<1x512xf32> to vector<8x512xf32>
    %62 = arith.addf %60, %61 : vector<8x512xf32>
    %cst_46 = arith.constant 0.000000e+00 : f32
    %63 = vector.broadcast %cst_46 : f32 to vector<8x512xf32>
    %64 = arith.maximumf %62, %63 : vector<8x512xf32>
    %c0_47 = arith.constant 0 : index
    %c0_48 = arith.constant 0 : index
    %65 = vector.load %arg19[%c0_47, %c0_48] : memref<1x256xf32, #tpu.memory_space<vmem>>, vector<1x256xf32>
    %66 = arith.truncf %64 : vector<8x512xf32> to vector<8x512xbf16>
    %c0_49 = arith.constant 0 : index
    %c0_50 = arith.constant 0 : index
    %67 = vector.load %arg18[%c0_49, %c0_50] : memref<512x256xbf16, #tpu.memory_space<vmem>>, vector<512x256xbf16>
    %cst_51 = arith.constant dense<0.000000e+00> : vector<8x256xf32>
    %68 = tpu.matmul %66, %67, %cst_51 {dimension_numbers = #tpu.dot_dimension_numbers<[1], [0], [0], [1], [0, 0, 1, 1], [], []>} : vector<8x512xbf16>, vector<512x256xbf16>, vector<8x256xf32> -> vector<8x256xf32>
    %69 = vector.broadcast %65 : vector<1x256xf32> to vector<8x256xf32>
    %70 = arith.addf %68, %69 : vector<8x256xf32>
    %71 = arith.addf %70, %56 : vector<8x256xf32>
    %cst_52 = arith.constant 0.000000e+00 : f32
    %72 = vector.broadcast %cst_52 : f32 to vector<8x256xf32>
    %73 = arith.maximumf %71, %72 : vector<8x256xf32>
    %c0_53 = arith.constant 0 : index
    %c0_54 = arith.constant 0 : index
    %74 = vector.load %arg21[%c0_53, %c0_54] : memref<1x256xf32, #tpu.memory_space<vmem>>, vector<1x256xf32>
    %75 = arith.truncf %73 : vector<8x256xf32> to vector<8x256xbf16>
    %c0_55 = arith.constant 0 : index
    %c0_56 = arith.constant 0 : index
    %76 = vector.load %arg20[%c0_55, %c0_56] : memref<256x256xbf16, #tpu.memory_space<vmem>>, vector<256x256xbf16>
    %cst_57 = arith.constant dense<0.000000e+00> : vector<8x256xf32>
    %77 = tpu.matmul %75, %76, %cst_57 {dimension_numbers = #tpu.dot_dimension_numbers<[1], [0], [0], [1], [0, 0, 1, 1], [], []>} : vector<8x256xbf16>, vector<256x256xbf16>, vector<8x256xf32> -> vector<8x256xf32>
    %78 = vector.broadcast %74 : vector<1x256xf32> to vector<8x256xf32>
    %79 = arith.addf %77, %78 : vector<8x256xf32>
    %cst_58 = arith.constant 0.000000e+00 : f32
    %80 = vector.broadcast %cst_58 : f32 to vector<8x256xf32>
    %81 = arith.maximumf %79, %80 : vector<8x256xf32>
    %c0_59 = arith.constant 0 : index
    %c0_60 = arith.constant 0 : index
    %82 = vector.load %arg23[%c0_59, %c0_60] : memref<1x512xf32, #tpu.memory_space<vmem>>, vector<1x512xf32>
    %83 = arith.truncf %81 : vector<8x256xf32> to vector<8x256xbf16>
    %c0_61 = arith.constant 0 : index
    %c0_62 = arith.constant 0 : index
    %84 = vector.load %arg22[%c0_61, %c0_62] : memref<256x512xbf16, #tpu.memory_space<vmem>>, vector<256x512xbf16>
    %cst_63 = arith.constant dense<0.000000e+00> : vector<8x512xf32>
    %85 = tpu.matmul %83, %84, %cst_63 {dimension_numbers = #tpu.dot_dimension_numbers<[1], [0], [0], [1], [0, 0, 1, 1], [], []>} : vector<8x256xbf16>, vector<256x512xbf16>, vector<8x512xf32> -> vector<8x512xf32>
    %86 = vector.broadcast %82 : vector<1x512xf32> to vector<8x512xf32>
    %87 = arith.addf %85, %86 : vector<8x512xf32>
    %cst_64 = arith.constant 0.000000e+00 : f32
    %88 = vector.broadcast %cst_64 : f32 to vector<8x512xf32>
    %89 = arith.maximumf %87, %88 : vector<8x512xf32>
    %c0_65 = arith.constant 0 : index
    %c0_66 = arith.constant 0 : index
    %90 = vector.load %arg25[%c0_65, %c0_66] : memref<1x256xf32, #tpu.memory_space<vmem>>, vector<1x256xf32>
    %91 = arith.truncf %89 : vector<8x512xf32> to vector<8x512xbf16>
    %c0_67 = arith.constant 0 : index
    %c0_68 = arith.constant 0 : index
    %92 = vector.load %arg24[%c0_67, %c0_68] : memref<512x256xbf16, #tpu.memory_space<vmem>>, vector<512x256xbf16>
    %cst_69 = arith.constant dense<0.000000e+00> : vector<8x256xf32>
    %93 = tpu.matmul %91, %92, %cst_69 {dimension_numbers = #tpu.dot_dimension_numbers<[1], [0], [0], [1], [0, 0, 1, 1], [], []>} : vector<8x512xbf16>, vector<512x256xbf16>, vector<8x256xf32> -> vector<8x256xf32>
    %94 = vector.broadcast %90 : vector<1x256xf32> to vector<8x256xf32>
    %95 = arith.addf %93, %94 : vector<8x256xf32>
    %96 = arith.addf %95, %81 : vector<8x256xf32>
    %cst_70 = arith.constant 0.000000e+00 : f32
    %97 = vector.broadcast %cst_70 : f32 to vector<8x256xf32>
    %98 = arith.maximumf %96, %97 : vector<8x256xf32>
    %c0_71 = arith.constant 0 : index
    %c0_72 = arith.constant 0 : index
    %99 = vector.load %arg27[%c0_71, %c0_72] : memref<1x16xf32, #tpu.memory_space<vmem>>, vector<1x16xf32>
    %100 = arith.truncf %98 : vector<8x256xf32> to vector<8x256xbf16>
    %c0_73 = arith.constant 0 : index
    %c0_74 = arith.constant 0 : index
    %101 = vector.load %arg26[%c0_73, %c0_74] : memref<256x16xbf16, #tpu.memory_space<vmem>>, vector<256x16xbf16>
    %cst_75 = arith.constant dense<0.000000e+00> : vector<8x16xf32>
    %102 = tpu.matmul %100, %101, %cst_75 {dimension_numbers = #tpu.dot_dimension_numbers<[1], [0], [0], [1], [0, 0, 1, 1], [], []>} : vector<8x256xbf16>, vector<256x16xbf16>, vector<8x16xf32> -> vector<8x16xf32>
    %103 = vector.broadcast %99 : vector<1x16xf32> to vector<8x16xf32>
    %104 = arith.addf %102, %103 : vector<8x16xf32>
    %c0_76 = arith.constant 0 : index
    %c0_77 = arith.constant 0 : index
    %105 = vector.load %arg28[%c0_76, %c0_77] : memref<8x16xf32, #tpu.memory_space<vmem>>, vector<8x16xf32>
    tpu.vector_store %arg28[%c0_76, %c0_77], %104 {strides = array<i32>} : memref<8x16xf32, #tpu.memory_space<vmem>>, vector<8x16xf32>,
    return
  }
  func.func @transform_0(%arg0: i32) -> (i32, i32) {
    %c0_i32 = arith.constant 0 : i32
    %c0_i32_0 = arith.constant 0 : i32
    return %arg0, %c0_i32 : i32, i32
  }
  func.func @transform_1(%arg0: i32) -> (i32, i32) {
    %c0_i32 = arith.constant 0 : i32
    %c0_i32_0 = arith.constant 0 : i32
    %c0_i32_1 = arith.constant 0 : i32
    return %c0_i32, %c0_i32_0 : i32, i32
  }
  func.func @transform_2(%arg0: i32) -> (i32, i32) {
    %c0_i32 = arith.constant 0 : i32
    %c0_i32_0 = arith.constant 0 : i32
    %c0_i32_1 = arith.constant 0 : i32
    return %c0_i32, %c0_i32_0 : i32, i32
  }
  func.func @transform_3(%arg0: i32) -> (i32, i32) {
    %c0_i32 = arith.constant 0 : i32
    %c0_i32_0 = arith.constant 0 : i32
    %c0_i32_1 = arith.constant 0 : i32
    return %c0_i32, %c0_i32_0 : i32, i32
  }
  func.func @transform_4(%arg0: i32) -> (i32, i32) {
    %c0_i32 = arith.constant 0 : i32
    %c0_i32_0 = arith.constant 0 : i32
    %c0_i32_1 = arith.constant 0 : i32
    return %c0_i32, %c0_i32_0 : i32, i32
  }
  func.func @transform_5(%arg0: i32) -> (i32, i32) {
    %c0_i32 = arith.constant 0 : i32
    %c0_i32_0 = arith.constant 0 : i32
    %c0_i32_1 = arith.constant 0 : i32
    return %c0_i32, %c0_i32_0 : i32, i32
  }
  func.func @transform_6(%arg0: i32) -> (i32, i32) {
    %c0_i32 = arith.constant 0 : i32
    %c0_i32_0 = arith.constant 0 : i32
    %c0_i32_1 = arith.constant 0 : i32
    return %c0_i32, %c0_i32_0 : i32, i32
  }
  func.func @transform_7(%arg0: i32) -> (i32, i32) {
    %c0_i32 = arith.constant 0 : i32
    %c0_i32_0 = arith.constant 0 : i32
    %c0_i32_1 = arith.constant 0 : i32
    return %c0_i32, %c0_i32_0 : i32, i32
  }
  func.func @transform_8(%arg0: i32) -> (i32, i32) {
    %c0_i32 = arith.constant 0 : i32
    %c0_i32_0 = arith.constant 0 : i32
    %c0_i32_1 = arith.constant 0 : i32
    return %c0_i32, %c0_i32_0 : i32, i32
  }
  func.func @transform_9(%arg0: i32) -> (i32, i32) {
    %c0_i32 = arith.constant 0 : i32
    %c0_i32_0 = arith.constant 0 : i32
    %c0_i32_1 = arith.constant 0 : i32
    return %c0_i32, %c0_i32_0 : i32, i32
  }
  func.func @transform_10(%arg0: i32) -> (i32, i32) {
    %c0_i32 = arith.constant 0 : i32
    %c0_i32_0 = arith.constant 0 : i32
    %c0_i32_1 = arith.constant 0 : i32
    return %c0_i32, %c0_i32_0 : i32, i32
  }
  func.func @transform_11(%arg0: i32) -> (i32, i32) {
    %c0_i32 = arith.constant 0 : i32
    %c0_i32_0 = arith.constant 0 : i32
    %c0_i32_1 = arith.constant 0 : i32
    return %c0_i32, %c0_i32_0 : i32, i32
  }
  func.func @transform_12(%arg0: i32) -> (i32, i32) {
    %c0_i32 = arith.constant 0 : i32
    %c0_i32_0 = arith.constant 0 : i32
    %c0_i32_1 = arith.constant 0 : i32
    return %c0_i32, %c0_i32_0 : i32, i32
  }
  func.func @transform_13(%arg0: i32) -> (i32, i32) {
    %c0_i32 = arith.constant 0 : i32
    %c0_i32_0 = arith.constant 0 : i32
    %c0_i32_1 = arith.constant 0 : i32
    return %c0_i32, %c0_i32_0 : i32, i32
  }
  func.func @transform_14(%arg0: i32) -> (i32, i32) {
    %c0_i32 = arith.constant 0 : i32
    %c0_i32_0 = arith.constant 0 : i32
    %c0_i32_1 = arith.constant 0 : i32
    return %c0_i32, %c0_i32_0 : i32, i32
  }
  func.func @transform_15(%arg0: i32) -> (i32, i32) {
    %c0_i32 = arith.constant 0 : i32
    %c0_i32_0 = arith.constant 0 : i32
    %c0_i32_1 = arith.constant 0 : i32
    return %c0_i32, %c0_i32_0 : i32, i32
  }
  func.func @transform_16(%arg0: i32) -> (i32, i32) {
    %c0_i32 = arith.constant 0 : i32
    %c0_i32_0 = arith.constant 0 : i32
    %c0_i32_1 = arith.constant 0 : i32
    return %c0_i32, %c0_i32_0 : i32, i32
  }
  func.func @transform_17(%arg0: i32) -> (i32, i32) {
    %c0_i32 = arith.constant 0 : i32
    %c0_i32_0 = arith.constant 0 : i32
    %c0_i32_1 = arith.constant 0 : i32
    return %c0_i32, %c0_i32_0 : i32, i32
  }
  func.func @transform_18(%arg0: i32) -> (i32, i32) {
    %c0_i32 = arith.constant 0 : i32
    %c0_i32_0 = arith.constant 0 : i32
    %c0_i32_1 = arith.constant 0 : i32
    return %c0_i32, %c0_i32_0 : i32, i32
  }
  func.func @transform_19(%arg0: i32) -> (i32, i32) {
    %c0_i32 = arith.constant 0 : i32
    %c0_i32_0 = arith.constant 0 : i32
    %c0_i32_1 = arith.constant 0 : i32
    return %c0_i32, %c0_i32_0 : i32, i32
  }
  func.func @transform_20(%arg0: i32) -> (i32, i32) {
    %c0_i32 = arith.constant 0 : i32
    %c0_i32_0 = arith.constant 0 : i32
    %c0_i32_1 = arith.constant 0 : i32
    return %c0_i32, %c0_i32_0 : i32, i32
  }
  func.func @transform_21(%arg0: i32) -> (i32, i32) {
    %c0_i32 = arith.constant 0 : i32
    %c0_i32_0 = arith.constant 0 : i32
    %c0_i32_1 = arith.constant 0 : i32
    return %c0_i32, %c0_i32_0 : i32, i32
  }
  func.func @transform_22(%arg0: i32) -> (i32, i32) {
    %c0_i32 = arith.constant 0 : i32
    %c0_i32_0 = arith.constant 0 : i32
    %c0_i32_1 = arith.constant 0 : i32
    return %c0_i32, %c0_i32_0 : i32, i32
  }
  func.func @transform_23(%arg0: i32) -> (i32, i32) {
    %c0_i32 = arith.constant 0 : i32
    %c0_i32_0 = arith.constant 0 : i32
    %c0_i32_1 = arith.constant 0 : i32
    return %c0_i32, %c0_i32_0 : i32, i32
  }
  func.func @transform_24(%arg0: i32) -> (i32, i32) {
    %c0_i32 = arith.constant 0 : i32
    %c0_i32_0 = arith.constant 0 : i32
    %c0_i32_1 = arith.constant 0 : i32
    return %c0_i32, %c0_i32_0 : i32, i32
  }
  func.func @transform_25(%arg0: i32) -> (i32, i32) {
    %c0_i32 = arith.constant 0 : i32
    %c0_i32_0 = arith.constant 0 : i32
    %c0_i32_1 = arith.constant 0 : i32
    return %c0_i32, %c0_i32_0 : i32, i32
  }
  func.func @transform_26(%arg0: i32) -> (i32, i32) {
    %c0_i32 = arith.constant 0 : i32
    %c0_i32_0 = arith.constant 0 : i32
    %c0_i32_1 = arith.constant 0 : i32
    return %c0_i32, %c0_i32_0 : i32, i32
  }
  func.func @transform_27(%arg0: i32) -> (i32, i32) {
    %c0_i32 = arith.constant 0 : i32
    %c0_i32_0 = arith.constant 0 : i32
    return %arg0, %c0_i32 : i32, i32
  }
}

</mosaic_0001>

<llo_original>
// kernel: fcn_forward.1
$region0: #{fcn_forward.1}
  #allocation0 [shape = 'u32[]', space=smem, size = 0x4, offset = 0x4, fixed_abs, tag = 'smem constant byte address 0x4 - core index']
  #allocation1 [shape = 'u32[72,128]{1,0:T(1,128)}', space=vmem, size = 0x9000, scoped, tag = 'internal scratch']
  %s0 = inlined_call_operand.vmem [shape: f32[8,64], index: 0, kind: input, shape index: {}]
  %s1 = inlined_call_operand.vmem [shape: bf16[64,256], index: 1, kind: input, shape index: {}]
  %s2 = inlined_call_operand.vmem [shape: f32[1,256], index: 2, kind: input, shape index: {}]
  %s3 = inlined_call_operand.hbm [shape: bf16[256,512], index: 3, kind: input, shape index: {}]
  %s4 = inlined_call_operand.vmem [shape: f32[1,512], index: 4, kind: input, shape index: {}]
  %s5 = inlined_call_operand.hbm [shape: bf16[512,256], index: 5, kind: input, shape index: {}]
  %s6 = inlined_call_operand.vmem [shape: f32[1,256], index: 6, kind: input, shape index: {}]
  %s7 = inlined_call_operand.vmem [shape: bf16[256,256], index: 7, kind: input, shape index: {}]
  %s8 = inlined_call_operand.vmem [shape: f32[1,256], index: 8, kind: input, shape index: {}]
  %s9 = inlined_call_operand.hbm [shape: bf16[256,512], index: 9, kind: input, shape index: {}]
  %s10 = inlined_call_operand.vmem [shape: f32[1,512], index: 10, kind: input, shape index: {}]
  %s11 = inlined_call_operand.hbm [shape: bf16[512,256], index: 11, kind: input, shape index: {}]
  %s12 = inlined_call_operand.vmem [shape: f32[1,256], index: 12, kind: input, shape index: {}]
  %s13 = inlined_call_operand.hbm [shape: bf16[256,256], index: 13, kind: input, shape index: {}]
  %s14 = inlined_call_operand.vmem [shape: f32[1,256], index: 14, kind: input, shape index: {}]
  %s15 = inlined_call_operand.hbm [shape: bf16[256,512], index: 15, kind: input, shape index: {}]
  %s16 = inlined_call_operand.vmem [shape: f32[1,512], index: 16, kind: input, shape index: {}]
  %s17 = inlined_call_operand.hbm [shape: bf16[512,256], index: 17, kind: input, shape index: {}]
  %s18 = inlined_call_operand.vmem [shape: f32[1,256], index: 18, kind: input, shape index: {}]
  %s19 = inlined_call_operand.hbm [shape: bf16[256,256], index: 19, kind: input, shape index: {}]
  %s20 = inlined_call_operand.vmem [shape: f32[1,256], index: 20, kind: input, shape index: {}]
  %s21 = inlined_call_operand.hbm [shape: bf16[256,512], index: 21, kind: input, shape index: {}]
  %s22 = inlined_call_operand.vmem [shape: f32[1,512], index: 22, kind: input, shape index: {}]
  %s23 = inlined_call_operand.hbm [shape: bf16[512,256], index: 23, kind: input, shape index: {}]
  %s24 = inlined_call_operand.vmem [shape: f32[1,256], index: 24, kind: input, shape index: {}]
  %s25 = inlined_call_operand.vmem [shape: bf16[256,16], index: 25, kind: input, shape index: {}]
  %s26 = inlined_call_operand.vmem [shape: f32[1,16], index: 26, kind: input, shape index: {}]
  %s27 = inlined_call_operand.vmem [shape: f32[8,16], index: 27, kind: output, shape index: {}]
  %s28 = sld [smem:[#allocation0]]
  $region158: #{fcn_forward.1} parent=0
    _
  %s30 = ssub.s32 1, %s28
  %s31 = scalar_select 0, %s30, %s28
  $region1: #{fcn_forward.1} parent=0
    #allocation2 [shape = 'u8[262144]{0}', space=vmem, size = 0x40000, scoped, tag = 'input window, operand 3, single buffered']
    #allocation3 [shape = 's32[1]{0}', space=sflag, size = 0x4, scoped, tag = 'scoped memory for fcn_forward.1']
    #allocation4 [shape = 'u8[262144]{0}', space=vmem, size = 0x40000, scoped, tag = 'input window, operand 5, single buffered']
    #allocation5 [shape = 's32[1]{0}', space=sflag, size = 0x4, scoped, tag = 'scoped memory for fcn_forward.1']
    #allocation6 [shape = 'u8[262144]{0}', space=vmem, size = 0x40000, scoped, tag = 'input window, operand 9, single buffered']
    #allocation7 [shape = 'u8[262144]{0}', space=vmem, size = 0x40000, scoped, tag = 'input window, operand 11, single buffered']
    #allocation8 [shape = 's32[1]{0}', space=sflag, size = 0x4, scoped, tag = 'scoped memory for fcn_forward.1']
    #allocation9 [shape = 'u8[131072]{0}', space=vmem, size = 0x20000, scoped, tag = 'input window, operand 13, single buffered']
    #allocation10 [shape = 'u8[262144]{0}', space=vmem, size = 0x40000, scoped, tag = 'input window, operand 15, single buffered']
    #allocation11 [shape = 's32[1]{0}', space=sflag, size = 0x4, scoped, tag = 'scoped memory for fcn_forward.1']
    #allocation12 [shape = 'u8[262144]{0}', space=vmem, size = 0x40000, scoped, tag = 'input window, operand 17, single buffered']
    #allocation13 [shape = 'u8[131072]{0}', space=vmem, size = 0x20000, scoped, tag = 'input window, operand 19, single buffered']
    #allocation14 [shape = 's32[1]{0}', space=sflag, size = 0x4, scoped, tag = 'scoped memory for fcn_forward.1']
    #allocation15 [shape = 'u8[262144]{0}', space=vmem, size = 0x40000, scoped, tag = 'input window, operand 21, single buffered']
    #allocation16 [shape = 'u8[262144]{0}', space=vmem, size = 0x40000, scoped, tag = 'input window, operand 23, single buffered']
    #allocation17 [shape = 's32[1]{0}', space=sflag, size = 0x4, scoped, tag = 'scoped memory for fcn_forward.1']
    %32 = vsyncpa [#allocation3], 0
    %33 = vsyncpa [#allocation5], 0
    %34 = vsyncpa [#allocation8], 0
    %35 = vsyncpa [#allocation11], 0
    %36 = vsyncpa [#allocation14], 0
    %37 = vsyncpa [#allocation17], 0
    // Predicated region
    $region2: #{fcn_forward.1} parent=1 // pred_check
      _
    $region3: #{fcn_forward.1} parent=1 // pred_check_branch
      %39 = sbr.rel (0) target = $region5
    $region4: #{fcn_forward.1} parent=1 // pred_region
      _
    $region5: #{fcn_forward.1} parent=1 // pred_fallthru
      _
    // Predicated region
    $region6: #{fcn_forward.1} parent=1 // pred_check
      _
    $region7: #{fcn_forward.1} parent=1 // pred_check_branch
      %41 = sbr.rel (0) target = $region9
    $region8: #{fcn_forward.1} parent=1 // pred_region
      _
    $region9: #{fcn_forward.1} parent=1 // pred_fallthru
      _
    // Predicated region
    $region10: #{fcn_forward.1} parent=1 // pred_check
      _
    $region11: #{fcn_forward.1} parent=1 // pred_check_branch
      %43 = sbr.rel (0) target = $region13
    $region12: #{fcn_forward.1} parent=1 // pred_region
      _
    $region13: #{fcn_forward.1} parent=1 // pred_fallthru
      _
    // Predicated region
    $region14: #{fcn_forward.1} parent=1 // pred_check
      _
    $region15: #{fcn_forward.1} parent=1 // pred_check_branch
      %45 = sbr.rel (0) target = $region17
    $region16: #{fcn_forward.1} parent=1 // pred_region
      %47 = vsyncadd [#allocation3], 0
      %s48 = sshll.u32 %s3, 4
      %s49 = int_to_ptr.hbm [resolvable:$true] %s48
      %s50 = sshll.u32 [#allocation2], 4
      %s51 = int_to_ptr.vmem [resolvable:$true] %s50
      %56 = dma.hbm_to_vmem [thread:$0]  %s49, 8192, %s51, [#allocation3], 256, 256, 16
    $region17: #{fcn_forward.1} parent=1 // pred_fallthru
      _
    // Predicated region
    $region18: #{fcn_forward.1} parent=1 // pred_check
      _
    $region19: #{fcn_forward.1} parent=1 // pred_check_branch
      %58 = sbr.rel (0) target = $region21
    $region20: #{fcn_forward.1} parent=1 // pred_region
      _
    $region21: #{fcn_forward.1} parent=1 // pred_fallthru
      _
    // Predicated region
    $region22: #{fcn_forward.1} parent=1 // pred_check
      _
    $region23: #{fcn_forward.1} parent=1 // pred_check_branch
      %60 = sbr.rel (0) target = $region25
    $region24: #{fcn_forward.1} parent=1 // pred_region
      %62 = vsyncadd [#allocation5], 0
      %s63 = sshll.u32 %s5, 4
      %s64 = int_to_ptr.hbm [resolvable:$true] %s63
      %s65 = sshll.u32 [#allocation4], 4
      %s66 = int_to_ptr.vmem [resolvable:$true] %s65
      %71 = dma.hbm_to_vmem [thread:$0]  %s64, 8192, %s66, [#allocation5], 128, 128, 8
    $region25: #{fcn_forward.1} parent=1 // pred_fallthru
      _
    // Predicated region
    $region26: #{fcn_forward.1} parent=1 // pred_check
      _
    $region27: #{fcn_forward.1} parent=1 // pred_check_branch
      %73 = sbr.rel (0) target = $region29
    $region28: #{fcn_forward.1} parent=1 // pred_region
      _
    $region29: #{fcn_forward.1} parent=1 // pred_fallthru
      _
    // Predicated region
    $region30: #{fcn_forward.1} parent=1 // pred_check
      _
    $region31: #{fcn_forward.1} parent=1 // pred_check_branch
      %75 = sbr.rel (0) target = $region33
    $region32: #{fcn_forward.1} parent=1 // pred_region
      _
    $region33: #{fcn_forward.1} parent=1 // pred_fallthru
      _
    // Predicated region
    $region34: #{fcn_forward.1} parent=1 // pred_check
      _
    $region35: #{fcn_forward.1} parent=1 // pred_check_branch
      %77 = sbr.rel (0) target = $region37
    $region36: #{fcn_forward.1} parent=1 // pred_region
      _
    $region37: #{fcn_forward.1} parent=1 // pred_fallthru
      _
    // Predicated region
    $region38: #{fcn_forward.1} parent=1 // pred_check
      _
    $region39: #{fcn_forward.1} parent=1 // pred_check_branch
      %79 = sbr.rel (0) target = $region41
    $region40: #{fcn_forward.1} parent=1 // pred_region
      %81 = vsyncadd [#allocation5], 0
      %s82 = sshll.u32 %s9, 4
      %s83 = int_to_ptr.hbm [resolvable:$true] %s82
      %s84 = sshll.u32 [#allocation6], 4
      %s85 = int_to_ptr.vmem [resolvable:$true] %s84
      %90 = dma.hbm_to_vmem [thread:$0]  %s83, 8192, %s85, [#allocation5], 256, 256, 16
    $region41: #{fcn_forward.1} parent=1 // pred_fallthru
      _
    // Predicated region
    $region42: #{fcn_forward.1} parent=1 // pred_check
      _
    $region43: #{fcn_forward.1} parent=1 // pred_check_branch
      %92 = sbr.rel (0) target = $region45
    $region44: #{fcn_forward.1} parent=1 // pred_region
      _
    $region45: #{fcn_forward.1} parent=1 // pred_fallthru
      _
    // Predicated region
    $region46: #{fcn_forward.1} parent=1 // pred_check
      _
    $region47: #{fcn_forward.1} parent=1 // pred_check_branch
      %94 = sbr.rel (0) target = $region49
    $region48: #{fcn_forward.1} parent=1 // pred_region
      %96 = vsyncadd [#allocation8], 0
      %s97 = sshll.u32 %s11, 4
      %s98 = int_to_ptr.hbm [resolvable:$true] %s97
      %s99 = sshll.u32 [#allocation7], 4
      %s100 = int_to_ptr.vmem [resolvable:$true] %s99
      %105 = dma.hbm_to_vmem [thread:$0]  %s98, 8192, %s100, [#allocation8], 128, 128, 8
    $region49: #{fcn_forward.1} parent=1 // pred_fallthru
      _
    // Predicated region
    $region50: #{fcn_forward.1} parent=1 // pred_check
      _
    $region51: #{fcn_forward.1} parent=1 // pred_check_branch
      %107 = sbr.rel (0) target = $region53
    $region52: #{fcn_forward.1} parent=1 // pred_region
      _
    $region53: #{fcn_forward.1} parent=1 // pred_fallthru
      _
    // Predicated region
    $region54: #{fcn_forward.1} parent=1 // pred_check
      _
    $region55: #{fcn_forward.1} parent=1 // pred_check_branch
      %109 = sbr.rel (0) target = $region57
    $region56: #{fcn_forward.1} parent=1 // pred_region
      %111 = vsyncadd [#allocation8], 0
      %s112 = sshll.u32 %s13, 4
      %s113 = int_to_ptr.hbm [resolvable:$true] %s112
      %s114 = sshll.u32 [#allocation9], 4
      %s115 = int_to_ptr.vmem [resolvable:$true] %s114
      %120 = dma.hbm_to_vmem [thread:$0]  %s113, 4096, %s115, [#allocation8], 128, 128, 8
    $region57: #{fcn_forward.1} parent=1 // pred_fallthru
      _
    // Predicated region
    $region58: #{fcn_forward.1} parent=1 // pred_check
      _
    $region59: #{fcn_forward.1} parent=1 // pred_check_branch
      %122 = sbr.rel (0) target = $region61
    $region60: #{fcn_forward.1} parent=1 // pred_region
      _
    $region61: #{fcn_forward.1} parent=1 // pred_fallthru
      _
    // Predicated region
    $region62: #{fcn_forward.1} parent=1 // pred_check
      _
    $region63: #{fcn_forward.1} parent=1 // pred_check_branch
      %124 = sbr.rel (0) target = $region65
    $region64: #{fcn_forward.1} parent=1 // pred_region
      %126 = vsyncadd [#allocation11], 0
      %s127 = sshll.u32 %s15, 4
      %s128 = int_to_ptr.hbm [resolvable:$true] %s127
      %s129 = sshll.u32 [#allocation10], 4
      %s130 = int_to_ptr.vmem [resolvable:$true] %s129
      %135 = dma.hbm_to_vmem [thread:$0]  %s128, 8192, %s130, [#allocation11], 256, 256, 16
    $region65: #{fcn_forward.1} parent=1 // pred_fallthru
      _
    // Predicated region
    $region66: #{fcn_forward.1} parent=1 // pred_check
      _
    $region67: #{fcn_forward.1} parent=1 // pred_check_branch
      %137 = sbr.rel (0) target = $region69
    $region68: #{fcn_forward.1} parent=1 // pred_region
      _
    $region69: #{fcn_forward.1} parent=1 // pred_fallthru
      _
    // Predicated region
    $region70: #{fcn_forward.1} parent=1 // pred_check
      _
    $region71: #{fcn_forward.1} parent=1 // pred_check_branch
      %139 = sbr.rel (0) target = $region73
    $region72: #{fcn_forward.1} parent=1 // pred_region
      %141 = vsyncadd [#allocation11], 0
      %s142 = sshll.u32 %s17, 4
      %s143 = int_to_ptr.hbm [resolvable:$true] %s142
      %s144 = sshll.u32 [#allocation12], 4
      %s145 = int_to_ptr.vmem [resolvable:$true] %s144
      %150 = dma.hbm_to_vmem [thread:$0]  %s143, 8192, %s145, [#allocation11], 128, 128, 8
    $region73: #{fcn_forward.1} parent=1 // pred_fallthru
      _
    // Predicated region
    $region74: #{fcn_forward.1} parent=1 // pred_check
      _
    $region75: #{fcn_forward.1} parent=1 // pred_check_branch
      %152 = sbr.rel (0) target = $region77
    $region76: #{fcn_forward.1} parent=1 // pred_region
      _
    $region77: #{fcn_forward.1} parent=1 // pred_fallthru
      _
    // Predicated region
    $region78: #{fcn_forward.1} parent=1 // pred_check
      _
    $region79: #{fcn_forward.1} parent=1 // pred_check_branch
      %154 = sbr.rel (0) target = $region81
    $region80: #{fcn_forward.1} parent=1 // pred_region
      %156 = vsyncadd [#allocation14], 0
      %s157 = sshll.u32 %s19, 4
      %s158 = int_to_ptr.hbm [resolvable:$true] %s157
      %s159 = sshll.u32 [#allocation13], 4
      %s160 = int_to_ptr.vmem [resolvable:$true] %s159
      %165 = dma.hbm_to_vmem [thread:$0]  %s158, 4096, %s160, [#allocation14], 128, 128, 8
    $region81: #{fcn_forward.1} parent=1 // pred_fallthru
      _
    // Predicated region
    $region82: #{fcn_forward.1} parent=1 // pred_check
      _
    $region83: #{fcn_forward.1} parent=1 // pred_check_branch
      %167 = sbr.rel (0) target = $region85
    $region84: #{fcn_forward.1} parent=1 // pred_region
      _
    $region85: #{fcn_forward.1} parent=1 // pred_fallthru
      _
    // Predicated region
    $region86: #{fcn_forward.1} parent=1 // pred_check
      _
    $region87: #{fcn_forward.1} parent=1 // pred_check_branch
      %169 = sbr.rel (0) target = $region89
    $region88: #{fcn_forward.1} parent=1 // pred_region
      %171 = vsyncadd [#allocation14], 0
      %s172 = sshll.u32 %s21, 4
      %s173 = int_to_ptr.hbm [resolvable:$true] %s172
      %s174 = sshll.u32 [#allocation15], 4
      %s175 = int_to_ptr.vmem [resolvable:$true] %s174
      %180 = dma.hbm_to_vmem [thread:$0]  %s173, 8192, %s175, [#allocation14], 256, 256, 16
    $region89: #{fcn_forward.1} parent=1 // pred_fallthru
      _
    // Predicated region
    $region90: #{fcn_forward.1} parent=1 // pred_check
      _
    $region91: #{fcn_forward.1} parent=1 // pred_check_branch
      %182 = sbr.rel (0) target = $region93
    $region92: #{fcn_forward.1} parent=1 // pred_region
      _
    $region93: #{fcn_forward.1} parent=1 // pred_fallthru
      _
    // Predicated region
    $region94: #{fcn_forward.1} parent=1 // pred_check
      _
    $region95: #{fcn_forward.1} parent=1 // pred_check_branch
      %184 = sbr.rel (0) target = $region97
    $region96: #{fcn_forward.1} parent=1 // pred_region
      %186 = vsyncadd [#allocation17], 0
      %s187 = sshll.u32 %s23, 4
      %s188 = int_to_ptr.hbm [resolvable:$true] %s187
      %s189 = sshll.u32 [#allocation16], 4
      %s190 = int_to_ptr.vmem [resolvable:$true] %s189
      %195 = dma.hbm_to_vmem [thread:$0]  %s188, 8192, %s190, [#allocation17], 128, 128, 8
    $region97: #{fcn_forward.1} parent=1 // pred_fallthru
      _
    // Predicated region
    $region98: #{fcn_forward.1} parent=1 // pred_check
      _
    $region99: #{fcn_forward.1} parent=1 // pred_check_branch
      %197 = sbr.rel (0) target = $region101
    $region100: #{fcn_forward.1} parent=1 // pred_region
      _
    $region101: #{fcn_forward.1} parent=1 // pred_fallthru
      _
    // Predicated region
    $region102: #{fcn_forward.1} parent=1 // pred_check
      _
    $region103: #{fcn_forward.1} parent=1 // pred_check_branch
      %199 = sbr.rel (0) target = $region105
    $region104: #{fcn_forward.1} parent=1 // pred_region
      _
    $region105: #{fcn_forward.1} parent=1 // pred_fallthru
      _
    // Predicated region
    $region106: #{fcn_forward.1} parent=1 // pred_check
      _
    $region107: #{fcn_forward.1} parent=1 // pred_check_branch
      %201 = sbr.rel (0) target = $region109
    $region108: #{fcn_forward.1} parent=1 // pred_region
      _
    $region109: #{fcn_forward.1} parent=1 // pred_fallthru
      _
    // Predicated region
    $region110: #{fcn_forward.1} parent=1 // pred_check
      _
    $region111: #{fcn_forward.1} parent=1 // pred_check_branch
      %203 = sbr.rel (0) target = $region113
    $region112: #{fcn_forward.1} parent=1 // pred_region
      %205 = dma.done [#allocation3], 8192
    $region113: #{fcn_forward.1} parent=1 // pred_fallthru
      _
    // Predicated region
    $region114: #{fcn_forward.1} parent=1 // pred_check
      _
    $region115: #{fcn_forward.1} parent=1 // pred_check_branch
      %207 = sbr.rel (0) target = $region117
    $region116: #{fcn_forward.1} parent=1 // pred_region
      %209 = dma.done [#allocation5], 8192
    $region117: #{fcn_forward.1} parent=1 // pred_fallthru
      _
    // Predicated region
    $region118: #{fcn_forward.1} parent=1 // pred_check
      _
    $region119: #{fcn_forward.1} parent=1 // pred_check_branch
      %211 = sbr.rel (0) target = $region121
    $region120: #{fcn_forward.1} parent=1 // pred_region
      %213 = dma.done [#allocation5], 8192
    $region121: #{fcn_forward.1} parent=1 // pred_fallthru
      _
    // Predicated region
    $region122: #{fcn_forward.1} parent=1 // pred_check
      _
    $region123: #{fcn_forward.1} parent=1 // pred_check_branch
      %215 = sbr.rel (0) target = $region125
    $region124: #{fcn_forward.1} parent=1 // pred_region
      %217 = dma.done [#allocation8], 8192
    $region125: #{fcn_forward.1} parent=1 // pred_fallthru
      _
    // Predicated region
    $region126: #{fcn_forward.1} parent=1 // pred_check
      _
    $region127: #{fcn_forward.1} parent=1 // pred_check_branch
      %219 = sbr.rel (0) target = $region129
    $region128: #{fcn_forward.1} parent=1 // pred_region
      %221 = dma.done [#allocation8], 4096
    $region129: #{fcn_forward.1} parent=1 // pred_fallthru
      _
    // Predicated region
    $region130: #{fcn_forward.1} parent=1 // pred_check
      _
    $region131: #{fcn_forward.1} parent=1 // pred_check_branch
      %223 = sbr.rel (0) target = $region133
    $region132: #{fcn_forward.1} parent=1 // pred_region
      %225 = dma.done [#allocation11], 8192
    $region133: #{fcn_forward.1} parent=1 // pred_fallthru
      _
    // Predicated region
    $region134: #{fcn_forward.1} parent=1 // pred_check
      _
    $region135: #{fcn_forward.1} parent=1 // pred_check_branch
      %227 = sbr.rel (0) target = $region137
    $region136: #{fcn_forward.1} parent=1 // pred_region
      %229 = dma.done [#allocation11], 8192
    $region137: #{fcn_forward.1} parent=1 // pred_fallthru
      _
    // Predicated region
    $region138: #{fcn_forward.1} parent=1 // pred_check
      _
    $region139: #{fcn_forward.1} parent=1 // pred_check_branch
      %231 = sbr.rel (0) target = $region141
    $region140: #{fcn_forward.1} parent=1 // pred_region
      %233 = dma.done [#allocation14], 4096
    $region141: #{fcn_forward.1} parent=1 // pred_fallthru
      _
    // Predicated region
    $region142: #{fcn_forward.1} parent=1 // pred_check
      _
    $region143: #{fcn_forward.1} parent=1 // pred_check_branch
      %235 = sbr.rel (0) target = $region145
    $region144: #{fcn_forward.1} parent=1 // pred_region
      %237 = dma.done [#allocation14], 8192
    $region145: #{fcn_forward.1} parent=1 // pred_fallthru
      _
    // Predicated region
    $region146: #{fcn_forward.1} parent=1 // pred_check
      _
    $region147: #{fcn_forward.1} parent=1 // pred_check_branch
      %239 = sbr.rel (0) target = $region149
    $region148: #{fcn_forward.1} parent=1 // pred_region
      %241 = dma.done [#allocation17], 8192
    $region149: #{fcn_forward.1} parent=1 // pred_fallthru
      _
    %v243 = vld [vmem:[%s0] sm:$0xff]
    %v244 = vld [vmem:[%s2] sm:$0x3]
    %v245 = vpack.c.bf16 %v243, %v243
    %v246 = vld [vmem:[%s1] sm:$0xff]
    %v247 = vld [vmem:[%s1 + $0x8] sm:$0xff]
    %v248 = vld [vmem:[%s1 + $0x10] sm:$0xff]
    %v249 = vld [vmem:[%s1 + $0x18] sm:$0xff]
    %v250 = vld [vmem:[%s1 + $0x20] sm:$0xff]
    %v251 = vld [vmem:[%s1 + $0x28] sm:$0xff]
    %v252 = vld [vmem:[%s1 + $0x30] sm:$0xff]
    %v253 = vld [vmem:[%s1 + $0x38] sm:$0xff]
    %v255 = vperm.slane %v244, 0
    %v256 = vperm.slane %v244, 1
    %v267 = vunpack.c.l.b16 %v246
    %v268 = vunpack.c.h.b16 %v246
    %v269 = vunpack.c.l.b16 %v247
    %v270 = vunpack.c.h.b16 %v247
    %v271 = vunpack.c.l.b16 %v248
    %v272 = vunpack.c.h.b16 %v248
    %v273 = vunpack.c.l.b16 %v249
    %v274 = vunpack.c.h.b16 %v249
    %v275 = vunpack.c.l.b16 %v250
    %v276 = vunpack.c.h.b16 %v250
    %v277 = vunpack.c.l.b16 %v251
    %v278 = vunpack.c.h.b16 %v251
    %v279 = vunpack.c.l.b16 %v252
    %v280 = vunpack.c.h.b16 %v252
    %v281 = vunpack.c.l.b16 %v253
    %v282 = vunpack.c.h.b16 %v253
    %v283 = vpack.c.b16 %v269, %v267
    %v284 = vpack.c.b16 %v270, %v268
    %v285 = vpack.c.b16 %v273, %v271
    %v286 = vpack.c.b16 %v274, %v272
    %v287 = vpack.c.b16 %v277, %v275
    %v288 = vpack.c.b16 %v278, %v276
    %v289 = vpack.c.b16 %v281, %v279
    %v290 = vpack.c.b16 %v282, %v280
    %vm299 = vcmask 523264
    %v301 = vsel %vm299, %v245, 0
    %303 = vmatpush.bf16.msra.mxu0 0
    %304 = vmatpush.bf16.msra.mxu0 0
    %305 = vmatpush.bf16.msra.mxu0 0
    %306 = vmatpush.bf16.msra.mxu0 0
    %307 = vmatpush.bf16.msra.mxu0 %v289
    %308 = vmatpush.bf16.msra.mxu0 %v287
    %309 = vmatpush.bf16.msra.mxu0 %v285
    %310 = vmatpush.bf16.msra.mxu0 %v283
    %311 = vmatmul.bf16.gmra.mxu0 %v301
    %v312 = vpop.f32.mrf.mxu0
    %v313 = vadd.f32 %v255, %v312
    %v314 = vpop.f32.mrf.mxu0
    %315 = vdwg.mxu0
    %316 = vmatpush.bf16.msra.mxu0 0
    %317 = vmatpush.bf16.msra.mxu0 0
    %318 = vmatpush.bf16.msra.mxu0 0
    %319 = vmatpush.bf16.msra.mxu0 0
    %320 = vmatpush.bf16.msra.mxu0 %v290
    %321 = vmatpush.bf16.msra.mxu0 %v288
    %322 = vmatpush.bf16.msra.mxu0 %v286
    %323 = vmatpush.bf16.msra.mxu0 %v284
    %324 = vmatmul.bf16.gmra.mxu0 %v301
    %v325 = vpop.f32.mrf.mxu0
    %v326 = vadd.f32 %v256, %v325
    %v327 = vpop.f32.mrf.mxu0
    %328 = vdwg.mxu0
    %v329 = vld [vmem:[%s4] sm:$0xf]
    %v330 = vpack.c.bf16 %v313, %v313
    %v331 = vpack.c.bf16 %v326, %v326
    %v332 = vld [vmem:[#allocation2] sm:$0xff]
    %v333 = vld [vmem:[#allocation2 + $0x8] sm:$0xff]
    %v334 = vld [vmem:[#allocation2 + $0x10] sm:$0xff]
    %v335 = vld [vmem:[#allocation2 + $0x18] sm:$0xff]
    %v336 = vld [vmem:[#allocation2 + $0x20] sm:$0xff]
    %v337 = vld [vmem:[#allocation2 + $0x28] sm:$0xff]
    %v338 = vld [vmem:[#allocation2 + $0x30] sm:$0xff]
    %v339 = vld [vmem:[#allocation2 + $0x38] sm:$0xff]
    %v340 = vld [vmem:[#allocation2 + $0x40] sm:$0xff]
    %v341 = vld [vmem:[#allocation2 + $0x48] sm:$0xff]
    %v342 = vld [vmem:[#allocation2 + $0x50] sm:$0xff]
    %v343 = vld [vmem:[#allocation2 + $0x58] sm:$0xff]
    %v344 = vld [vmem:[#allocation2 + $0x60] sm:$0xff]
    %v345 = vld [vmem:[#allocation2 + $0x68] sm:$0xff]
    %v346 = vld [vmem:[#allocation2 + $0x70] sm:$0xff]
    %v347 = vld [vmem:[#allocation2 + $0x78] sm:$0xff]
    %v348 = vld [vmem:[#allocation2 + $0x80] sm:$0xff]
    %v349 = vld [vmem:[#allocation2 + $0x88] sm:$0xff]
    %v350 = vld [vmem:[#allocation2 + $0x90] sm:$0xff]
    %v351 = vld [vmem:[#allocation2 + $0x98] sm:$0xff]
    %v352 = vld [vmem:[#allocation2 + $0xa0] sm:$0xff]
    %v353 = vld [vmem:[#allocation2 + $0xa8] sm:$0xff]
    %v354 = vld [vmem:[#allocation2 + $0xb0] sm:$0xff]
    %v355 = vld [vmem:[#allocation2 + $0xb8] sm:$0xff]
    %v356 = vld [vmem:[#allocation2 + $0xc0] sm:$0xff]
    %v357 = vld [vmem:[#allocation2 + $0xc8] sm:$0xff]
    %v358 = vld [vmem:[#allocation2 + $0xd0] sm:$0xff]
    %v359 = vld [vmem:[#allocation2 + $0xd8] sm:$0xff]
    %v360 = vld [vmem:[#allocation2 + $0xe0] sm:$0xff]
    %v361 = vld [vmem:[#allocation2 + $0xe8] sm:$0xff]
    %v362 = vld [vmem:[#allocation2 + $0xf0] sm:$0xff]
    %v363 = vld [vmem:[#allocation2 + $0xf8] sm:$0xff]
    %v364 = vld [vmem:[#allocation2 + $0x100] sm:$0xff]
    %v365 = vld [vmem:[#allocation2 + $0x108] sm:$0xff]
    %v366 = vld [vmem:[#allocation2 + $0x110] sm:$0xff]
    %v367 = vld [vmem:[#allocation2 + $0x118] sm:$0xff]
    %v368 = vld [vmem:[#allocation2 + $0x120] sm:$0xff]
    %v369 = vld [vmem:[#allocation2 + $0x128] sm:$0xff]
    %v370 = vld [vmem:[#allocation2 + $0x130] sm:$0xff]
    %v371 = vld [vmem:[#allocation2 + $0x138] sm:$0xff]
    %v372 = vld [vmem:[#allocation2 + $0x140] sm:$0xff]
    %v373 = vld [vmem:[#allocation2 + $0x148] sm:$0xff]
    %v374 = vld [vmem:[#allocation2 + $0x150] sm:$0xff]
    %v375 = vld [vmem:[#allocation2 + $0x158] sm:$0xff]
    %v376 = vld [vmem:[#allocation2 + $0x160] sm:$0xff]
    %v377 = vld [vmem:[#allocation2 + $0x168] sm:$0xff]
    %v378 = vld [vmem:[#allocation2 + $0x170] sm:$0xff]
    %v379 = vld [vmem:[#allocation2 + $0x178] sm:$0xff]
    %v380 = vld [vmem:[#allocation2 + $0x180] sm:$0xff]
    %v381 = vld [vmem:[#allocation2 + $0x188] sm:$0xff]
    %v382 = vld [vmem:[#allocation2 + $0x190] sm:$0xff]
    %v383 = vld [vmem:[#allocation2 + $0x198] sm:$0xff]
    %v384 = vld [vmem:[#allocation2 + $0x1a0] sm:$0xff]
    %v385 = vld [vmem:[#allocation2 + $0x1a8] sm:$0xff]
    %v386 = vld [vmem:[#allocation2 + $0x1b0] sm:$0xff]
    %v387 = vld [vmem:[#allocation2 + $0x1b8] sm:$0xff]
    %v388 = vld [vmem:[#allocation2 + $0x1c0] sm:$0xff]
    %v389 = vld [vmem:[#allocation2 + $0x1c8] sm:$0xff]
    %v390 = vld [vmem:[#allocation2 + $0x1d0] sm:$0xff]
    %v391 = vld [vmem:[#allocation2 + $0x1d8] sm:$0xff]
    %v392 = vld [vmem:[#allocation2 + $0x1e0] sm:$0xff]
    %v393 = vld [vmem:[#allocation2 + $0x1e8] sm:$0xff]
    %v394 = vld [vmem:[#allocation2 + $0x1f0] sm:$0xff]
    %v395 = vld [vmem:[#allocation2 + $0x1f8] sm:$0xff]
    %v397 = vperm.slane %v329, 0
    %v398 = vperm.slane %v329, 1
    %v399 = vperm.slane %v329, 2
    %v400 = vperm.slane %v329, 3
    %v469 = vunpack.c.l.b16 %v332
    %v470 = vunpack.c.h.b16 %v332
    %v471 = vunpack.c.l.b16 %v333
    %v472 = vunpack.c.h.b16 %v333
    %v473 = vunpack.c.l.b16 %v334
    %v474 = vunpack.c.h.b16 %v334
    %v475 = vunpack.c.l.b16 %v335
    %v476 = vunpack.c.h.b16 %v335
    %v477 = vunpack.c.l.b16 %v336
    %v478 = vunpack.c.h.b16 %v336
    %v479 = vunpack.c.l.b16 %v337
    %v480 = vunpack.c.h.b16 %v337
    %v481 = vunpack.c.l.b16 %v338
    %v482 = vunpack.c.h.b16 %v338
    %v483 = vunpack.c.l.b16 %v339
    %v484 = vunpack.c.h.b16 %v339
    %v485 = vunpack.c.l.b16 %v340
    %v486 = vunpack.c.h.b16 %v340
    %v487 = vunpack.c.l.b16 %v341
    %v488 = vunpack.c.h.b16 %v341
    %v489 = vunpack.c.l.b16 %v342
    %v490 = vunpack.c.h.b16 %v342
    %v491 = vunpack.c.l.b16 %v343
    %v492 = vunpack.c.h.b16 %v343
    %v493 = vunpack.c.l.b16 %v344
    %v494 = vunpack.c.h.b16 %v344
    %v495 = vunpack.c.l.b16 %v345
    %v496 = vunpack.c.h.b16 %v345
    %v497 = vunpack.c.l.b16 %v346
    %v498 = vunpack.c.h.b16 %v346
    %v499 = vunpack.c.l.b16 %v347
    %v500 = vunpack.c.h.b16 %v347
    %v501 = vunpack.c.l.b16 %v348
    %v502 = vunpack.c.h.b16 %v348
    %v503 = vunpack.c.l.b16 %v349
    %v504 = vunpack.c.h.b16 %v349
    %v505 = vunpack.c.l.b16 %v350
    %v506 = vunpack.c.h.b16 %v350
    %v507 = vunpack.c.l.b16 %v351
    %v508 = vunpack.c.h.b16 %v351
    %v509 = vunpack.c.l.b16 %v352
    %v510 = vunpack.c.h.b16 %v352
    %v511 = vunpack.c.l.b16 %v353
    %v512 = vunpack.c.h.b16 %v353
    %v513 = vunpack.c.l.b16 %v354
    %v514 = vunpack.c.h.b16 %v354
    %v515 = vunpack.c.l.b16 %v355
    %v516 = vunpack.c.h.b16 %v355
    %v517 = vunpack.c.l.b16 %v356
    %v518 = vunpack.c.h.b16 %v356
    %v519 = vunpack.c.l.b16 %v357
    %v520 = vunpack.c.h.b16 %v357
    %v521 = vunpack.c.l.b16 %v358
    %v522 = vunpack.c.h.b16 %v358
    %v523 = vunpack.c.l.b16 %v359
    %v524 = vunpack.c.h.b16 %v359
    %v525 = vunpack.c.l.b16 %v360
    %v526 = vunpack.c.h.b16 %v360
    %v527 = vunpack.c.l.b16 %v361
    %v528 = vunpack.c.h.b16 %v361
    %v529 = vunpack.c.l.b16 %v362
    %v530 = vunpack.c.h.b16 %v362
    %v531 = vunpack.c.l.b16 %v363
    %v532 = vunpack.c.h.b16 %v363
    %v533 = vunpack.c.l.b16 %v364
    %v534 = vunpack.c.h.b16 %v364
    %v535 = vunpack.c.l.b16 %v365
    %v536 = vunpack.c.h.b16 %v365
    %v537 = vunpack.c.l.b16 %v366
    %v538 = vunpack.c.h.b16 %v366
    %v539 = vunpack.c.l.b16 %v367
    %v540 = vunpack.c.h.b16 %v367
    %v541 = vunpack.c.l.b16 %v368
    %v542 = vunpack.c.h.b16 %v368
    %v543 = vunpack.c.l.b16 %v369
    %v544 = vunpack.c.h.b16 %v369
    %v545 = vunpack.c.l.b16 %v370
    %v546 = vunpack.c.h.b16 %v370
    %v547 = vunpack.c.l.b16 %v371
    %v548 = vunpack.c.h.b16 %v371
    %v549 = vunpack.c.l.b16 %v372
    %v550 = vunpack.c.h.b16 %v372
    %v551 = vunpack.c.l.b16 %v373
    %v552 = vunpack.c.h.b16 %v373
    %v553 = vunpack.c.l.b16 %v374
    %v554 = vunpack.c.h.b16 %v374
    %v555 = vunpack.c.l.b16 %v375
    %v556 = vunpack.c.h.b16 %v375
    %v557 = vunpack.c.l.b16 %v376
    %v558 = vunpack.c.h.b16 %v376
    %v559 = vunpack.c.l.b16 %v377
    %v560 = vunpack.c.h.b16 %v377
    %v561 = vunpack.c.l.b16 %v378
    %v562 = vunpack.c.h.b16 %v378
    %v563 = vunpack.c.l.b16 %v379
    %v564 = vunpack.c.h.b16 %v379
    %v565 = vunpack.c.l.b16 %v380
    %v566 = vunpack.c.h.b16 %v380
    %v567 = vunpack.c.l.b16 %v381
    %v568 = vunpack.c.h.b16 %v381
    %v569 = vunpack.c.l.b16 %v382
    %v570 = vunpack.c.h.b16 %v382
    %v571 = vunpack.c.l.b16 %v383
    %v572 = vunpack.c.h.b16 %v383
    %v573 = vunpack.c.l.b16 %v384
    %v574 = vunpack.c.h.b16 %v384
    %v575 = vunpack.c.l.b16 %v385
    %v576 = vunpack.c.h.b16 %v385
    %v577 = vunpack.c.l.b16 %v386
    %v578 = vunpack.c.h.b16 %v386
    %v579 = vunpack.c.l.b16 %v387
    %v580 = vunpack.c.h.b16 %v387
    %v581 = vunpack.c.l.b16 %v388
    %v582 = vunpack.c.h.b16 %v388
    %v583 = vunpack.c.l.b16 %v389
    %v584 = vunpack.c.h.b16 %v389
    %v585 = vunpack.c.l.b16 %v390
    %v586 = vunpack.c.h.b16 %v390
    %v587 = vunpack.c.l.b16 %v391
    %v588 = vunpack.c.h.b16 %v391
    %v589 = vunpack.c.l.b16 %v392
    %v590 = vunpack.c.h.b16 %v392
    %v591 = vunpack.c.l.b16 %v393
    %v592 = vunpack.c.h.b16 %v393
    %v593 = vunpack.c.l.b16 %v394
    %v594 = vunpack.c.h.b16 %v394
    %v595 = vunpack.c.l.b16 %v395
    %v596 = vunpack.c.h.b16 %v395
    %v597 = vpack.c.b16 %v473, %v469
    %v598 = vpack.c.b16 %v474, %v470
    %v599 = vpack.c.b16 %v475, %v471
    %v600 = vpack.c.b16 %v476, %v472
    %v601 = vpack.c.b16 %v481, %v477
    %v602 = vpack.c.b16 %v482, %v478
    %v603 = vpack.c.b16 %v483, %v479
    %v604 = vpack.c.b16 %v484, %v480
    %v605 = vpack.c.b16 %v489, %v485
    %v606 = vpack.c.b16 %v490, %v486
    %v607 = vpack.c.b16 %v491, %v487
    %v608 = vpack.c.b16 %v492, %v488
    %v609 = vpack.c.b16 %v497, %v493
    %v610 = vpack.c.b16 %v498, %v494
    %v611 = vpack.c.b16 %v499, %v495
    %v612 = vpack.c.b16 %v500, %v496
    %v613 = vpack.c.b16 %v505, %v501
    %v614 = vpack.c.b16 %v506, %v502
    %v615 = vpack.c.b16 %v507, %v503
    %v616 = vpack.c.b16 %v508, %v504
    %v617 = vpack.c.b16 %v513, %v509
    %v618 = vpack.c.b16 %v514, %v510
    %v619 = vpack.c.b16 %v515, %v511
    %v620 = vpack.c.b16 %v516, %v512
    %v621 = vpack.c.b16 %v521, %v517
    %v622 = vpack.c.b16 %v522, %v518
    %v623 = vpack.c.b16 %v523, %v519
    %v624 = vpack.c.b16 %v524, %v520
    %v625 = vpack.c.b16 %v529, %v525
    %v626 = vpack.c.b16 %v530, %v526
    %v627 = vpack.c.b16 %v531, %v527
    %v628 = vpack.c.b16 %v532, %v528
    %v629 = vpack.c.b16 %v537, %v533
    %v630 = vpack.c.b16 %v538, %v534
    %v631 = vpack.c.b16 %v539, %v535
    %v632 = vpack.c.b16 %v540, %v536
    %v633 = vpack.c.b16 %v545, %v541
    %v634 = vpack.c.b16 %v546, %v542
    %v635 = vpack.c.b16 %v547, %v543
    %v636 = vpack.c.b16 %v548, %v544
    %v637 = vpack.c.b16 %v553, %v549
    %v638 = vpack.c.b16 %v554, %v550
    %v639 = vpack.c.b16 %v555, %v551
    %v640 = vpack.c.b16 %v556, %v552
    %v641 = vpack.c.b16 %v561, %v557
    %v642 = vpack.c.b16 %v562, %v558
    %v643 = vpack.c.b16 %v563, %v559
    %v644 = vpack.c.b16 %v564, %v560
    %v645 = vpack.c.b16 %v569, %v565
    %v646 = vpack.c.b16 %v570, %v566
    %v647 = vpack.c.b16 %v571, %v567
    %v648 = vpack.c.b16 %v572, %v568
    %v649 = vpack.c.b16 %v577, %v573
    %v650 = vpack.c.b16 %v578, %v574
    %v651 = vpack.c.b16 %v579, %v575
    %v652 = vpack.c.b16 %v580, %v576
    %v653 = vpack.c.b16 %v585, %v581
    %v654 = vpack.c.b16 %v586, %v582
    %v655 = vpack.c.b16 %v587, %v583
    %v656 = vpack.c.b16 %v588, %v584
    %v657 = vpack.c.b16 %v593, %v589
    %v658 = vpack.c.b16 %v594, %v590
    %v659 = vpack.c.b16 %v595, %v591
    %v660 = vpack.c.b16 %v596, %v592
    %725 = vmatpush.bf16.msra.mxu0 %v625
    %726 = vmatpush.bf16.msra.mxu0 %v621
    %727 = vmatpush.bf16.msra.mxu0 %v617
    %728 = vmatpush.bf16.msra.mxu0 %v613
    %729 = vmatpush.bf16.msra.mxu0 %v609
    %730 = vmatpush.bf16.msra.mxu0 %v605
    %731 = vmatpush.bf16.msra.mxu0 %v601
    %732 = vmatpush.bf16.msra.mxu0 %v597
    %733 = vmatmul.bf16.gmra.mxu0 %v330
    %v734 = vpop.f32.mrf.mxu0
    %v735 = vadd.f32 %v397, %v734
    %v736 = vpop.f32.mrf.mxu0
    %737 = vdwg.mxu0
    %738 = vmatpush.bf16.msra.mxu0 %v657
    %739 = vmatpush.bf16.msra.mxu0 %v653
    %740 = vmatpush.bf16.msra.mxu0 %v649
    %741 = vmatpush.bf16.msra.mxu0 %v645
    %742 = vmatpush.bf16.msra.mxu0 %v641
    %743 = vmatpush.bf16.msra.mxu0 %v637
    %744 = vmatpush.bf16.msra.mxu0 %v633
    %745 = vmatpush.bf16.msra.mxu0 %v629
    %746 = vmatmul.bf16.gmra.mxu0 %v331
    %v747 = vpop.f32.mrf.mxu0
    %v748 = vadd.f32 %v735, %v747
    %v749 = vpop.f32.mrf.mxu0
    %750 = vdwg.mxu0
    %751 = vmatpush.bf16.msra.mxu0 %v626
    %752 = vmatpush.bf16.msra.mxu0 %v622
    %753 = vmatpush.bf16.msra.mxu0 %v618
    %754 = vmatpush.bf16.msra.mxu0 %v614
    %755 = vmatpush.bf16.msra.mxu0 %v610
    %756 = vmatpush.bf16.msra.mxu0 %v606
    %757 = vmatpush.bf16.msra.mxu0 %v602
    %758 = vmatpush.bf16.msra.mxu0 %v598
    %759 = vmatmul.bf16.gmra.mxu0 %v330
    %v760 = vpop.f32.mrf.mxu0
    %v761 = vadd.f32 %v398, %v760
    %v762 = vpop.f32.mrf.mxu0
    %763 = vdwg.mxu0
    %764 = vmatpush.bf16.msra.mxu0 %v658
    %765 = vmatpush.bf16.msra.mxu0 %v654
    %766 = vmatpush.bf16.msra.mxu0 %v650
    %767 = vmatpush.bf16.msra.mxu0 %v646
    %768 = vmatpush.bf16.msra.mxu0 %v642
    %769 = vmatpush.bf16.msra.mxu0 %v638
    %770 = vmatpush.bf16.msra.mxu0 %v634
    %771 = vmatpush.bf16.msra.mxu0 %v630
    %772 = vmatmul.bf16.gmra.mxu0 %v331
    %v773 = vpop.f32.mrf.mxu0
    %v774 = vadd.f32 %v761, %v773
    %v775 = vpop.f32.mrf.mxu0
    %776 = vdwg.mxu0
    %777 = vmatpush.bf16.msra.mxu0 %v627
    %778 = vmatpush.bf16.msra.mxu0 %v623
    %779 = vmatpush.bf16.msra.mxu0 %v619
    %780 = vmatpush.bf16.msra.mxu0 %v615
    %781 = vmatpush.bf16.msra.mxu0 %v611
    %782 = vmatpush.bf16.msra.mxu0 %v607
    %783 = vmatpush.bf16.msra.mxu0 %v603
    %784 = vmatpush.bf16.msra.mxu0 %v599
    %785 = vmatmul.bf16.gmra.mxu0 %v330
    %v786 = vpop.f32.mrf.mxu0
    %v787 = vadd.f32 %v399, %v786
    %v788 = vpop.f32.mrf.mxu0
    %789 = vdwg.mxu0
    %790 = vmatpush.bf16.msra.mxu0 %v659
    %791 = vmatpush.bf16.msra.mxu0 %v655
    %792 = vmatpush.bf16.msra.mxu0 %v651
    %793 = vmatpush.bf16.msra.mxu0 %v647
    %794 = vmatpush.bf16.msra.mxu0 %v643
    %795 = vmatpush.bf16.msra.mxu0 %v639
    %796 = vmatpush.bf16.msra.mxu0 %v635
    %797 = vmatpush.bf16.msra.mxu0 %v631
    %798 = vmatmul.bf16.gmra.mxu0 %v331
    %v799 = vpop.f32.mrf.mxu0
    %v800 = vadd.f32 %v787, %v799
    %v801 = vpop.f32.mrf.mxu0
    %802 = vdwg.mxu0
    %803 = vmatpush.bf16.msra.mxu0 %v628
    %804 = vmatpush.bf16.msra.mxu0 %v624
    %805 = vmatpush.bf16.msra.mxu0 %v620
    %806 = vmatpush.bf16.msra.mxu0 %v616
    %807 = vmatpush.bf16.msra.mxu0 %v612
    %808 = vmatpush.bf16.msra.mxu0 %v608
    %809 = vmatpush.bf16.msra.mxu0 %v604
    %810 = vmatpush.bf16.msra.mxu0 %v600
    %811 = vmatmul.bf16.gmra.mxu0 %v330
    %v812 = vpop.f32.mrf.mxu0
    %v813 = vadd.f32 %v400, %v812
    %v814 = vpop.f32.mrf.mxu0
    %815 = vdwg.mxu0
    %816 = vmatpush.bf16.msra.mxu0 %v660
    %817 = vmatpush.bf16.msra.mxu0 %v656
    %818 = vmatpush.bf16.msra.mxu0 %v652
    %819 = vmatpush.bf16.msra.mxu0 %v648
    %820 = vmatpush.bf16.msra.mxu0 %v644
    %821 = vmatpush.bf16.msra.mxu0 %v640
    %822 = vmatpush.bf16.msra.mxu0 %v636
    %823 = vmatpush.bf16.msra.mxu0 %v632
    %824 = vmatmul.bf16.gmra.mxu0 %v331
    %v825 = vpop.f32.mrf.mxu0
    %v826 = vadd.f32 %v813, %v825
    %v827 = vpop.f32.mrf.mxu0
    %828 = vdwg.mxu0
    %v829 = vmax.f32 %v748, 0.0
    %v830 = vmax.f32 %v774, 0.0
    %v831 = vmax.f32 %v800, 0.0
    %v832 = vmax.f32 %v826, 0.0
    %v833 = vld [vmem:[%s6] sm:$0x3]
    %v834 = vpack.c.bf16 %v829, %v829
    %v835 = vpack.c.bf16 %v830, %v830
    %v836 = vpack.c.bf16 %v831, %v831
    %v837 = vpack.c.bf16 %v832, %v832
    %v838 = vld [vmem:[#allocation4] sm:$0xff]
    %v839 = vld [vmem:[#allocation4 + $0x8] sm:$0xff]
    %v840 = vld [vmem:[#allocation4 + $0x10] sm:$0xff]
    %v841 = vld [vmem:[#allocation4 + $0x18] sm:$0xff]
    %v842 = vld [vmem:[#allocation4 + $0x20] sm:$0xff]
    %v843 = vld [vmem:[#allocation4 + $0x28] sm:$0xff]
    %v844 = vld [vmem:[#allocation4 + $0x30] sm:$0xff]
    %v845 = vld [vmem:[#allocation4 + $0x38] sm:$0xff]
    %v846 = vld [vmem:[#allocation4 + $0x40] sm:$0xff]
    %v847 = vld [vmem:[#allocation4 + $0x48] sm:$0xff]
    %v848 = vld [vmem:[#allocation4 + $0x50] sm:$0xff]
    %v849 = vld [vmem:[#allocation4 + $0x58] sm:$0xff]
    %v850 = vld [vmem:[#allocation4 + $0x60] sm:$0xff]
    %v851 = vld [vmem:[#allocation4 + $0x68] sm:$0xff]
    %v852 = vld [vmem:[#allocation4 + $0x70] sm:$0xff]
    %v853 = vld [vmem:[#allocation4 + $0x78] sm:$0xff]
    %v854 = vld [vmem:[#allocation4 + $0x80] sm:$0xff]
    %v855 = vld [vmem:[#allocation4 + $0x88] sm:$0xff]
    %v856 = vld [vmem:[#allocation4 + $0x90] sm:$0xff]
    %v857 = vld [vmem:[#allocation4 + $0x98] sm:$0xff]
    %v858 = vld [vmem:[#allocation4 + $0xa0] sm:$0xff]
    %v859 = vld [vmem:[#allocation4 + $0xa8] sm:$0xff]
    %v860 = vld [vmem:[#allocation4 + $0xb0] sm:$0xff]
    %v861 = vld [vmem:[#allocation4 + $0xb8] sm:$0xff]
    %v862 = vld [vmem:[#allocation4 + $0xc0] sm:$0xff]
    %v863 = vld [vmem:[#allocation4 + $0xc8] sm:$0xff]
    %v864 = vld [vmem:[#allocation4 + $0xd0] sm:$0xff]
    %v865 = vld [vmem:[#allocation4 + $0xd8] sm:$0xff]
    %v866 = vld [vmem:[#allocation4 + $0xe0] sm:$0xff]
    %v867 = vld [vmem:[#allocation4 + $0xe8] sm:$0xff]
    %v868 = vld [vmem:[#allocation4 + $0xf0] sm:$0xff]
    %v869 = vld [vmem:[#allocation4 + $0xf8] sm:$0xff]
    %v870 = vld [vmem:[#allocation4 + $0x100] sm:$0xff]
    %v871 = vld [vmem:[#allocation4 + $0x108] sm:$0xff]
    %v872 = vld [vmem:[#allocation4 + $0x110] sm:$0xff]
    %v873 = vld [vmem:[#allocation4 + $0x118] sm:$0xff]
    %v874 = vld [vmem:[#allocation4 + $0x120] sm:$0xff]
    %v875 = vld [vmem:[#allocation4 + $0x128] sm:$0xff]
    %v876 = vld [vmem:[#allocation4 + $0x130] sm:$0xff]
    %v877 = vld [vmem:[#allocation4 + $0x138] sm:$0xff]
    %v878 = vld [vmem:[#allocation4 + $0x140] sm:$0xff]
    %v879 = vld [vmem:[#allocation4 + $0x148] sm:$0xff]
    %v880 = vld [vmem:[#allocation4 + $0x150] sm:$0xff]
    %v881 = vld [vmem:[#allocation4 + $0x158] sm:$0xff]
    %v882 = vld [vmem:[#allocation4 + $0x160] sm:$0xff]
    %v883 = vld [vmem:[#allocation4 + $0x168] sm:$0xff]
    %v884 = vld [vmem:[#allocation4 + $0x170] sm:$0xff]
    %v885 = vld [vmem:[#allocation4 + $0x178] sm:$0xff]
    %v886 = vld [vmem:[#allocation4 + $0x180] sm:$0xff]
    %v887 = vld [vmem:[#allocation4 + $0x188] sm:$0xff]
    %v888 = vld [vmem:[#allocation4 + $0x190] sm:$0xff]
    %v889 = vld [vmem:[#allocation4 + $0x198] sm:$0xff]
    %v890 = vld [vmem:[#allocation4 + $0x1a0] sm:$0xff]
    %v891 = vld [vmem:[#allocation4 + $0x1a8] sm:$0xff]
    %v892 = vld [vmem:[#allocation4 + $0x1b0] sm:$0xff]
    %v893 = vld [vmem:[#allocation4 + $0x1b8] sm:$0xff]
    %v894 = vld [vmem:[#allocation4 + $0x1c0] sm:$0xff]
    %v895 = vld [vmem:[#allocation4 + $0x1c8] sm:$0xff]
    %v896 = vld [vmem:[#allocation4 + $0x1d0] sm:$0xff]
    %v897 = vld [vmem:[#allocation4 + $0x1d8] sm:$0xff]
    %v898 = vld [vmem:[#allocation4 + $0x1e0] sm:$0xff]
    %v899 = vld [vmem:[#allocation4 + $0x1e8] sm:$0xff]
    %v900 = vld [vmem:[#allocation4 + $0x1f0] sm:$0xff]
    %v901 = vld [vmem:[#allocation4 + $0x1f8] sm:$0xff]
    %v903 = vperm.slane %v833, 0
    %v904 = vperm.slane %v833, 1
    %v971 = vunpack.c.l.b16 %v838
    %v972 = vunpack.c.h.b16 %v838
    %v973 = vunpack.c.l.b16 %v839
    %v974 = vunpack.c.h.b16 %v839
    %v975 = vunpack.c.l.b16 %v840
    %v976 = vunpack.c.h.b16 %v840
    %v977 = vunpack.c.l.b16 %v841
    %v978 = vunpack.c.h.b16 %v841
    %v979 = vunpack.c.l.b16 %v842
    %v980 = vunpack.c.h.b16 %v842
    %v981 = vunpack.c.l.b16 %v843
    %v982 = vunpack.c.h.b16 %v843
    %v983 = vunpack.c.l.b16 %v844
    %v984 = vunpack.c.h.b16 %v844
    %v985 = vunpack.c.l.b16 %v845
    %v986 = vunpack.c.h.b16 %v845
    %v987 = vunpack.c.l.b16 %v846
    %v988 = vunpack.c.h.b16 %v846
    %v989 = vunpack.c.l.b16 %v847
    %v990 = vunpack.c.h.b16 %v847
    %v991 = vunpack.c.l.b16 %v848
    %v992 = vunpack.c.h.b16 %v848
    %v993 = vunpack.c.l.b16 %v849
    %v994 = vunpack.c.h.b16 %v849
    %v995 = vunpack.c.l.b16 %v850
    %v996 = vunpack.c.h.b16 %v850
    %v997 = vunpack.c.l.b16 %v851
    %v998 = vunpack.c.h.b16 %v851
    %v999 = vunpack.c.l.b16 %v852
    %v1000 = vunpack.c.h.b16 %v852
    %v1001 = vunpack.c.l.b16 %v853
    %v1002 = vunpack.c.h.b16 %v853
    %v1003 = vunpack.c.l.b16 %v854
    %v1004 = vunpack.c.h.b16 %v854
    %v1005 = vunpack.c.l.b16 %v855
    %v1006 = vunpack.c.h.b16 %v855
    %v1007 = vunpack.c.l.b16 %v856
    %v1008 = vunpack.c.h.b16 %v856
    %v1009 = vunpack.c.l.b16 %v857
    %v1010 = vunpack.c.h.b16 %v857
    %v1011 = vunpack.c.l.b16 %v858
    %v1012 = vunpack.c.h.b16 %v858
    %v1013 = vunpack.c.l.b16 %v859
    %v1014 = vunpack.c.h.b16 %v859
    %v1015 = vunpack.c.l.b16 %v860
    %v1016 = vunpack.c.h.b16 %v860
    %v1017 = vunpack.c.l.b16 %v861
    %v1018 = vunpack.c.h.b16 %v861
    %v1019 = vunpack.c.l.b16 %v862
    %v1020 = vunpack.c.h.b16 %v862
    %v1021 = vunpack.c.l.b16 %v863
    %v1022 = vunpack.c.h.b16 %v863
    %v1023 = vunpack.c.l.b16 %v864
    %v1024 = vunpack.c.h.b16 %v864
    %v1025 = vunpack.c.l.b16 %v865
    %v1026 = vunpack.c.h.b16 %v865
    %v1027 = vunpack.c.l.b16 %v866
    %v1028 = vunpack.c.h.b16 %v866
    %v1029 = vunpack.c.l.b16 %v867
    %v1030 = vunpack.c.h.b16 %v867
    %v1031 = vunpack.c.l.b16 %v868
    %v1032 = vunpack.c.h.b16 %v868
    %v1033 = vunpack.c.l.b16 %v869
    %v1034 = vunpack.c.h.b16 %v869
    %v1035 = vunpack.c.l.b16 %v870
    %v1036 = vunpack.c.h.b16 %v870
    %v1037 = vunpack.c.l.b16 %v871
    %v1038 = vunpack.c.h.b16 %v871
    %v1039 = vunpack.c.l.b16 %v872
    %v1040 = vunpack.c.h.b16 %v872
    %v1041 = vunpack.c.l.b16 %v873
    %v1042 = vunpack.c.h.b16 %v873
    %v1043 = vunpack.c.l.b16 %v874
    %v1044 = vunpack.c.h.b16 %v874
    %v1045 = vunpack.c.l.b16 %v875
    %v1046 = vunpack.c.h.b16 %v875
    %v1047 = vunpack.c.l.b16 %v876
    %v1048 = vunpack.c.h.b16 %v876
    %v1049 = vunpack.c.l.b16 %v877
    %v1050 = vunpack.c.h.b16 %v877
    %v1051 = vunpack.c.l.b16 %v878
    %v1052 = vunpack.c.h.b16 %v878
    %v1053 = vunpack.c.l.b16 %v879
    %v1054 = vunpack.c.h.b16 %v879
    %v1055 = vunpack.c.l.b16 %v880
    %v1056 = vunpack.c.h.b16 %v880
    %v1057 = vunpack.c.l.b16 %v881
    %v1058 = vunpack.c.h.b16 %v881
    %v1059 = vunpack.c.l.b16 %v882
    %v1060 = vunpack.c.h.b16 %v882
    %v1061 = vunpack.c.l.b16 %v883
    %v1062 = vunpack.c.h.b16 %v883
    %v1063 = vunpack.c.l.b16 %v884
    %v1064 = vunpack.c.h.b16 %v884
    %v1065 = vunpack.c.l.b16 %v885
    %v1066 = vunpack.c.h.b16 %v885
    %v1067 = vunpack.c.l.b16 %v886
    %v1068 = vunpack.c.h.b16 %v886
    %v1069 = vunpack.c.l.b16 %v887
    %v1070 = vunpack.c.h.b16 %v887
    %v1071 = vunpack.c.l.b16 %v888
    %v1072 = vunpack.c.h.b16 %v888
    %v1073 = vunpack.c.l.b16 %v889
    %v1074 = vunpack.c.h.b16 %v889
    %v1075 = vunpack.c.l.b16 %v890
    %v1076 = vunpack.c.h.b16 %v890
    %v1077 = vunpack.c.l.b16 %v891
    %v1078 = vunpack.c.h.b16 %v891
    %v1079 = vunpack.c.l.b16 %v892
    %v1080 = vunpack.c.h.b16 %v892
    %v1081 = vunpack.c.l.b16 %v893
    %v1082 = vunpack.c.h.b16 %v893
    %v1083 = vunpack.c.l.b16 %v894
    %v1084 = vunpack.c.h.b16 %v894
    %v1085 = vunpack.c.l.b16 %v895
    %v1086 = vunpack.c.h.b16 %v895
    %v1087 = vunpack.c.l.b16 %v896
    %v1088 = vunpack.c.h.b16 %v896
    %v1089 = vunpack.c.l.b16 %v897
    %v1090 = vunpack.c.h.b16 %v897
    %v1091 = vunpack.c.l.b16 %v898
    %v1092 = vunpack.c.h.b16 %v898
    %v1093 = vunpack.c.l.b16 %v899
    %v1094 = vunpack.c.h.b16 %v899
    %v1095 = vunpack.c.l.b16 %v900
    %v1096 = vunpack.c.h.b16 %v900
    %v1097 = vunpack.c.l.b16 %v901
    %v1098 = vunpack.c.h.b16 %v901
    %v1099 = vpack.c.b16 %v973, %v971
    %v1100 = vpack.c.b16 %v974, %v972
    %v1101 = vpack.c.b16 %v977, %v975
    %v1102 = vpack.c.b16 %v978, %v976
    %v1103 = vpack.c.b16 %v981, %v979
    %v1104 = vpack.c.b16 %v982, %v980
    %v1105 = vpack.c.b16 %v985, %v983
    %v1106 = vpack.c.b16 %v986, %v984
    %v1107 = vpack.c.b16 %v989, %v987
    %v1108 = vpack.c.b16 %v990, %v988
    %v1109 = vpack.c.b16 %v993, %v991
    %v1110 = vpack.c.b16 %v994, %v992
    %v1111 = vpack.c.b16 %v997, %v995
    %v1112 = vpack.c.b16 %v998, %v996
    %v1113 = vpack.c.b16 %v1001, %v999
    %v1114 = vpack.c.b16 %v1002, %v1000
    %v1115 = vpack.c.b16 %v1005, %v1003
    %v1116 = vpack.c.b16 %v1006, %v1004
    %v1117 = vpack.c.b16 %v1009, %v1007
    %v1118 = vpack.c.b16 %v1010, %v1008
    %v1119 = vpack.c.b16 %v1013, %v1011
    %v1120 = vpack.c.b16 %v1014, %v1012
    %v1121 = vpack.c.b16 %v1017, %v1015
    %v1122 = vpack.c.b16 %v1018, %v1016
    %v1123 = vpack.c.b16 %v1021, %v1019
    %v1124 = vpack.c.b16 %v1022, %v1020
    %v1125 = vpack.c.b16 %v1025, %v1023
    %v1126 = vpack.c.b16 %v1026, %v1024
    %v1127 = vpack.c.b16 %v1029, %v1027
    %v1128 = vpack.c.b16 %v1030, %v1028
    %v1129 = vpack.c.b16 %v1033, %v1031
    %v1130 = vpack.c.b16 %v1034, %v1032
    %v1131 = vpack.c.b16 %v1037, %v1035
    %v1132 = vpack.c.b16 %v1038, %v1036
    %v1133 = vpack.c.b16 %v1041, %v1039
    %v1134 = vpack.c.b16 %v1042, %v1040
    %v1135 = vpack.c.b16 %v1045, %v1043
    %v1136 = vpack.c.b16 %v1046, %v1044
    %v1137 = vpack.c.b16 %v1049, %v1047
    %v1138 = vpack.c.b16 %v1050, %v1048
    %v1139 = vpack.c.b16 %v1053, %v1051
    %v1140 = vpack.c.b16 %v1054, %v1052
    %v1141 = vpack.c.b16 %v1057, %v1055
    %v1142 = vpack.c.b16 %v1058, %v1056
    %v1143 = vpack.c.b16 %v1061, %v1059
    %v1144 = vpack.c.b16 %v1062, %v1060
    %v1145 = vpack.c.b16 %v1065, %v1063
    %v1146 = vpack.c.b16 %v1066, %v1064
    %v1147 = vpack.c.b16 %v1069, %v1067
    %v1148 = vpack.c.b16 %v1070, %v1068
    %v1149 = vpack.c.b16 %v1073, %v1071
    %v1150 = vpack.c.b16 %v1074, %v1072
    %v1151 = vpack.c.b16 %v1077, %v1075
    %v1152 = vpack.c.b16 %v1078, %v1076
    %v1153 = vpack.c.b16 %v1081, %v1079
    %v1154 = vpack.c.b16 %v1082, %v1080
    %v1155 = vpack.c.b16 %v1085, %v1083
    %v1156 = vpack.c.b16 %v1086, %v1084
    %v1157 = vpack.c.b16 %v1089, %v1087
    %v1158 = vpack.c.b16 %v1090, %v1088
    %v1159 = vpack.c.b16 %v1093, %v1091
    %v1160 = vpack.c.b16 %v1094, %v1092
    %v1161 = vpack.c.b16 %v1097, %v1095
    %v1162 = vpack.c.b16 %v1098, %v1096
    %1227 = vmatpush.bf16.msra.mxu0 %v1113
    %1228 = vmatpush.bf16.msra.mxu0 %v1111
    %1229 = vmatpush.bf16.msra.mxu0 %v1109
    %1230 = vmatpush.bf16.msra.mxu0 %v1107
    %1231 = vmatpush.bf16.msra.mxu0 %v1105
    %1232 = vmatpush.bf16.msra.mxu0 %v1103
    %1233 = vmatpush.bf16.msra.mxu0 %v1101
    %1234 = vmatpush.bf16.msra.mxu0 %v1099
    %1235 = vmatmul.bf16.gmra.mxu0 %v834
    %v1236 = vpop.f32.mrf.mxu0
    %v1237 = vadd.f32 %v903, %v1236
    %v1238 = vpop.f32.mrf.mxu0
    %1239 = vdwg.mxu0
    %1240 = vmatpush.bf16.msra.mxu0 %v1129
    %1241 = vmatpush.bf16.msra.mxu0 %v1127
    %1242 = vmatpush.bf16.msra.mxu0 %v1125
    %1243 = vmatpush.bf16.msra.mxu0 %v1123
    %1244 = vmatpush.bf16.msra.mxu0 %v1121
    %1245 = vmatpush.bf16.msra.mxu0 %v1119
    %1246 = vmatpush.bf16.msra.mxu0 %v1117
    %1247 = vmatpush.bf16.msra.mxu0 %v1115
    %1248 = vmatmul.bf16.gmra.mxu0 %v835
    %v1249 = vpop.f32.mrf.mxu0
    %v1250 = vadd.f32 %v1237, %v1249
    %v1251 = vpop.f32.mrf.mxu0
    %1252 = vdwg.mxu0
    %1253 = vmatpush.bf16.msra.mxu0 %v1145
    %1254 = vmatpush.bf16.msra.mxu0 %v1143
    %1255 = vmatpush.bf16.msra.mxu0 %v1141
    %1256 = vmatpush.bf16.msra.mxu0 %v1139
    %1257 = vmatpush.bf16.msra.mxu0 %v1137
    %1258 = vmatpush.bf16.msra.mxu0 %v1135
    %1259 = vmatpush.bf16.msra.mxu0 %v1133
    %1260 = vmatpush.bf16.msra.mxu0 %v1131
    %1261 = vmatmul.bf16.gmra.mxu0 %v836
    %v1262 = vpop.f32.mrf.mxu0
    %v1263 = vadd.f32 %v1250, %v1262
    %v1264 = vpop.f32.mrf.mxu0
    %1265 = vdwg.mxu0
    %1266 = vmatpush.bf16.msra.mxu0 %v1161
    %1267 = vmatpush.bf16.msra.mxu0 %v1159
    %1268 = vmatpush.bf16.msra.mxu0 %v1157
    %1269 = vmatpush.bf16.msra.mxu0 %v1155
    %1270 = vmatpush.bf16.msra.mxu0 %v1153
    %1271 = vmatpush.bf16.msra.mxu0 %v1151
    %1272 = vmatpush.bf16.msra.mxu0 %v1149
    %1273 = vmatpush.bf16.msra.mxu0 %v1147
    %1274 = vmatmul.bf16.gmra.mxu0 %v837
    %v1275 = vpop.f32.mrf.mxu0
    %v1276 = vadd.f32 %v1263, %v1275
    %v1277 = vpop.f32.mrf.mxu0
    %1278 = vdwg.mxu0
    %1279 = vmatpush.bf16.msra.mxu0 %v1114
    %1280 = vmatpush.bf16.msra.mxu0 %v1112
    %1281 = vmatpush.bf16.msra.mxu0 %v1110
    %1282 = vmatpush.bf16.msra.mxu0 %v1108
    %1283 = vmatpush.bf16.msra.mxu0 %v1106
    %1284 = vmatpush.bf16.msra.mxu0 %v1104
    %1285 = vmatpush.bf16.msra.mxu0 %v1102
    %1286 = vmatpush.bf16.msra.mxu0 %v1100
    %1287 = vmatmul.bf16.gmra.mxu0 %v834
    %v1288 = vpop.f32.mrf.mxu0
    %v1289 = vadd.f32 %v904, %v1288
    %v1290 = vpop.f32.mrf.mxu0
    %1291 = vdwg.mxu0
    %1292 = vmatpush.bf16.msra.mxu0 %v1130
    %1293 = vmatpush.bf16.msra.mxu0 %v1128
    %1294 = vmatpush.bf16.msra.mxu0 %v1126
    %1295 = vmatpush.bf16.msra.mxu0 %v1124
    %1296 = vmatpush.bf16.msra.mxu0 %v1122
    %1297 = vmatpush.bf16.msra.mxu0 %v1120
    %1298 = vmatpush.bf16.msra.mxu0 %v1118
    %1299 = vmatpush.bf16.msra.mxu0 %v1116
    %1300 = vmatmul.bf16.gmra.mxu0 %v835
    %v1301 = vpop.f32.mrf.mxu0
    %v1302 = vadd.f32 %v1289, %v1301
    %v1303 = vpop.f32.mrf.mxu0
    %1304 = vdwg.mxu0
    %1305 = vmatpush.bf16.msra.mxu0 %v1146
    %1306 = vmatpush.bf16.msra.mxu0 %v1144
    %1307 = vmatpush.bf16.msra.mxu0 %v1142
    %1308 = vmatpush.bf16.msra.mxu0 %v1140
    %1309 = vmatpush.bf16.msra.mxu0 %v1138
    %1310 = vmatpush.bf16.msra.mxu0 %v1136
    %1311 = vmatpush.bf16.msra.mxu0 %v1134
    %1312 = vmatpush.bf16.msra.mxu0 %v1132
    %1313 = vmatmul.bf16.gmra.mxu0 %v836
    %v1314 = vpop.f32.mrf.mxu0
    %v1315 = vadd.f32 %v1302, %v1314
    %v1316 = vpop.f32.mrf.mxu0
    %1317 = vdwg.mxu0
    %1318 = vmatpush.bf16.msra.mxu0 %v1162
    %1319 = vmatpush.bf16.msra.mxu0 %v1160
    %1320 = vmatpush.bf16.msra.mxu0 %v1158
    %1321 = vmatpush.bf16.msra.mxu0 %v1156
    %1322 = vmatpush.bf16.msra.mxu0 %v1154
    %1323 = vmatpush.bf16.msra.mxu0 %v1152
    %1324 = vmatpush.bf16.msra.mxu0 %v1150
    %1325 = vmatpush.bf16.msra.mxu0 %v1148
    %1326 = vmatmul.bf16.gmra.mxu0 %v837
    %v1327 = vpop.f32.mrf.mxu0
    %v1328 = vadd.f32 %v1315, %v1327
    %v1329 = vpop.f32.mrf.mxu0
    %1330 = vdwg.mxu0
    %v1331 = vadd.f32 %v1276, %v313
    %v1332 = vadd.f32 %v1328, %v326
    %v1333 = vmax.f32 %v1331, 0.0
    %v1334 = vmax.f32 %v1332, 0.0
    %v1335 = vld [vmem:[%s8] sm:$0x3]
    %v1336 = vpack.c.bf16 %v1333, %v1333
    %v1337 = vpack.c.bf16 %v1334, %v1334
    %v1338 = vld [vmem:[%s7] sm:$0xff]
    %v1339 = vld [vmem:[%s7 + $0x8] sm:$0xff]
    %v1340 = vld [vmem:[%s7 + $0x10] sm:$0xff]
    %v1341 = vld [vmem:[%s7 + $0x18] sm:$0xff]
    %v1342 = vld [vmem:[%s7 + $0x20] sm:$0xff]
    %v1343 = vld [vmem:[%s7 + $0x28] sm:$0xff]
    %v1344 = vld [vmem:[%s7 + $0x30] sm:$0xff]
    %v1345 = vld [vmem:[%s7 + $0x38] sm:$0xff]
    %v1346 = vld [vmem:[%s7 + $0x40] sm:$0xff]
    %v1347 = vld [vmem:[%s7 + $0x48] sm:$0xff]
    %v1348 = vld [vmem:[%s7 + $0x50] sm:$0xff]
    %v1349 = vld [vmem:[%s7 + $0x58] sm:$0xff]
    %v1350 = vld [vmem:[%s7 + $0x60] sm:$0xff]
    %v1351 = vld [vmem:[%s7 + $0x68] sm:$0xff]
    %v1352 = vld [vmem:[%s7 + $0x70] sm:$0xff]
    %v1353 = vld [vmem:[%s7 + $0x78] sm:$0xff]
    %v1354 = vld [vmem:[%s7 + $0x80] sm:$0xff]
    %v1355 = vld [vmem:[%s7 + $0x88] sm:$0xff]
    %v1356 = vld [vmem:[%s7 + $0x90] sm:$0xff]
    %v1357 = vld [vmem:[%s7 + $0x98] sm:$0xff]
    %v1358 = vld [vmem:[%s7 + $0xa0] sm:$0xff]
    %v1359 = vld [vmem:[%s7 + $0xa8] sm:$0xff]
    %v1360 = vld [vmem:[%s7 + $0xb0] sm:$0xff]
    %v1361 = vld [vmem:[%s7 + $0xb8] sm:$0xff]
    %v1362 = vld [vmem:[%s7 + $0xc0] sm:$0xff]
    %v1363 = vld [vmem:[%s7 + $0xc8] sm:$0xff]
    %v1364 = vld [vmem:[%s7 + $0xd0] sm:$0xff]
    %v1365 = vld [vmem:[%s7 + $0xd8] sm:$0xff]
    %v1366 = vld [vmem:[%s7 + $0xe0] sm:$0xff]
    %v1367 = vld [vmem:[%s7 + $0xe8] sm:$0xff]
    %v1368 = vld [vmem:[%s7 + $0xf0] sm:$0xff]
    %v1369 = vld [vmem:[%s7 + $0xf8] sm:$0xff]
    %v1371 = vperm.slane %v1335, 0
    %v1372 = vperm.slane %v1335, 1
    %v1407 = vunpack.c.l.b16 %v1338
    %v1408 = vunpack.c.h.b16 %v1338
    %v1409 = vunpack.c.l.b16 %v1339
    %v1410 = vunpack.c.h.b16 %v1339
    %v1411 = vunpack.c.l.b16 %v1340
    %v1412 = vunpack.c.h.b16 %v1340
    %v1413 = vunpack.c.l.b16 %v1341
    %v1414 = vunpack.c.h.b16 %v1341
    %v1415 = vunpack.c.l.b16 %v1342
    %v1416 = vunpack.c.h.b16 %v1342
    %v1417 = vunpack.c.l.b16 %v1343
    %v1418 = vunpack.c.h.b16 %v1343
    %v1419 = vunpack.c.l.b16 %v1344
    %v1420 = vunpack.c.h.b16 %v1344
    %v1421 = vunpack.c.l.b16 %v1345
    %v1422 = vunpack.c.h.b16 %v1345
    %v1423 = vunpack.c.l.b16 %v1346
    %v1424 = vunpack.c.h.b16 %v1346
    %v1425 = vunpack.c.l.b16 %v1347
    %v1426 = vunpack.c.h.b16 %v1347
    %v1427 = vunpack.c.l.b16 %v1348
    %v1428 = vunpack.c.h.b16 %v1348
    %v1429 = vunpack.c.l.b16 %v1349
    %v1430 = vunpack.c.h.b16 %v1349
    %v1431 = vunpack.c.l.b16 %v1350
    %v1432 = vunpack.c.h.b16 %v1350
    %v1433 = vunpack.c.l.b16 %v1351
    %v1434 = vunpack.c.h.b16 %v1351
    %v1435 = vunpack.c.l.b16 %v1352
    %v1436 = vunpack.c.h.b16 %v1352
    %v1437 = vunpack.c.l.b16 %v1353
    %v1438 = vunpack.c.h.b16 %v1353
    %v1439 = vunpack.c.l.b16 %v1354
    %v1440 = vunpack.c.h.b16 %v1354
    %v1441 = vunpack.c.l.b16 %v1355
    %v1442 = vunpack.c.h.b16 %v1355
    %v1443 = vunpack.c.l.b16 %v1356
    %v1444 = vunpack.c.h.b16 %v1356
    %v1445 = vunpack.c.l.b16 %v1357
    %v1446 = vunpack.c.h.b16 %v1357
    %v1447 = vunpack.c.l.b16 %v1358
    %v1448 = vunpack.c.h.b16 %v1358
    %v1449 = vunpack.c.l.b16 %v1359
    %v1450 = vunpack.c.h.b16 %v1359
    %v1451 = vunpack.c.l.b16 %v1360
    %v1452 = vunpack.c.h.b16 %v1360
    %v1453 = vunpack.c.l.b16 %v1361
    %v1454 = vunpack.c.h.b16 %v1361
    %v1455 = vunpack.c.l.b16 %v1362
    %v1456 = vunpack.c.h.b16 %v1362
    %v1457 = vunpack.c.l.b16 %v1363
    %v1458 = vunpack.c.h.b16 %v1363
    %v1459 = vunpack.c.l.b16 %v1364
    %v1460 = vunpack.c.h.b16 %v1364
    %v1461 = vunpack.c.l.b16 %v1365
    %v1462 = vunpack.c.h.b16 %v1365
    %v1463 = vunpack.c.l.b16 %v1366
    %v1464 = vunpack.c.h.b16 %v1366
    %v1465 = vunpack.c.l.b16 %v1367
    %v1466 = vunpack.c.h.b16 %v1367
    %v1467 = vunpack.c.l.b16 %v1368
    %v1468 = vunpack.c.h.b16 %v1368
    %v1469 = vunpack.c.l.b16 %v1369
    %v1470 = vunpack.c.h.b16 %v1369
    %v1471 = vpack.c.b16 %v1409, %v1407
    %v1472 = vpack.c.b16 %v1410, %v1408
    %v1473 = vpack.c.b16 %v1413, %v1411
    %v1474 = vpack.c.b16 %v1414, %v1412
    %v1475 = vpack.c.b16 %v1417, %v1415
    %v1476 = vpack.c.b16 %v1418, %v1416
    %v1477 = vpack.c.b16 %v1421, %v1419
    %v1478 = vpack.c.b16 %v1422, %v1420
    %v1479 = vpack.c.b16 %v1425, %v1423
    %v1480 = vpack.c.b16 %v1426, %v1424
    %v1481 = vpack.c.b16 %v1429, %v1427
    %v1482 = vpack.c.b16 %v1430, %v1428
    %v1483 = vpack.c.b16 %v1433, %v1431
    %v1484 = vpack.c.b16 %v1434, %v1432
    %v1485 = vpack.c.b16 %v1437, %v1435
    %v1486 = vpack.c.b16 %v1438, %v1436
    %v1487 = vpack.c.b16 %v1441, %v1439
    %v1488 = vpack.c.b16 %v1442, %v1440
    %v1489 = vpack.c.b16 %v1445, %v1443
    %v1490 = vpack.c.b16 %v1446, %v1444
    %v1491 = vpack.c.b16 %v1449, %v1447
    %v1492 = vpack.c.b16 %v1450, %v1448
    %v1493 = vpack.c.b16 %v1453, %v1451
    %v1494 = vpack.c.b16 %v1454, %v1452
    %v1495 = vpack.c.b16 %v1457, %v1455
    %v1496 = vpack.c.b16 %v1458, %v1456
    %v1497 = vpack.c.b16 %v1461, %v1459
    %v1498 = vpack.c.b16 %v1462, %v1460
    %v1499 = vpack.c.b16 %v1465, %v1463
    %v1500 = vpack.c.b16 %v1466, %v1464
    %v1501 = vpack.c.b16 %v1469, %v1467
    %v1502 = vpack.c.b16 %v1470, %v1468
    %1535 = vmatpush.bf16.msra.mxu0 %v1485
    %1536 = vmatpush.bf16.msra.mxu0 %v1483
    %1537 = vmatpush.bf16.msra.mxu0 %v1481
    %1538 = vmatpush.bf16.msra.mxu0 %v1479
    %1539 = vmatpush.bf16.msra.mxu0 %v1477
    %1540 = vmatpush.bf16.msra.mxu0 %v1475
    %1541 = vmatpush.bf16.msra.mxu0 %v1473
    %1542 = vmatpush.bf16.msra.mxu0 %v1471
    %1543 = vmatmul.bf16.gmra.mxu0 %v1336
    %v1544 = vpop.f32.mrf.mxu0
    %v1545 = vadd.f32 %v1371, %v1544
    %v1546 = vpop.f32.mrf.mxu0
    %1547 = vdwg.mxu0
    %1548 = vmatpush.bf16.msra.mxu0 %v1501
    %1549 = vmatpush.bf16.msra.mxu0 %v1499
    %1550 = vmatpush.bf16.msra.mxu0 %v1497
    %1551 = vmatpush.bf16.msra.mxu0 %v1495
    %1552 = vmatpush.bf16.msra.mxu0 %v1493
    %1553 = vmatpush.bf16.msra.mxu0 %v1491
    %1554 = vmatpush.bf16.msra.mxu0 %v1489
    %1555 = vmatpush.bf16.msra.mxu0 %v1487
    %1556 = vmatmul.bf16.gmra.mxu0 %v1337
    %v1557 = vpop.f32.mrf.mxu0
    %v1558 = vadd.f32 %v1545, %v1557
    %v1559 = vpop.f32.mrf.mxu0
    %1560 = vdwg.mxu0
    %1561 = vmatpush.bf16.msra.mxu0 %v1486
    %1562 = vmatpush.bf16.msra.mxu0 %v1484
    %1563 = vmatpush.bf16.msra.mxu0 %v1482
    %1564 = vmatpush.bf16.msra.mxu0 %v1480
    %1565 = vmatpush.bf16.msra.mxu0 %v1478
    %1566 = vmatpush.bf16.msra.mxu0 %v1476
    %1567 = vmatpush.bf16.msra.mxu0 %v1474
    %1568 = vmatpush.bf16.msra.mxu0 %v1472
    %1569 = vmatmul.bf16.gmra.mxu0 %v1336
    %v1570 = vpop.f32.mrf.mxu0
    %v1571 = vadd.f32 %v1372, %v1570
    %v1572 = vpop.f32.mrf.mxu0
    %1573 = vdwg.mxu0
    %1574 = vmatpush.bf16.msra.mxu0 %v1502
    %1575 = vmatpush.bf16.msra.mxu0 %v1500
    %1576 = vmatpush.bf16.msra.mxu0 %v1498
    %1577 = vmatpush.bf16.msra.mxu0 %v1496
    %1578 = vmatpush.bf16.msra.mxu0 %v1494
    %1579 = vmatpush.bf16.msra.mxu0 %v1492
    %1580 = vmatpush.bf16.msra.mxu0 %v1490
    %1581 = vmatpush.bf16.msra.mxu0 %v1488
    %1582 = vmatmul.bf16.gmra.mxu0 %v1337
    %v1583 = vpop.f32.mrf.mxu0
    %v1584 = vadd.f32 %v1571, %v1583
    %v1585 = vpop.f32.mrf.mxu0
    %1586 = vdwg.mxu0
    %v1587 = vmax.f32 %v1558, 0.0
    %v1588 = vmax.f32 %v1584, 0.0
    %v1589 = vld [vmem:[%s10] sm:$0xf]
    %v1590 = vpack.c.bf16 %v1587, %v1587
    %v1591 = vpack.c.bf16 %v1588, %v1588
    %v1592 = vld [vmem:[#allocation6] sm:$0xff]
    %v1593 = vld [vmem:[#allocation6 + $0x8] sm:$0xff]
    %v1594 = vld [vmem:[#allocation6 + $0x10] sm:$0xff]
    %v1595 = vld [vmem:[#allocation6 + $0x18] sm:$0xff]
    %v1596 = vld [vmem:[#allocation6 + $0x20] sm:$0xff]
    %v1597 = vld [vmem:[#allocation6 + $0x28] sm:$0xff]
    %v1598 = vld [vmem:[#allocation6 + $0x30] sm:$0xff]
    %v1599 = vld [vmem:[#allocation6 + $0x38] sm:$0xff]
    %v1600 = vld [vmem:[#allocation6 + $0x40] sm:$0xff]
    %v1601 = vld [vmem:[#allocation6 + $0x48] sm:$0xff]
    %v1602 = vld [vmem:[#allocation6 + $0x50] sm:$0xff]
    %v1603 = vld [vmem:[#allocation6 + $0x58] sm:$0xff]
    %v1604 = vld [vmem:[#allocation6 + $0x60] sm:$0xff]
    %v1605 = vld [vmem:[#allocation6 + $0x68] sm:$0xff]
    %v1606 = vld [vmem:[#allocation6 + $0x70] sm:$0xff]
    %v1607 = vld [vmem:[#allocation6 + $0x78] sm:$0xff]
    %v1608 = vld [vmem:[#allocation6 + $0x80] sm:$0xff]
    %v1609 = vld [vmem:[#allocation6 + $0x88] sm:$0xff]
    %v1610 = vld [vmem:[#allocation6 + $0x90] sm:$0xff]
    %v1611 = vld [vmem:[#allocation6 + $0x98] sm:$0xff]
    %v1612 = vld [vmem:[#allocation6 + $0xa0] sm:$0xff]
    %v1613 = vld [vmem:[#allocation6 + $0xa8] sm:$0xff]
    %v1614 = vld [vmem:[#allocation6 + $0xb0] sm:$0xff]
    %v1615 = vld [vmem:[#allocation6 + $0xb8] sm:$0xff]
    %v1616 = vld [vmem:[#allocation6 + $0xc0] sm:$0xff]
    %v1617 = vld [vmem:[#allocation6 + $0xc8] sm:$0xff]
    %v1618 = vld [vmem:[#allocation6 + $0xd0] sm:$0xff]
    %v1619 = vld [vmem:[#allocation6 + $0xd8] sm:$0xff]
    %v1620 = vld [vmem:[#allocation6 + $0xe0] sm:$0xff]
    %v1621 = vld [vmem:[#allocation6 + $0xe8] sm:$0xff]
    %v1622 = vld [vmem:[#allocation6 + $0xf0] sm:$0xff]
    %v1623 = vld [vmem:[#allocation6 + $0xf8] sm:$0xff]
    %v1624 = vld [vmem:[#allocation6 + $0x100] sm:$0xff]
    %v1625 = vld [vmem:[#allocation6 + $0x108] sm:$0xff]
    %v1626 = vld [vmem:[#allocation6 + $0x110] sm:$0xff]
    %v1627 = vld [vmem:[#allocation6 + $0x118] sm:$0xff]
    %v1628 = vld [vmem:[#allocation6 + $0x120] sm:$0xff]
    %v1629 = vld [vmem:[#allocation6 + $0x128] sm:$0xff]
    %v1630 = vld [vmem:[#allocation6 + $0x130] sm:$0xff]
    %v1631 = vld [vmem:[#allocation6 + $0x138] sm:$0xff]
    %v1632 = vld [vmem:[#allocation6 + $0x140] sm:$0xff]
    %v1633 = vld [vmem:[#allocation6 + $0x148] sm:$0xff]
    %v1634 = vld [vmem:[#allocation6 + $0x150] sm:$0xff]
    %v1635 = vld [vmem:[#allocation6 + $0x158] sm:$0xff]
    %v1636 = vld [vmem:[#allocation6 + $0x160] sm:$0xff]
    %v1637 = vld [vmem:[#allocation6 + $0x168] sm:$0xff]
    %v1638 = vld [vmem:[#allocation6 + $0x170] sm:$0xff]
    %v1639 = vld [vmem:[#allocation6 + $0x178] sm:$0xff]
    %v1640 = vld [vmem:[#allocation6 + $0x180] sm:$0xff]
    %v1641 = vld [vmem:[#allocation6 + $0x188] sm:$0xff]
    %v1642 = vld [vmem:[#allocation6 + $0x190] sm:$0xff]
    %v1643 = vld [vmem:[#allocation6 + $0x198] sm:$0xff]
    %v1644 = vld [vmem:[#allocation6 + $0x1a0] sm:$0xff]
    %v1645 = vld [vmem:[#allocation6 + $0x1a8] sm:$0xff]
    %v1646 = vld [vmem:[#allocation6 + $0x1b0] sm:$0xff]
    %v1647 = vld [vmem:[#allocation6 + $0x1b8] sm:$0xff]
    %v1648 = vld [vmem:[#allocation6 + $0x1c0] sm:$0xff]
    %v1649 = vld [vmem:[#allocation6 + $0x1c8] sm:$0xff]
    %v1650 = vld [vmem:[#allocation6 + $0x1d0] sm:$0xff]
    %v1651 = vld [vmem:[#allocation6 + $0x1d8] sm:$0xff]
    %v1652 = vld [vmem:[#allocation6 + $0x1e0] sm:$0xff]
    %v1653 = vld [vmem:[#allocation6 + $0x1e8] sm:$0xff]
    %v1654 = vld [vmem:[#allocation6 + $0x1f0] sm:$0xff]
    %v1655 = vld [vmem:[#allocation6 + $0x1f8] sm:$0xff]
    %v1657 = vperm.slane %v1589, 0
    %v1658 = vperm.slane %v1589, 1
    %v1659 = vperm.slane %v1589, 2
    %v1660 = vperm.slane %v1589, 3
    %v1729 = vunpack.c.l.b16 %v1592
    %v1730 = vunpack.c.h.b16 %v1592
    %v1731 = vunpack.c.l.b16 %v1593
    %v1732 = vunpack.c.h.b16 %v1593
    %v1733 = vunpack.c.l.b16 %v1594
    %v1734 = vunpack.c.h.b16 %v1594
    %v1735 = vunpack.c.l.b16 %v1595
    %v1736 = vunpack.c.h.b16 %v1595
    %v1737 = vunpack.c.l.b16 %v1596
    %v1738 = vunpack.c.h.b16 %v1596
    %v1739 = vunpack.c.l.b16 %v1597
    %v1740 = vunpack.c.h.b16 %v1597
    %v1741 = vunpack.c.l.b16 %v1598
    %v1742 = vunpack.c.h.b16 %v1598
    %v1743 = vunpack.c.l.b16 %v1599
    %v1744 = vunpack.c.h.b16 %v1599
    %v1745 = vunpack.c.l.b16 %v1600
    %v1746 = vunpack.c.h.b16 %v1600
    %v1747 = vunpack.c.l.b16 %v1601
    %v1748 = vunpack.c.h.b16 %v1601
    %v1749 = vunpack.c.l.b16 %v1602
    %v1750 = vunpack.c.h.b16 %v1602
    %v1751 = vunpack.c.l.b16 %v1603
    %v1752 = vunpack.c.h.b16 %v1603
    %v1753 = vunpack.c.l.b16 %v1604
    %v1754 = vunpack.c.h.b16 %v1604
    %v1755 = vunpack.c.l.b16 %v1605
    %v1756 = vunpack.c.h.b16 %v1605
    %v1757 = vunpack.c.l.b16 %v1606
    %v1758 = vunpack.c.h.b16 %v1606
    %v1759 = vunpack.c.l.b16 %v1607
    %v1760 = vunpack.c.h.b16 %v1607
    %v1761 = vunpack.c.l.b16 %v1608
    %v1762 = vunpack.c.h.b16 %v1608
    %v1763 = vunpack.c.l.b16 %v1609
    %v1764 = vunpack.c.h.b16 %v1609
    %v1765 = vunpack.c.l.b16 %v1610
    %v1766 = vunpack.c.h.b16 %v1610
    %v1767 = vunpack.c.l.b16 %v1611
    %v1768 = vunpack.c.h.b16 %v1611
    %v1769 = vunpack.c.l.b16 %v1612
    %v1770 = vunpack.c.h.b16 %v1612
    %v1771 = vunpack.c.l.b16 %v1613
    %v1772 = vunpack.c.h.b16 %v1613
    %v1773 = vunpack.c.l.b16 %v1614
    %v1774 = vunpack.c.h.b16 %v1614
    %v1775 = vunpack.c.l.b16 %v1615
    %v1776 = vunpack.c.h.b16 %v1615
    %v1777 = vunpack.c.l.b16 %v1616
    %v1778 = vunpack.c.h.b16 %v1616
    %v1779 = vunpack.c.l.b16 %v1617
    %v1780 = vunpack.c.h.b16 %v1617
    %v1781 = vunpack.c.l.b16 %v1618
    %v1782 = vunpack.c.h.b16 %v1618
    %v1783 = vunpack.c.l.b16 %v1619
    %v1784 = vunpack.c.h.b16 %v1619
    %v1785 = vunpack.c.l.b16 %v1620
    %v1786 = vunpack.c.h.b16 %v1620
    %v1787 = vunpack.c.l.b16 %v1621
    %v1788 = vunpack.c.h.b16 %v1621
    %v1789 = vunpack.c.l.b16 %v1622
    %v1790 = vunpack.c.h.b16 %v1622
    %v1791 = vunpack.c.l.b16 %v1623
    %v1792 = vunpack.c.h.b16 %v1623
    %v1793 = vunpack.c.l.b16 %v1624
    %v1794 = vunpack.c.h.b16 %v1624
    %v1795 = vunpack.c.l.b16 %v1625
    %v1796 = vunpack.c.h.b16 %v1625
    %v1797 = vunpack.c.l.b16 %v1626
    %v1798 = vunpack.c.h.b16 %v1626
    %v1799 = vunpack.c.l.b16 %v1627
    %v1800 = vunpack.c.h.b16 %v1627
    %v1801 = vunpack.c.l.b16 %v1628
    %v1802 = vunpack.c.h.b16 %v1628
    %v1803 = vunpack.c.l.b16 %v1629
    %v1804 = vunpack.c.h.b16 %v1629
    %v1805 = vunpack.c.l.b16 %v1630
    %v1806 = vunpack.c.h.b16 %v1630
    %v1807 = vunpack.c.l.b16 %v1631
    %v1808 = vunpack.c.h.b16 %v1631
    %v1809 = vunpack.c.l.b16 %v1632
    %v1810 = vunpack.c.h.b16 %v1632
    %v1811 = vunpack.c.l.b16 %v1633
    %v1812 = vunpack.c.h.b16 %v1633
    %v1813 = vunpack.c.l.b16 %v1634
    %v1814 = vunpack.c.h.b16 %v1634
    %v1815 = vunpack.c.l.b16 %v1635
    %v1816 = vunpack.c.h.b16 %v1635
    %v1817 = vunpack.c.l.b16 %v1636
    %v1818 = vunpack.c.h.b16 %v1636
    %v1819 = vunpack.c.l.b16 %v1637
    %v1820 = vunpack.c.h.b16 %v1637
    %v1821 = vunpack.c.l.b16 %v1638
    %v1822 = vunpack.c.h.b16 %v1638
    %v1823 = vunpack.c.l.b16 %v1639
    %v1824 = vunpack.c.h.b16 %v1639
    %v1825 = vunpack.c.l.b16 %v1640
    %v1826 = vunpack.c.h.b16 %v1640
    %v1827 = vunpack.c.l.b16 %v1641
    %v1828 = vunpack.c.h.b16 %v1641
    %v1829 = vunpack.c.l.b16 %v1642
    %v1830 = vunpack.c.h.b16 %v1642
    %v1831 = vunpack.c.l.b16 %v1643
    %v1832 = vunpack.c.h.b16 %v1643
    %v1833 = vunpack.c.l.b16 %v1644
    %v1834 = vunpack.c.h.b16 %v1644
    %v1835 = vunpack.c.l.b16 %v1645
    %v1836 = vunpack.c.h.b16 %v1645
    %v1837 = vunpack.c.l.b16 %v1646
    %v1838 = vunpack.c.h.b16 %v1646
    %v1839 = vunpack.c.l.b16 %v1647
    %v1840 = vunpack.c.h.b16 %v1647
    %v1841 = vunpack.c.l.b16 %v1648
    %v1842 = vunpack.c.h.b16 %v1648
    %v1843 = vunpack.c.l.b16 %v1649
    %v1844 = vunpack.c.h.b16 %v1649
    %v1845 = vunpack.c.l.b16 %v1650
    %v1846 = vunpack.c.h.b16 %v1650
    %v1847 = vunpack.c.l.b16 %v1651
    %v1848 = vunpack.c.h.b16 %v1651
    %v1849 = vunpack.c.l.b16 %v1652
    %v1850 = vunpack.c.h.b16 %v1652
    %v1851 = vunpack.c.l.b16 %v1653
    %v1852 = vunpack.c.h.b16 %v1653
    %v1853 = vunpack.c.l.b16 %v1654
    %v1854 = vunpack.c.h.b16 %v1654
    %v1855 = vunpack.c.l.b16 %v1655
    %v1856 = vunpack.c.h.b16 %v1655
    %v1857 = vpack.c.b16 %v1733, %v1729
    %v1858 = vpack.c.b16 %v1734, %v1730
    %v1859 = vpack.c.b16 %v1735, %v1731
    %v1860 = vpack.c.b16 %v1736, %v1732
    %v1861 = vpack.c.b16 %v1741, %v1737
    %v1862 = vpack.c.b16 %v1742, %v1738
    %v1863 = vpack.c.b16 %v1743, %v1739
    %v1864 = vpack.c.b16 %v1744, %v1740
    %v1865 = vpack.c.b16 %v1749, %v1745
    %v1866 = vpack.c.b16 %v1750, %v1746
    %v1867 = vpack.c.b16 %v1751, %v1747
    %v1868 = vpack.c.b16 %v1752, %v1748
    %v1869 = vpack.c.b16 %v1757, %v1753
    %v1870 = vpack.c.b16 %v1758, %v1754
    %v1871 = vpack.c.b16 %v1759, %v1755
    %v1872 = vpack.c.b16 %v1760, %v1756
    %v1873 = vpack.c.b16 %v1765, %v1761
    %v1874 = vpack.c.b16 %v1766, %v1762
    %v1875 = vpack.c.b16 %v1767, %v1763
    %v1876 = vpack.c.b16 %v1768, %v1764
    %v1877 = vpack.c.b16 %v1773, %v1769
    %v1878 = vpack.c.b16 %v1774, %v1770
    %v1879 = vpack.c.b16 %v1775, %v1771
    %v1880 = vpack.c.b16 %v1776, %v1772
    %v1881 = vpack.c.b16 %v1781, %v1777
    %v1882 = vpack.c.b16 %v1782, %v1778
    %v1883 = vpack.c.b16 %v1783, %v1779
    %v1884 = vpack.c.b16 %v1784, %v1780
    %v1885 = vpack.c.b16 %v1789, %v1785
    %v1886 = vpack.c.b16 %v1790, %v1786
    %v1887 = vpack.c.b16 %v1791, %v1787
    %v1888 = vpack.c.b16 %v1792, %v1788
    %v1889 = vpack.c.b16 %v1797, %v1793
    %v1890 = vpack.c.b16 %v1798, %v1794
    %v1891 = vpack.c.b16 %v1799, %v1795
    %v1892 = vpack.c.b16 %v1800, %v1796
    %v1893 = vpack.c.b16 %v1805, %v1801
    %v1894 = vpack.c.b16 %v1806, %v1802
    %v1895 = vpack.c.b16 %v1807, %v1803
    %v1896 = vpack.c.b16 %v1808, %v1804
    %v1897 = vpack.c.b16 %v1813, %v1809
    %v1898 = vpack.c.b16 %v1814, %v1810
    %v1899 = vpack.c.b16 %v1815, %v1811
    %v1900 = vpack.c.b16 %v1816, %v1812
    %v1901 = vpack.c.b16 %v1821, %v1817
    %v1902 = vpack.c.b16 %v1822, %v1818
    %v1903 = vpack.c.b16 %v1823, %v1819
    %v1904 = vpack.c.b16 %v1824, %v1820
    %v1905 = vpack.c.b16 %v1829, %v1825
    %v1906 = vpack.c.b16 %v1830, %v1826
    %v1907 = vpack.c.b16 %v1831, %v1827
    %v1908 = vpack.c.b16 %v1832, %v1828
    %v1909 = vpack.c.b16 %v1837, %v1833
    %v1910 = vpack.c.b16 %v1838, %v1834
    %v1911 = vpack.c.b16 %v1839, %v1835
    %v1912 = vpack.c.b16 %v1840, %v1836
    %v1913 = vpack.c.b16 %v1845, %v1841
    %v1914 = vpack.c.b16 %v1846, %v1842
    %v1915 = vpack.c.b16 %v1847, %v1843
    %v1916 = vpack.c.b16 %v1848, %v1844
    %v1917 = vpack.c.b16 %v1853, %v1849
    %v1918 = vpack.c.b16 %v1854, %v1850
    %v1919 = vpack.c.b16 %v1855, %v1851
    %v1920 = vpack.c.b16 %v1856, %v1852
    %1985 = vmatpush.bf16.msra.mxu0 %v1885
    %1986 = vmatpush.bf16.msra.mxu0 %v1881
    %1987 = vmatpush.bf16.msra.mxu0 %v1877
    %1988 = vmatpush.bf16.msra.mxu0 %v1873
    %1989 = vmatpush.bf16.msra.mxu0 %v1869
    %1990 = vmatpush.bf16.msra.mxu0 %v1865
    %1991 = vmatpush.bf16.msra.mxu0 %v1861
    %1992 = vmatpush.bf16.msra.mxu0 %v1857
    %1993 = vmatmul.bf16.gmra.mxu0 %v1590
    %v1994 = vpop.f32.mrf.mxu0
    %v1995 = vadd.f32 %v1657, %v1994
    %v1996 = vpop.f32.mrf.mxu0
    %1997 = vdwg.mxu0
    %1998 = vmatpush.bf16.msra.mxu0 %v1917
    %1999 = vmatpush.bf16.msra.mxu0 %v1913
    %2000 = vmatpush.bf16.msra.mxu0 %v1909
    %2001 = vmatpush.bf16.msra.mxu0 %v1905
    %2002 = vmatpush.bf16.msra.mxu0 %v1901
    %2003 = vmatpush.bf16.msra.mxu0 %v1897
    %2004 = vmatpush.bf16.msra.mxu0 %v1893
    %2005 = vmatpush.bf16.msra.mxu0 %v1889
    %2006 = vmatmul.bf16.gmra.mxu0 %v1591
    %v2007 = vpop.f32.mrf.mxu0
    %v2008 = vadd.f32 %v1995, %v2007
    %v2009 = vpop.f32.mrf.mxu0
    %2010 = vdwg.mxu0
    %2011 = vmatpush.bf16.msra.mxu0 %v1886
    %2012 = vmatpush.bf16.msra.mxu0 %v1882
    %2013 = vmatpush.bf16.msra.mxu0 %v1878
    %2014 = vmatpush.bf16.msra.mxu0 %v1874
    %2015 = vmatpush.bf16.msra.mxu0 %v1870
    %2016 = vmatpush.bf16.msra.mxu0 %v1866
    %2017 = vmatpush.bf16.msra.mxu0 %v1862
    %2018 = vmatpush.bf16.msra.mxu0 %v1858
    %2019 = vmatmul.bf16.gmra.mxu0 %v1590
    %v2020 = vpop.f32.mrf.mxu0
    %v2021 = vadd.f32 %v1658, %v2020
    %v2022 = vpop.f32.mrf.mxu0
    %2023 = vdwg.mxu0
    %2024 = vmatpush.bf16.msra.mxu0 %v1918
    %2025 = vmatpush.bf16.msra.mxu0 %v1914
    %2026 = vmatpush.bf16.msra.mxu0 %v1910
    %2027 = vmatpush.bf16.msra.mxu0 %v1906
    %2028 = vmatpush.bf16.msra.mxu0 %v1902
    %2029 = vmatpush.bf16.msra.mxu0 %v1898
    %2030 = vmatpush.bf16.msra.mxu0 %v1894
    %2031 = vmatpush.bf16.msra.mxu0 %v1890
    %2032 = vmatmul.bf16.gmra.mxu0 %v1591
    %v2033 = vpop.f32.mrf.mxu0
    %v2034 = vadd.f32 %v2021, %v2033
    %v2035 = vpop.f32.mrf.mxu0
    %2036 = vdwg.mxu0
    %2037 = vmatpush.bf16.msra.mxu0 %v1887
    %2038 = vmatpush.bf16.msra.mxu0 %v1883
    %2039 = vmatpush.bf16.msra.mxu0 %v1879
    %2040 = vmatpush.bf16.msra.mxu0 %v1875
    %2041 = vmatpush.bf16.msra.mxu0 %v1871
    %2042 = vmatpush.bf16.msra.mxu0 %v1867
    %2043 = vmatpush.bf16.msra.mxu0 %v1863
    %2044 = vmatpush.bf16.msra.mxu0 %v1859
    %2045 = vmatmul.bf16.gmra.mxu0 %v1590
    %v2046 = vpop.f32.mrf.mxu0
    %v2047 = vadd.f32 %v1659, %v2046
    %v2048 = vpop.f32.mrf.mxu0
    %2049 = vdwg.mxu0
    %2050 = vmatpush.bf16.msra.mxu0 %v1919
    %2051 = vmatpush.bf16.msra.mxu0 %v1915
    %2052 = vmatpush.bf16.msra.mxu0 %v1911
    %2053 = vmatpush.bf16.msra.mxu0 %v1907
    %2054 = vmatpush.bf16.msra.mxu0 %v1903
    %2055 = vmatpush.bf16.msra.mxu0 %v1899
    %2056 = vmatpush.bf16.msra.mxu0 %v1895
    %2057 = vmatpush.bf16.msra.mxu0 %v1891
    %2058 = vmatmul.bf16.gmra.mxu0 %v1591
    %v2059 = vpop.f32.mrf.mxu0
    %v2060 = vadd.f32 %v2047, %v2059
    %v2061 = vpop.f32.mrf.mxu0
    %2062 = vdwg.mxu0
    %2063 = vmatpush.bf16.msra.mxu0 %v1888
    %2064 = vmatpush.bf16.msra.mxu0 %v1884
    %2065 = vmatpush.bf16.msra.mxu0 %v1880
    %2066 = vmatpush.bf16.msra.mxu0 %v1876
    %2067 = vmatpush.bf16.msra.mxu0 %v1872
    %2068 = vmatpush.bf16.msra.mxu0 %v1868
    %2069 = vmatpush.bf16.msra.mxu0 %v1864
    %2070 = vmatpush.bf16.msra.mxu0 %v1860
    %2071 = vmatmul.bf16.gmra.mxu0 %v1590
    %v2072 = vpop.f32.mrf.mxu0
    %v2073 = vadd.f32 %v1660, %v2072
    %v2074 = vpop.f32.mrf.mxu0
    %2075 = vdwg.mxu0
    %2076 = vmatpush.bf16.msra.mxu0 %v1920
    %2077 = vmatpush.bf16.msra.mxu0 %v1916
    %2078 = vmatpush.bf16.msra.mxu0 %v1912
    %2079 = vmatpush.bf16.msra.mxu0 %v1908
    %2080 = vmatpush.bf16.msra.mxu0 %v1904
    %2081 = vmatpush.bf16.msra.mxu0 %v1900
    %2082 = vmatpush.bf16.msra.mxu0 %v1896
    %2083 = vmatpush.bf16.msra.mxu0 %v1892
    %2084 = vmatmul.bf16.gmra.mxu0 %v1591
    %v2085 = vpop.f32.mrf.mxu0
    %v2086 = vadd.f32 %v2073, %v2085
    %v2087 = vpop.f32.mrf.mxu0
    %2088 = vdwg.mxu0
    %v2089 = vmax.f32 %v2008, 0.0
    %v2090 = vmax.f32 %v2034, 0.0
    %v2091 = vmax.f32 %v2060, 0.0
    %v2092 = vmax.f32 %v2086, 0.0
    %v2093 = vld [vmem:[%s12] sm:$0x3]
    %v2094 = vpack.c.bf16 %v2089, %v2089
    %v2095 = vpack.c.bf16 %v2090, %v2090
    %v2096 = vpack.c.bf16 %v2091, %v2091
    %v2097 = vpack.c.bf16 %v2092, %v2092
    %v2098 = vld [vmem:[#allocation7] sm:$0xff]
    %v2099 = vld [vmem:[#allocation7 + $0x8] sm:$0xff]
    %v2100 = vld [vmem:[#allocation7 + $0x10] sm:$0xff]
    %v2101 = vld [vmem:[#allocation7 + $0x18] sm:$0xff]
    %v2102 = vld [vmem:[#allocation7 + $0x20] sm:$0xff]
    %v2103 = vld [vmem:[#allocation7 + $0x28] sm:$0xff]
    %v2104 = vld [vmem:[#allocation7 + $0x30] sm:$0xff]
    %v2105 = vld [vmem:[#allocation7 + $0x38] sm:$0xff]
    %v2106 = vld [vmem:[#allocation7 + $0x40] sm:$0xff]
    %v2107 = vld [vmem:[#allocation7 + $0x48] sm:$0xff]
    %v2108 = vld [vmem:[#allocation7 + $0x50] sm:$0xff]
    %v2109 = vld [vmem:[#allocation7 + $0x58] sm:$0xff]
    %v2110 = vld [vmem:[#allocation7 + $0x60] sm:$0xff]
    %v2111 = vld [vmem:[#allocation7 + $0x68] sm:$0xff]
    %v2112 = vld [vmem:[#allocation7 + $0x70] sm:$0xff]
    %v2113 = vld [vmem:[#allocation7 + $0x78] sm:$0xff]
    %v2114 = vld [vmem:[#allocation7 + $0x80] sm:$0xff]
    %v2115 = vld [vmem:[#allocation7 + $0x88] sm:$0xff]
    %v2116 = vld [vmem:[#allocation7 + $0x90] sm:$0xff]
    %v2117 = vld [vmem:[#allocation7 + $0x98] sm:$0xff]
    %v2118 = vld [vmem:[#allocation7 + $0xa0] sm:$0xff]
    %v2119 = vld [vmem:[#allocation7 + $0xa8] sm:$0xff]
    %v2120 = vld [vmem:[#allocation7 + $0xb0] sm:$0xff]
    %v2121 = vld [vmem:[#allocation7 + $0xb8] sm:$0xff]
    %v2122 = vld [vmem:[#allocation7 + $0xc0] sm:$0xff]
    %v2123 = vld [vmem:[#allocation7 + $0xc8] sm:$0xff]
    %v2124 = vld [vmem:[#allocation7 + $0xd0] sm:$0xff]
    %v2125 = vld [vmem:[#allocation7 + $0xd8] sm:$0xff]
    %v2126 = vld [vmem:[#allocation7 + $0xe0] sm:$0xff]
    %v2127 = vld [vmem:[#allocation7 + $0xe8] sm:$0xff]
    %v2128 = vld [vmem:[#allocation7 + $0xf0] sm:$0xff]
    %v2129 = vld [vmem:[#allocation7 + $0xf8] sm:$0xff]
    %v2130 = vld [vmem:[#allocation7 + $0x100] sm:$0xff]
    %v2131 = vld [vmem:[#allocation7 + $0x108] sm:$0xff]
    %v2132 = vld [vmem:[#allocation7 + $0x110] sm:$0xff]
    %v2133 = vld [vmem:[#allocation7 + $0x118] sm:$0xff]
    %v2134 = vld [vmem:[#allocation7 + $0x120] sm:$0xff]
    %v2135 = vld [vmem:[#allocation7 + $0x128] sm:$0xff]
    %v2136 = vld [vmem:[#allocation7 + $0x130] sm:$0xff]
    %v2137 = vld [vmem:[#allocation7 + $0x138] sm:$0xff]
    %v2138 = vld [vmem:[#allocation7 + $0x140] sm:$0xff]
    %v2139 = vld [vmem:[#allocation7 + $0x148] sm:$0xff]
    %v2140 = vld [vmem:[#allocation7 + $0x150] sm:$0xff]
    %v2141 = vld [vmem:[#allocation7 + $0x158] sm:$0xff]
    %v2142 = vld [vmem:[#allocation7 + $0x160] sm:$0xff]
    %v2143 = vld [vmem:[#allocation7 + $0x168] sm:$0xff]
    %v2144 = vld [vmem:[#allocation7 + $0x170] sm:$0xff]
    %v2145 = vld [vmem:[#allocation7 + $0x178] sm:$0xff]
    %v2146 = vld [vmem:[#allocation7 + $0x180] sm:$0xff]
    %v2147 = vld [vmem:[#allocation7 + $0x188] sm:$0xff]
    %v2148 = vld [vmem:[#allocation7 + $0x190] sm:$0xff]
    %v2149 = vld [vmem:[#allocation7 + $0x198] sm:$0xff]
    %v2150 = vld [vmem:[#allocation7 + $0x1a0] sm:$0xff]
    %v2151 = vld [vmem:[#allocation7 + $0x1a8] sm:$0xff]
    %v2152 = vld [vmem:[#allocation7 + $0x1b0] sm:$0xff]
    %v2153 = vld [vmem:[#allocation7 + $0x1b8] sm:$0xff]
    %v2154 = vld [vmem:[#allocation7 + $0x1c0] sm:$0xff]
    %v2155 = vld [vmem:[#allocation7 + $0x1c8] sm:$0xff]
    %v2156 = vld [vmem:[#allocation7 + $0x1d0] sm:$0xff]
    %v2157 = vld [vmem:[#allocation7 + $0x1d8] sm:$0xff]
    %v2158 = vld [vmem:[#allocation7 + $0x1e0] sm:$0xff]
    %v2159 = vld [vmem:[#allocation7 + $0x1e8] sm:$0xff]
    %v2160 = vld [vmem:[#allocation7 + $0x1f0] sm:$0xff]
    %v2161 = vld [vmem:[#allocation7 + $0x1f8] sm:$0xff]
    %v2163 = vperm.slane %v2093, 0
    %v2164 = vperm.slane %v2093, 1
    %v2231 = vunpack.c.l.b16 %v2098
    %v2232 = vunpack.c.h.b16 %v2098
    %v2233 = vunpack.c.l.b16 %v2099
    %v2234 = vunpack.c.h.b16 %v2099
    %v2235 = vunpack.c.l.b16 %v2100
    %v2236 = vunpack.c.h.b16 %v2100
    %v2237 = vunpack.c.l.b16 %v2101
    %v2238 = vunpack.c.h.b16 %v2101
    %v2239 = vunpack.c.l.b16 %v2102
    %v2240 = vunpack.c.h.b16 %v2102
    %v2241 = vunpack.c.l.b16 %v2103
    %v2242 = vunpack.c.h.b16 %v2103
    %v2243 = vunpack.c.l.b16 %v2104
    %v2244 = vunpack.c.h.b16 %v2104
    %v2245 = vunpack.c.l.b16 %v2105
    %v2246 = vunpack.c.h.b16 %v2105
    %v2247 = vunpack.c.l.b16 %v2106
    %v2248 = vunpack.c.h.b16 %v2106
    %v2249 = vunpack.c.l.b16 %v2107
    %v2250 = vunpack.c.h.b16 %v2107
    %v2251 = vunpack.c.l.b16 %v2108
    %v2252 = vunpack.c.h.b16 %v2108
    %v2253 = vunpack.c.l.b16 %v2109
    %v2254 = vunpack.c.h.b16 %v2109
    %v2255 = vunpack.c.l.b16 %v2110
    %v2256 = vunpack.c.h.b16 %v2110
    %v2257 = vunpack.c.l.b16 %v2111
    %v2258 = vunpack.c.h.b16 %v2111
    %v2259 = vunpack.c.l.b16 %v2112
    %v2260 = vunpack.c.h.b16 %v2112
    %v2261 = vunpack.c.l.b16 %v2113
    %v2262 = vunpack.c.h.b16 %v2113
    %v2263 = vunpack.c.l.b16 %v2114
    %v2264 = vunpack.c.h.b16 %v2114
    %v2265 = vunpack.c.l.b16 %v2115
    %v2266 = vunpack.c.h.b16 %v2115
    %v2267 = vunpack.c.l.b16 %v2116
    %v2268 = vunpack.c.h.b16 %v2116
    %v2269 = vunpack.c.l.b16 %v2117
    %v2270 = vunpack.c.h.b16 %v2117
    %v2271 = vunpack.c.l.b16 %v2118
    %v2272 = vunpack.c.h.b16 %v2118
    %v2273 = vunpack.c.l.b16 %v2119
    %v2274 = vunpack.c.h.b16 %v2119
    %v2275 = vunpack.c.l.b16 %v2120
    %v2276 = vunpack.c.h.b16 %v2120
    %v2277 = vunpack.c.l.b16 %v2121
    %v2278 = vunpack.c.h.b16 %v2121
    %v2279 = vunpack.c.l.b16 %v2122
    %v2280 = vunpack.c.h.b16 %v2122
    %v2281 = vunpack.c.l.b16 %v2123
    %v2282 = vunpack.c.h.b16 %v2123
    %v2283 = vunpack.c.l.b16 %v2124
    %v2284 = vunpack.c.h.b16 %v2124
    %v2285 = vunpack.c.l.b16 %v2125
    %v2286 = vunpack.c.h.b16 %v2125
    %v2287 = vunpack.c.l.b16 %v2126
    %v2288 = vunpack.c.h.b16 %v2126
    %v2289 = vunpack.c.l.b16 %v2127
    %v2290 = vunpack.c.h.b16 %v2127
    %v2291 = vunpack.c.l.b16 %v2128
    %v2292 = vunpack.c.h.b16 %v2128
    %v2293 = vunpack.c.l.b16 %v2129
    %v2294 = vunpack.c.h.b16 %v2129
    %v2295 = vunpack.c.l.b16 %v2130
    %v2296 = vunpack.c.h.b16 %v2130
    %v2297 = vunpack.c.l.b16 %v2131
    %v2298 = vunpack.c.h.b16 %v2131
    %v2299 = vunpack.c.l.b16 %v2132
    %v2300 = vunpack.c.h.b16 %v2132
    %v2301 = vunpack.c.l.b16 %v2133
    %v2302 = vunpack.c.h.b16 %v2133
    %v2303 = vunpack.c.l.b16 %v2134
    %v2304 = vunpack.c.h.b16 %v2134
    %v2305 = vunpack.c.l.b16 %v2135
    %v2306 = vunpack.c.h.b16 %v2135
    %v2307 = vunpack.c.l.b16 %v2136
    %v2308 = vunpack.c.h.b16 %v2136
    %v2309 = vunpack.c.l.b16 %v2137
    %v2310 = vunpack.c.h.b16 %v2137
    %v2311 = vunpack.c.l.b16 %v2138
    %v2312 = vunpack.c.h.b16 %v2138
    %v2313 = vunpack.c.l.b16 %v2139
    %v2314 = vunpack.c.h.b16 %v2139
    %v2315 = vunpack.c.l.b16 %v2140
    %v2316 = vunpack.c.h.b16 %v2140
    %v2317 = vunpack.c.l.b16 %v2141
    %v2318 = vunpack.c.h.b16 %v2141
    %v2319 = vunpack.c.l.b16 %v2142
    %v2320 = vunpack.c.h.b16 %v2142
    %v2321 = vunpack.c.l.b16 %v2143
    %v2322 = vunpack.c.h.b16 %v2143
    %v2323 = vunpack.c.l.b16 %v2144
    %v2324 = vunpack.c.h.b16 %v2144
    %v2325 = vunpack.c.l.b16 %v2145
    %v2326 = vunpack.c.h.b16 %v2145
    %v2327 = vunpack.c.l.b16 %v2146
    %v2328 = vunpack.c.h.b16 %v2146
    %v2329 = vunpack.c.l.b16 %v2147
    %v2330 = vunpack.c.h.b16 %v2147
    %v2331 = vunpack.c.l.b16 %v2148
    %v2332 = vunpack.c.h.b16 %v2148
    %v2333 = vunpack.c.l.b16 %v2149
    %v2334 = vunpack.c.h.b16 %v2149
    %v2335 = vunpack.c.l.b16 %v2150
    %v2336 = vunpack.c.h.b16 %v2150
    %v2337 = vunpack.c.l.b16 %v2151
    %v2338 = vunpack.c.h.b16 %v2151
    %v2339 = vunpack.c.l.b16 %v2152
    %v2340 = vunpack.c.h.b16 %v2152
    %v2341 = vunpack.c.l.b16 %v2153
    %v2342 = vunpack.c.h.b16 %v2153
    %v2343 = vunpack.c.l.b16 %v2154
    %v2344 = vunpack.c.h.b16 %v2154
    %v2345 = vunpack.c.l.b16 %v2155
    %v2346 = vunpack.c.h.b16 %v2155
    %v2347 = vunpack.c.l.b16 %v2156
    %v2348 = vunpack.c.h.b16 %v2156
    %v2349 = vunpack.c.l.b16 %v2157
    %v2350 = vunpack.c.h.b16 %v2157
    %v2351 = vunpack.c.l.b16 %v2158
    %v2352 = vunpack.c.h.b16 %v2158
    %v2353 = vunpack.c.l.b16 %v2159
    %v2354 = vunpack.c.h.b16 %v2159
    %v2355 = vunpack.c.l.b16 %v2160
    %v2356 = vunpack.c.h.b16 %v2160
    %v2357 = vunpack.c.l.b16 %v2161
    %v2358 = vunpack.c.h.b16 %v2161
    %v2359 = vpack.c.b16 %v2233, %v2231
    %v2360 = vpack.c.b16 %v2234, %v2232
    %v2361 = vpack.c.b16 %v2237, %v2235
    %v2362 = vpack.c.b16 %v2238, %v2236
    %v2363 = vpack.c.b16 %v2241, %v2239
    %v2364 = vpack.c.b16 %v2242, %v2240
    %v2365 = vpack.c.b16 %v2245, %v2243
    %v2366 = vpack.c.b16 %v2246, %v2244
    %v2367 = vpack.c.b16 %v2249, %v2247
    %v2368 = vpack.c.b16 %v2250, %v2248
    %v2369 = vpack.c.b16 %v2253, %v2251
    %v2370 = vpack.c.b16 %v2254, %v2252
    %v2371 = vpack.c.b16 %v2257, %v2255
    %v2372 = vpack.c.b16 %v2258, %v2256
    %v2373 = vpack.c.b16 %v2261, %v2259
    %v2374 = vpack.c.b16 %v2262, %v2260
    %v2375 = vpack.c.b16 %v2265, %v2263
    %v2376 = vpack.c.b16 %v2266, %v2264
    %v2377 = vpack.c.b16 %v2269, %v2267
    %v2378 = vpack.c.b16 %v2270, %v2268
    %v2379 = vpack.c.b16 %v2273, %v2271
    %v2380 = vpack.c.b16 %v2274, %v2272
    %v2381 = vpack.c.b16 %v2277, %v2275
    %v2382 = vpack.c.b16 %v2278, %v2276
    %v2383 = vpack.c.b16 %v2281, %v2279
    %v2384 = vpack.c.b16 %v2282, %v2280
    %v2385 = vpack.c.b16 %v2285, %v2283
    %v2386 = vpack.c.b16 %v2286, %v2284
    %v2387 = vpack.c.b16 %v2289, %v2287
    %v2388 = vpack.c.b16 %v2290, %v2288
    %v2389 = vpack.c.b16 %v2293, %v2291
    %v2390 = vpack.c.b16 %v2294, %v2292
    %v2391 = vpack.c.b16 %v2297, %v2295
    %v2392 = vpack.c.b16 %v2298, %v2296
    %v2393 = vpack.c.b16 %v2301, %v2299
    %v2394 = vpack.c.b16 %v2302, %v2300
    %v2395 = vpack.c.b16 %v2305, %v2303
    %v2396 = vpack.c.b16 %v2306, %v2304
    %v2397 = vpack.c.b16 %v2309, %v2307
    %v2398 = vpack.c.b16 %v2310, %v2308
    %v2399 = vpack.c.b16 %v2313, %v2311
    %v2400 = vpack.c.b16 %v2314, %v2312
    %v2401 = vpack.c.b16 %v2317, %v2315
    %v2402 = vpack.c.b16 %v2318, %v2316
    %v2403 = vpack.c.b16 %v2321, %v2319
    %v2404 = vpack.c.b16 %v2322, %v2320
    %v2405 = vpack.c.b16 %v2325, %v2323
    %v2406 = vpack.c.b16 %v2326, %v2324
    %v2407 = vpack.c.b16 %v2329, %v2327
    %v2408 = vpack.c.b16 %v2330, %v2328
    %v2409 = vpack.c.b16 %v2333, %v2331
    %v2410 = vpack.c.b16 %v2334, %v2332
    %v2411 = vpack.c.b16 %v2337, %v2335
    %v2412 = vpack.c.b16 %v2338, %v2336
    %v2413 = vpack.c.b16 %v2341, %v2339
    %v2414 = vpack.c.b16 %v2342, %v2340
    %v2415 = vpack.c.b16 %v2345, %v2343
    %v2416 = vpack.c.b16 %v2346, %v2344
    %v2417 = vpack.c.b16 %v2349, %v2347
    %v2418 = vpack.c.b16 %v2350, %v2348
    %v2419 = vpack.c.b16 %v2353, %v2351
    %v2420 = vpack.c.b16 %v2354, %v2352
    %v2421 = vpack.c.b16 %v2357, %v2355
    %v2422 = vpack.c.b16 %v2358, %v2356
    %2487 = vmatpush.bf16.msra.mxu0 %v2373
    %2488 = vmatpush.bf16.msra.mxu0 %v2371
    %2489 = vmatpush.bf16.msra.mxu0 %v2369
    %2490 = vmatpush.bf16.msra.mxu0 %v2367
    %2491 = vmatpush.bf16.msra.mxu0 %v2365
    %2492 = vmatpush.bf16.msra.mxu0 %v2363
    %2493 = vmatpush.bf16.msra.mxu0 %v2361
    %2494 = vmatpush.bf16.msra.mxu0 %v2359
    %2495 = vmatmul.bf16.gmra.mxu0 %v2094
    %v2496 = vpop.f32.mrf.mxu0
    %v2497 = vadd.f32 %v2163, %v2496
    %v2498 = vpop.f32.mrf.mxu0
    %2499 = vdwg.mxu0
    %2500 = vmatpush.bf16.msra.mxu0 %v2389
    %2501 = vmatpush.bf16.msra.mxu0 %v2387
    %2502 = vmatpush.bf16.msra.mxu0 %v2385
    %2503 = vmatpush.bf16.msra.mxu0 %v2383
    %2504 = vmatpush.bf16.msra.mxu0 %v2381
    %2505 = vmatpush.bf16.msra.mxu0 %v2379
    %2506 = vmatpush.bf16.msra.mxu0 %v2377
    %2507 = vmatpush.bf16.msra.mxu0 %v2375
    %2508 = vmatmul.bf16.gmra.mxu0 %v2095
    %v2509 = vpop.f32.mrf.mxu0
    %v2510 = vadd.f32 %v2497, %v2509
    %v2511 = vpop.f32.mrf.mxu0
    %2512 = vdwg.mxu0
    %2513 = vmatpush.bf16.msra.mxu0 %v2405
    %2514 = vmatpush.bf16.msra.mxu0 %v2403
    %2515 = vmatpush.bf16.msra.mxu0 %v2401
    %2516 = vmatpush.bf16.msra.mxu0 %v2399
    %2517 = vmatpush.bf16.msra.mxu0 %v2397
    %2518 = vmatpush.bf16.msra.mxu0 %v2395
    %2519 = vmatpush.bf16.msra.mxu0 %v2393
    %2520 = vmatpush.bf16.msra.mxu0 %v2391
    %2521 = vmatmul.bf16.gmra.mxu0 %v2096
    %v2522 = vpop.f32.mrf.mxu0
    %v2523 = vadd.f32 %v2510, %v2522
    %v2524 = vpop.f32.mrf.mxu0
    %2525 = vdwg.mxu0
    %2526 = vmatpush.bf16.msra.mxu0 %v2421
    %2527 = vmatpush.bf16.msra.mxu0 %v2419
    %2528 = vmatpush.bf16.msra.mxu0 %v2417
    %2529 = vmatpush.bf16.msra.mxu0 %v2415
    %2530 = vmatpush.bf16.msra.mxu0 %v2413
    %2531 = vmatpush.bf16.msra.mxu0 %v2411
    %2532 = vmatpush.bf16.msra.mxu0 %v2409
    %2533 = vmatpush.bf16.msra.mxu0 %v2407
    %2534 = vmatmul.bf16.gmra.mxu0 %v2097
    %v2535 = vpop.f32.mrf.mxu0
    %v2536 = vadd.f32 %v2523, %v2535
    %v2537 = vpop.f32.mrf.mxu0
    %2538 = vdwg.mxu0
    %2539 = vmatpush.bf16.msra.mxu0 %v2374
    %2540 = vmatpush.bf16.msra.mxu0 %v2372
    %2541 = vmatpush.bf16.msra.mxu0 %v2370
    %2542 = vmatpush.bf16.msra.mxu0 %v2368
    %2543 = vmatpush.bf16.msra.mxu0 %v2366
    %2544 = vmatpush.bf16.msra.mxu0 %v2364
    %2545 = vmatpush.bf16.msra.mxu0 %v2362
    %2546 = vmatpush.bf16.msra.mxu0 %v2360
    %2547 = vmatmul.bf16.gmra.mxu0 %v2094
    %v2548 = vpop.f32.mrf.mxu0
    %v2549 = vadd.f32 %v2164, %v2548
    %v2550 = vpop.f32.mrf.mxu0
    %2551 = vdwg.mxu0
    %2552 = vmatpush.bf16.msra.mxu0 %v2390
    %2553 = vmatpush.bf16.msra.mxu0 %v2388
    %2554 = vmatpush.bf16.msra.mxu0 %v2386
    %2555 = vmatpush.bf16.msra.mxu0 %v2384
    %2556 = vmatpush.bf16.msra.mxu0 %v2382
    %2557 = vmatpush.bf16.msra.mxu0 %v2380
    %2558 = vmatpush.bf16.msra.mxu0 %v2378
    %2559 = vmatpush.bf16.msra.mxu0 %v2376
    %2560 = vmatmul.bf16.gmra.mxu0 %v2095
    %v2561 = vpop.f32.mrf.mxu0
    %v2562 = vadd.f32 %v2549, %v2561
    %v2563 = vpop.f32.mrf.mxu0
    %2564 = vdwg.mxu0
    %2565 = vmatpush.bf16.msra.mxu0 %v2406
    %2566 = vmatpush.bf16.msra.mxu0 %v2404
    %2567 = vmatpush.bf16.msra.mxu0 %v2402
    %2568 = vmatpush.bf16.msra.mxu0 %v2400
    %2569 = vmatpush.bf16.msra.mxu0 %v2398
    %2570 = vmatpush.bf16.msra.mxu0 %v2396
    %2571 = vmatpush.bf16.msra.mxu0 %v2394
    %2572 = vmatpush.bf16.msra.mxu0 %v2392
    %2573 = vmatmul.bf16.gmra.mxu0 %v2096
    %v2574 = vpop.f32.mrf.mxu0
    %v2575 = vadd.f32 %v2562, %v2574
    %v2576 = vpop.f32.mrf.mxu0
    %2577 = vdwg.mxu0
    %2578 = vmatpush.bf16.msra.mxu0 %v2422
    %2579 = vmatpush.bf16.msra.mxu0 %v2420
    %2580 = vmatpush.bf16.msra.mxu0 %v2418
    %2581 = vmatpush.bf16.msra.mxu0 %v2416
    %2582 = vmatpush.bf16.msra.mxu0 %v2414
    %2583 = vmatpush.bf16.msra.mxu0 %v2412
    %2584 = vmatpush.bf16.msra.mxu0 %v2410
    %2585 = vmatpush.bf16.msra.mxu0 %v2408
    %2586 = vmatmul.bf16.gmra.mxu0 %v2097
    %v2587 = vpop.f32.mrf.mxu0
    %v2588 = vadd.f32 %v2575, %v2587
    %v2589 = vpop.f32.mrf.mxu0
    %2590 = vdwg.mxu0
    %v2591 = vadd.f32 %v2536, %v1587
    %v2592 = vadd.f32 %v2588, %v1588
    %v2593 = vmax.f32 %v2591, 0.0
    %v2594 = vmax.f32 %v2592, 0.0
    %v2595 = vld [vmem:[%s14] sm:$0x3]
    %v2596 = vpack.c.bf16 %v2593, %v2593
    %v2597 = vpack.c.bf16 %v2594, %v2594
    %v2598 = vld [vmem:[#allocation9] sm:$0xff]
    %v2599 = vld [vmem:[#allocation9 + $0x8] sm:$0xff]
    %v2600 = vld [vmem:[#allocation9 + $0x10] sm:$0xff]
    %v2601 = vld [vmem:[#allocation9 + $0x18] sm:$0xff]
    %v2602 = vld [vmem:[#allocation9 + $0x20] sm:$0xff]
    %v2603 = vld [vmem:[#allocation9 + $0x28] sm:$0xff]
    %v2604 = vld [vmem:[#allocation9 + $0x30] sm:$0xff]
    %v2605 = vld [vmem:[#allocation9 + $0x38] sm:$0xff]
    %v2606 = vld [vmem:[#allocation9 + $0x40] sm:$0xff]
    %v2607 = vld [vmem:[#allocation9 + $0x48] sm:$0xff]
    %v2608 = vld [vmem:[#allocation9 + $0x50] sm:$0xff]
    %v2609 = vld [vmem:[#allocation9 + $0x58] sm:$0xff]
    %v2610 = vld [vmem:[#allocation9 + $0x60] sm:$0xff]
    %v2611 = vld [vmem:[#allocation9 + $0x68] sm:$0xff]
    %v2612 = vld [vmem:[#allocation9 + $0x70] sm:$0xff]
    %v2613 = vld [vmem:[#allocation9 + $0x78] sm:$0xff]
    %v2614 = vld [vmem:[#allocation9 + $0x80] sm:$0xff]
    %v2615 = vld [vmem:[#allocation9 + $0x88] sm:$0xff]
    %v2616 = vld [vmem:[#allocation9 + $0x90] sm:$0xff]
    %v2617 = vld [vmem:[#allocation9 + $0x98] sm:$0xff]
    %v2618 = vld [vmem:[#allocation9 + $0xa0] sm:$0xff]
    %v2619 = vld [vmem:[#allocation9 + $0xa8] sm:$0xff]
    %v2620 = vld [vmem:[#allocation9 + $0xb0] sm:$0xff]
    %v2621 = vld [vmem:[#allocation9 + $0xb8] sm:$0xff]
    %v2622 = vld [vmem:[#allocation9 + $0xc0] sm:$0xff]
    %v2623 = vld [vmem:[#allocation9 + $0xc8] sm:$0xff]
    %v2624 = vld [vmem:[#allocation9 + $0xd0] sm:$0xff]
    %v2625 = vld [vmem:[#allocation9 + $0xd8] sm:$0xff]
    %v2626 = vld [vmem:[#allocation9 + $0xe0] sm:$0xff]
    %v2627 = vld [vmem:[#allocation9 + $0xe8] sm:$0xff]
    %v2628 = vld [vmem:[#allocation9 + $0xf0] sm:$0xff]
    %v2629 = vld [vmem:[#allocation9 + $0xf8] sm:$0xff]
    %v2631 = vperm.slane %v2595, 0
    %v2632 = vperm.slane %v2595, 1
    %v2667 = vunpack.c.l.b16 %v2598
    %v2668 = vunpack.c.h.b16 %v2598
    %v2669 = vunpack.c.l.b16 %v2599
    %v2670 = vunpack.c.h.b16 %v2599
    %v2671 = vunpack.c.l.b16 %v2600
    %v2672 = vunpack.c.h.b16 %v2600
    %v2673 = vunpack.c.l.b16 %v2601
    %v2674 = vunpack.c.h.b16 %v2601
    %v2675 = vunpack.c.l.b16 %v2602
    %v2676 = vunpack.c.h.b16 %v2602
    %v2677 = vunpack.c.l.b16 %v2603
    %v2678 = vunpack.c.h.b16 %v2603
    %v2679 = vunpack.c.l.b16 %v2604
    %v2680 = vunpack.c.h.b16 %v2604
    %v2681 = vunpack.c.l.b16 %v2605
    %v2682 = vunpack.c.h.b16 %v2605
    %v2683 = vunpack.c.l.b16 %v2606
    %v2684 = vunpack.c.h.b16 %v2606
    %v2685 = vunpack.c.l.b16 %v2607
    %v2686 = vunpack.c.h.b16 %v2607
    %v2687 = vunpack.c.l.b16 %v2608
    %v2688 = vunpack.c.h.b16 %v2608
    %v2689 = vunpack.c.l.b16 %v2609
    %v2690 = vunpack.c.h.b16 %v2609
    %v2691 = vunpack.c.l.b16 %v2610
    %v2692 = vunpack.c.h.b16 %v2610
    %v2693 = vunpack.c.l.b16 %v2611
    %v2694 = vunpack.c.h.b16 %v2611
    %v2695 = vunpack.c.l.b16 %v2612
    %v2696 = vunpack.c.h.b16 %v2612
    %v2697 = vunpack.c.l.b16 %v2613
    %v2698 = vunpack.c.h.b16 %v2613
    %v2699 = vunpack.c.l.b16 %v2614
    %v2700 = vunpack.c.h.b16 %v2614
    %v2701 = vunpack.c.l.b16 %v2615
    %v2702 = vunpack.c.h.b16 %v2615
    %v2703 = vunpack.c.l.b16 %v2616
    %v2704 = vunpack.c.h.b16 %v2616
    %v2705 = vunpack.c.l.b16 %v2617
    %v2706 = vunpack.c.h.b16 %v2617
    %v2707 = vunpack.c.l.b16 %v2618
    %v2708 = vunpack.c.h.b16 %v2618
    %v2709 = vunpack.c.l.b16 %v2619
    %v2710 = vunpack.c.h.b16 %v2619
    %v2711 = vunpack.c.l.b16 %v2620
    %v2712 = vunpack.c.h.b16 %v2620
    %v2713 = vunpack.c.l.b16 %v2621
    %v2714 = vunpack.c.h.b16 %v2621
    %v2715 = vunpack.c.l.b16 %v2622
    %v2716 = vunpack.c.h.b16 %v2622
    %v2717 = vunpack.c.l.b16 %v2623
    %v2718 = vunpack.c.h.b16 %v2623
    %v2719 = vunpack.c.l.b16 %v2624
    %v2720 = vunpack.c.h.b16 %v2624
    %v2721 = vunpack.c.l.b16 %v2625
    %v2722 = vunpack.c.h.b16 %v2625
    %v2723 = vunpack.c.l.b16 %v2626
    %v2724 = vunpack.c.h.b16 %v2626
    %v2725 = vunpack.c.l.b16 %v2627
    %v2726 = vunpack.c.h.b16 %v2627
    %v2727 = vunpack.c.l.b16 %v2628
    %v2728 = vunpack.c.h.b16 %v2628
    %v2729 = vunpack.c.l.b16 %v2629
    %v2730 = vunpack.c.h.b16 %v2629
    %v2731 = vpack.c.b16 %v2669, %v2667
    %v2732 = vpack.c.b16 %v2670, %v2668
    %v2733 = vpack.c.b16 %v2673, %v2671
    %v2734 = vpack.c.b16 %v2674, %v2672
    %v2735 = vpack.c.b16 %v2677, %v2675
    %v2736 = vpack.c.b16 %v2678, %v2676
    %v2737 = vpack.c.b16 %v2681, %v2679
    %v2738 = vpack.c.b16 %v2682, %v2680
    %v2739 = vpack.c.b16 %v2685, %v2683
    %v2740 = vpack.c.b16 %v2686, %v2684
    %v2741 = vpack.c.b16 %v2689, %v2687
    %v2742 = vpack.c.b16 %v2690, %v2688
    %v2743 = vpack.c.b16 %v2693, %v2691
    %v2744 = vpack.c.b16 %v2694, %v2692
    %v2745 = vpack.c.b16 %v2697, %v2695
    %v2746 = vpack.c.b16 %v2698, %v2696
    %v2747 = vpack.c.b16 %v2701, %v2699
    %v2748 = vpack.c.b16 %v2702, %v2700
    %v2749 = vpack.c.b16 %v2705, %v2703
    %v2750 = vpack.c.b16 %v2706, %v2704
    %v2751 = vpack.c.b16 %v2709, %v2707
    %v2752 = vpack.c.b16 %v2710, %v2708
    %v2753 = vpack.c.b16 %v2713, %v2711
    %v2754 = vpack.c.b16 %v2714, %v2712
    %v2755 = vpack.c.b16 %v2717, %v2715
    %v2756 = vpack.c.b16 %v2718, %v2716
    %v2757 = vpack.c.b16 %v2721, %v2719
    %v2758 = vpack.c.b16 %v2722, %v2720
    %v2759 = vpack.c.b16 %v2725, %v2723
    %v2760 = vpack.c.b16 %v2726, %v2724
    %v2761 = vpack.c.b16 %v2729, %v2727
    %v2762 = vpack.c.b16 %v2730, %v2728
    %2795 = vmatpush.bf16.msra.mxu0 %v2745
    %2796 = vmatpush.bf16.msra.mxu0 %v2743
    %2797 = vmatpush.bf16.msra.mxu0 %v2741
    %2798 = vmatpush.bf16.msra.mxu0 %v2739
    %2799 = vmatpush.bf16.msra.mxu0 %v2737
    %2800 = vmatpush.bf16.msra.mxu0 %v2735
    %2801 = vmatpush.bf16.msra.mxu0 %v2733
    %2802 = vmatpush.bf16.msra.mxu0 %v2731
    %2803 = vmatmul.bf16.gmra.mxu0 %v2596
    %v2804 = vpop.f32.mrf.mxu0
    %v2805 = vadd.f32 %v2631, %v2804
    %v2806 = vpop.f32.mrf.mxu0
    %2807 = vdwg.mxu0
    %2808 = vmatpush.bf16.msra.mxu0 %v2761
    %2809 = vmatpush.bf16.msra.mxu0 %v2759
    %2810 = vmatpush.bf16.msra.mxu0 %v2757
    %2811 = vmatpush.bf16.msra.mxu0 %v2755
    %2812 = vmatpush.bf16.msra.mxu0 %v2753
    %2813 = vmatpush.bf16.msra.mxu0 %v2751
    %2814 = vmatpush.bf16.msra.mxu0 %v2749
    %2815 = vmatpush.bf16.msra.mxu0 %v2747
    %2816 = vmatmul.bf16.gmra.mxu0 %v2597
    %v2817 = vpop.f32.mrf.mxu0
    %v2818 = vadd.f32 %v2805, %v2817
    %v2819 = vpop.f32.mrf.mxu0
    %2820 = vdwg.mxu0
    %2821 = vmatpush.bf16.msra.mxu0 %v2746
    %2822 = vmatpush.bf16.msra.mxu0 %v2744
    %2823 = vmatpush.bf16.msra.mxu0 %v2742
    %2824 = vmatpush.bf16.msra.mxu0 %v2740
    %2825 = vmatpush.bf16.msra.mxu0 %v2738
    %2826 = vmatpush.bf16.msra.mxu0 %v2736
    %2827 = vmatpush.bf16.msra.mxu0 %v2734
    %2828 = vmatpush.bf16.msra.mxu0 %v2732
    %2829 = vmatmul.bf16.gmra.mxu0 %v2596
    %v2830 = vpop.f32.mrf.mxu0
    %v2831 = vadd.f32 %v2632, %v2830
    %v2832 = vpop.f32.mrf.mxu0
    %2833 = vdwg.mxu0
    %2834 = vmatpush.bf16.msra.mxu0 %v2762
    %2835 = vmatpush.bf16.msra.mxu0 %v2760
    %2836 = vmatpush.bf16.msra.mxu0 %v2758
    %2837 = vmatpush.bf16.msra.mxu0 %v2756
    %2838 = vmatpush.bf16.msra.mxu0 %v2754
    %2839 = vmatpush.bf16.msra.mxu0 %v2752
    %2840 = vmatpush.bf16.msra.mxu0 %v2750
    %2841 = vmatpush.bf16.msra.mxu0 %v2748
    %2842 = vmatmul.bf16.gmra.mxu0 %v2597
    %v2843 = vpop.f32.mrf.mxu0
    %v2844 = vadd.f32 %v2831, %v2843
    %v2845 = vpop.f32.mrf.mxu0
    %2846 = vdwg.mxu0
    %v2847 = vmax.f32 %v2818, 0.0
    %v2848 = vmax.f32 %v2844, 0.0
    %v2849 = vld [vmem:[%s16] sm:$0xf]
    %v2850 = vpack.c.bf16 %v2847, %v2847
    %v2851 = vpack.c.bf16 %v2848, %v2848
    %v2852 = vld [vmem:[#allocation10] sm:$0xff]
    %v2853 = vld [vmem:[#allocation10 + $0x8] sm:$0xff]
    %v2854 = vld [vmem:[#allocation10 + $0x10] sm:$0xff]
    %v2855 = vld [vmem:[#allocation10 + $0x18] sm:$0xff]
    %v2856 = vld [vmem:[#allocation10 + $0x20] sm:$0xff]
    %v2857 = vld [vmem:[#allocation10 + $0x28] sm:$0xff]
    %v2858 = vld [vmem:[#allocation10 + $0x30] sm:$0xff]
    %v2859 = vld [vmem:[#allocation10 + $0x38] sm:$0xff]
    %v2860 = vld [vmem:[#allocation10 + $0x40] sm:$0xff]
    %v2861 = vld [vmem:[#allocation10 + $0x48] sm:$0xff]
    %v2862 = vld [vmem:[#allocation10 + $0x50] sm:$0xff]
    %v2863 = vld [vmem:[#allocation10 + $0x58] sm:$0xff]
    %v2864 = vld [vmem:[#allocation10 + $0x60] sm:$0xff]
    %v2865 = vld [vmem:[#allocation10 + $0x68] sm:$0xff]
    %v2866 = vld [vmem:[#allocation10 + $0x70] sm:$0xff]
    %v2867 = vld [vmem:[#allocation10 + $0x78] sm:$0xff]
    %v2868 = vld [vmem:[#allocation10 + $0x80] sm:$0xff]
    %v2869 = vld [vmem:[#allocation10 + $0x88] sm:$0xff]
    %v2870 = vld [vmem:[#allocation10 + $0x90] sm:$0xff]
    %v2871 = vld [vmem:[#allocation10 + $0x98] sm:$0xff]
    %v2872 = vld [vmem:[#allocation10 + $0xa0] sm:$0xff]
    %v2873 = vld [vmem:[#allocation10 + $0xa8] sm:$0xff]
    %v2874 = vld [vmem:[#allocation10 + $0xb0] sm:$0xff]
    %v2875 = vld [vmem:[#allocation10 + $0xb8] sm:$0xff]
    %v2876 = vld [vmem:[#allocation10 + $0xc0] sm:$0xff]
    %v2877 = vld [vmem:[#allocation10 + $0xc8] sm:$0xff]
    %v2878 = vld [vmem:[#allocation10 + $0xd0] sm:$0xff]
    %v2879 = vld [vmem:[#allocation10 + $0xd8] sm:$0xff]
    %v2880 = vld [vmem:[#allocation10 + $0xe0] sm:$0xff]
    %v2881 = vld [vmem:[#allocation10 + $0xe8] sm:$0xff]
    %v2882 = vld [vmem:[#allocation10 + $0xf0] sm:$0xff]
    %v2883 = vld [vmem:[#allocation10 + $0xf8] sm:$0xff]
    %v2884 = vld [vmem:[#allocation10 + $0x100] sm:$0xff]
    %v2885 = vld [vmem:[#allocation10 + $0x108] sm:$0xff]
    %v2886 = vld [vmem:[#allocation10 + $0x110] sm:$0xff]
    %v2887 = vld [vmem:[#allocation10 + $0x118] sm:$0xff]
    %v2888 = vld [vmem:[#allocation10 + $0x120] sm:$0xff]
    %v2889 = vld [vmem:[#allocation10 + $0x128] sm:$0xff]
    %v2890 = vld [vmem:[#allocation10 + $0x130] sm:$0xff]
    %v2891 = vld [vmem:[#allocation10 + $0x138] sm:$0xff]
    %v2892 = vld [vmem:[#allocation10 + $0x140] sm:$0xff]
    %v2893 = vld [vmem:[#allocation10 + $0x148] sm:$0xff]
    %v2894 = vld [vmem:[#allocation10 + $0x150] sm:$0xff]
    %v2895 = vld [vmem:[#allocation10 + $0x158] sm:$0xff]
    %v2896 = vld [vmem:[#allocation10 + $0x160] sm:$0xff]
    %v2897 = vld [vmem:[#allocation10 + $0x168] sm:$0xff]
    %v2898 = vld [vmem:[#allocation10 + $0x170] sm:$0xff]
    %v2899 = vld [vmem:[#allocation10 + $0x178] sm:$0xff]
    %v2900 = vld [vmem:[#allocation10 + $0x180] sm:$0xff]
    %v2901 = vld [vmem:[#allocation10 + $0x188] sm:$0xff]
    %v2902 = vld [vmem:[#allocation10 + $0x190] sm:$0xff]
    %v2903 = vld [vmem:[#allocation10 + $0x198] sm:$0xff]
    %v2904 = vld [vmem:[#allocation10 + $0x1a0] sm:$0xff]
    %v2905 = vld [vmem:[#allocation10 + $0x1a8] sm:$0xff]
    %v2906 = vld [vmem:[#allocation10 + $0x1b0] sm:$0xff]
    %v2907 = vld [vmem:[#allocation10 + $0x1b8] sm:$0xff]
    %v2908 = vld [vmem:[#allocation10 + $0x1c0] sm:$0xff]
    %v2909 = vld [vmem:[#allocation10 + $0x1c8] sm:$0xff]
    %v2910 = vld [vmem:[#allocation10 + $0x1d0] sm:$0xff]
    %v2911 = vld [vmem:[#allocation10 + $0x1d8] sm:$0xff]
    %v2912 = vld [vmem:[#allocation10 + $0x1e0] sm:$0xff]
    %v2913 = vld [vmem:[#allocation10 + $0x1e8] sm:$0xff]
    %v2914 = vld [vmem:[#allocation10 + $0x1f0] sm:$0xff]
    %v2915 = vld [vmem:[#allocation10 + $0x1f8] sm:$0xff]
    %v2917 = vperm.slane %v2849, 0
    %v2918 = vperm.slane %v2849, 1
    %v2919 = vperm.slane %v2849, 2
    %v2920 = vperm.slane %v2849, 3
    %v2989 = vunpack.c.l.b16 %v2852
    %v2990 = vunpack.c.h.b16 %v2852
    %v2991 = vunpack.c.l.b16 %v2853
    %v2992 = vunpack.c.h.b16 %v2853
    %v2993 = vunpack.c.l.b16 %v2854
    %v2994 = vunpack.c.h.b16 %v2854
    %v2995 = vunpack.c.l.b16 %v2855
    %v2996 = vunpack.c.h.b16 %v2855
    %v2997 = vunpack.c.l.b16 %v2856
    %v2998 = vunpack.c.h.b16 %v2856
    %v2999 = vunpack.c.l.b16 %v2857
    %v3000 = vunpack.c.h.b16 %v2857
    %v3001 = vunpack.c.l.b16 %v2858
    %v3002 = vunpack.c.h.b16 %v2858
    %v3003 = vunpack.c.l.b16 %v2859
    %v3004 = vunpack.c.h.b16 %v2859
    %v3005 = vunpack.c.l.b16 %v2860
    %v3006 = vunpack.c.h.b16 %v2860
    %v3007 = vunpack.c.l.b16 %v2861
    %v3008 = vunpack.c.h.b16 %v2861
    %v3009 = vunpack.c.l.b16 %v2862
    %v3010 = vunpack.c.h.b16 %v2862
    %v3011 = vunpack.c.l.b16 %v2863
    %v3012 = vunpack.c.h.b16 %v2863
    %v3013 = vunpack.c.l.b16 %v2864
    %v3014 = vunpack.c.h.b16 %v2864
    %v3015 = vunpack.c.l.b16 %v2865
    %v3016 = vunpack.c.h.b16 %v2865
    %v3017 = vunpack.c.l.b16 %v2866
    %v3018 = vunpack.c.h.b16 %v2866
    %v3019 = vunpack.c.l.b16 %v2867
    %v3020 = vunpack.c.h.b16 %v2867
    %v3021 = vunpack.c.l.b16 %v2868
    %v3022 = vunpack.c.h.b16 %v2868
    %v3023 = vunpack.c.l.b16 %v2869
    %v3024 = vunpack.c.h.b16 %v2869
    %v3025 = vunpack.c.l.b16 %v2870
    %v3026 = vunpack.c.h.b16 %v2870
    %v3027 = vunpack.c.l.b16 %v2871
    %v3028 = vunpack.c.h.b16 %v2871
    %v3029 = vunpack.c.l.b16 %v2872
    %v3030 = vunpack.c.h.b16 %v2872
    %v3031 = vunpack.c.l.b16 %v2873
    %v3032 = vunpack.c.h.b16 %v2873
    %v3033 = vunpack.c.l.b16 %v2874
    %v3034 = vunpack.c.h.b16 %v2874
    %v3035 = vunpack.c.l.b16 %v2875
    %v3036 = vunpack.c.h.b16 %v2875
    %v3037 = vunpack.c.l.b16 %v2876
    %v3038 = vunpack.c.h.b16 %v2876
    %v3039 = vunpack.c.l.b16 %v2877
    %v3040 = vunpack.c.h.b16 %v2877
    %v3041 = vunpack.c.l.b16 %v2878
    %v3042 = vunpack.c.h.b16 %v2878
    %v3043 = vunpack.c.l.b16 %v2879
    %v3044 = vunpack.c.h.b16 %v2879
    %v3045 = vunpack.c.l.b16 %v2880
    %v3046 = vunpack.c.h.b16 %v2880
    %v3047 = vunpack.c.l.b16 %v2881
    %v3048 = vunpack.c.h.b16 %v2881
    %v3049 = vunpack.c.l.b16 %v2882
    %v3050 = vunpack.c.h.b16 %v2882
    %v3051 = vunpack.c.l.b16 %v2883
    %v3052 = vunpack.c.h.b16 %v2883
    %v3053 = vunpack.c.l.b16 %v2884
    %v3054 = vunpack.c.h.b16 %v2884
    %v3055 = vunpack.c.l.b16 %v2885
    %v3056 = vunpack.c.h.b16 %v2885
    %v3057 = vunpack.c.l.b16 %v2886
    %v3058 = vunpack.c.h.b16 %v2886
    %v3059 = vunpack.c.l.b16 %v2887
    %v3060 = vunpack.c.h.b16 %v2887
    %v3061 = vunpack.c.l.b16 %v2888
    %v3062 = vunpack.c.h.b16 %v2888
    %v3063 = vunpack.c.l.b16 %v2889
    %v3064 = vunpack.c.h.b16 %v2889
    %v3065 = vunpack.c.l.b16 %v2890
    %v3066 = vunpack.c.h.b16 %v2890
    %v3067 = vunpack.c.l.b16 %v2891
    %v3068 = vunpack.c.h.b16 %v2891
    %v3069 = vunpack.c.l.b16 %v2892
    %v3070 = vunpack.c.h.b16 %v2892
    %v3071 = vunpack.c.l.b16 %v2893
    %v3072 = vunpack.c.h.b16 %v2893
    %v3073 = vunpack.c.l.b16 %v2894
    %v3074 = vunpack.c.h.b16 %v2894
    %v3075 = vunpack.c.l.b16 %v2895
    %v3076 = vunpack.c.h.b16 %v2895
    %v3077 = vunpack.c.l.b16 %v2896
    %v3078 = vunpack.c.h.b16 %v2896
    %v3079 = vunpack.c.l.b16 %v2897
    %v3080 = vunpack.c.h.b16 %v2897
    %v3081 = vunpack.c.l.b16 %v2898
    %v3082 = vunpack.c.h.b16 %v2898
    %v3083 = vunpack.c.l.b16 %v2899
    %v3084 = vunpack.c.h.b16 %v2899
    %v3085 = vunpack.c.l.b16 %v2900
    %v3086 = vunpack.c.h.b16 %v2900
    %v3087 = vunpack.c.l.b16 %v2901
    %v3088 = vunpack.c.h.b16 %v2901
    %v3089 = vunpack.c.l.b16 %v2902
    %v3090 = vunpack.c.h.b16 %v2902
    %v3091 = vunpack.c.l.b16 %v2903
    %v3092 = vunpack.c.h.b16 %v2903
    %v3093 = vunpack.c.l.b16 %v2904
    %v3094 = vunpack.c.h.b16 %v2904
    %v3095 = vunpack.c.l.b16 %v2905
    %v3096 = vunpack.c.h.b16 %v2905
    %v3097 = vunpack.c.l.b16 %v2906
    %v3098 = vunpack.c.h.b16 %v2906
    %v3099 = vunpack.c.l.b16 %v2907
    %v3100 = vunpack.c.h.b16 %v2907
    %v3101 = vunpack.c.l.b16 %v2908
    %v3102 = vunpack.c.h.b16 %v2908
    %v3103 = vunpack.c.l.b16 %v2909
    %v3104 = vunpack.c.h.b16 %v2909
    %v3105 = vunpack.c.l.b16 %v2910
    %v3106 = vunpack.c.h.b16 %v2910
    %v3107 = vunpack.c.l.b16 %v2911
    %v3108 = vunpack.c.h.b16 %v2911
    %v3109 = vunpack.c.l.b16 %v2912
    %v3110 = vunpack.c.h.b16 %v2912
    %v3111 = vunpack.c.l.b16 %v2913
    %v3112 = vunpack.c.h.b16 %v2913
    %v3113 = vunpack.c.l.b16 %v2914
    %v3114 = vunpack.c.h.b16 %v2914
    %v3115 = vunpack.c.l.b16 %v2915
    %v3116 = vunpack.c.h.b16 %v2915
    %v3117 = vpack.c.b16 %v2993, %v2989
    %v3118 = vpack.c.b16 %v2994, %v2990
    %v3119 = vpack.c.b16 %v2995, %v2991
    %v3120 = vpack.c.b16 %v2996, %v2992
    %v3121 = vpack.c.b16 %v3001, %v2997
    %v3122 = vpack.c.b16 %v3002, %v2998
    %v3123 = vpack.c.b16 %v3003, %v2999
    %v3124 = vpack.c.b16 %v3004, %v3000
    %v3125 = vpack.c.b16 %v3009, %v3005
    %v3126 = vpack.c.b16 %v3010, %v3006
    %v3127 = vpack.c.b16 %v3011, %v3007
    %v3128 = vpack.c.b16 %v3012, %v3008
    %v3129 = vpack.c.b16 %v3017, %v3013
    %v3130 = vpack.c.b16 %v3018, %v3014
    %v3131 = vpack.c.b16 %v3019, %v3015
    %v3132 = vpack.c.b16 %v3020, %v3016
    %v3133 = vpack.c.b16 %v3025, %v3021
    %v3134 = vpack.c.b16 %v3026, %v3022
    %v3135 = vpack.c.b16 %v3027, %v3023
    %v3136 = vpack.c.b16 %v3028, %v3024
    %v3137 = vpack.c.b16 %v3033, %v3029
    %v3138 = vpack.c.b16 %v3034, %v3030
    %v3139 = vpack.c.b16 %v3035, %v3031
    %v3140 = vpack.c.b16 %v3036, %v3032
    %v3141 = vpack.c.b16 %v3041, %v3037
    %v3142 = vpack.c.b16 %v3042, %v3038
    %v3143 = vpack.c.b16 %v3043, %v3039
    %v3144 = vpack.c.b16 %v3044, %v3040
    %v3145 = vpack.c.b16 %v3049, %v3045
    %v3146 = vpack.c.b16 %v3050, %v3046
    %v3147 = vpack.c.b16 %v3051, %v3047
    %v3148 = vpack.c.b16 %v3052, %v3048
    %v3149 = vpack.c.b16 %v3057, %v3053
    %v3150 = vpack.c.b16 %v3058, %v3054
    %v3151 = vpack.c.b16 %v3059, %v3055
    %v3152 = vpack.c.b16 %v3060, %v3056
    %v3153 = vpack.c.b16 %v3065, %v3061
    %v3154 = vpack.c.b16 %v3066, %v3062
    %v3155 = vpack.c.b16 %v3067, %v3063
    %v3156 = vpack.c.b16 %v3068, %v3064
    %v3157 = vpack.c.b16 %v3073, %v3069
    %v3158 = vpack.c.b16 %v3074, %v3070
    %v3159 = vpack.c.b16 %v3075, %v3071
    %v3160 = vpack.c.b16 %v3076, %v3072
    %v3161 = vpack.c.b16 %v3081, %v3077
    %v3162 = vpack.c.b16 %v3082, %v3078
    %v3163 = vpack.c.b16 %v3083, %v3079
    %v3164 = vpack.c.b16 %v3084, %v3080
    %v3165 = vpack.c.b16 %v3089, %v3085
    %v3166 = vpack.c.b16 %v3090, %v3086
    %v3167 = vpack.c.b16 %v3091, %v3087
    %v3168 = vpack.c.b16 %v3092, %v3088
    %v3169 = vpack.c.b16 %v3097, %v3093
    %v3170 = vpack.c.b16 %v3098, %v3094
    %v3171 = vpack.c.b16 %v3099, %v3095
    %v3172 = vpack.c.b16 %v3100, %v3096
    %v3173 = vpack.c.b16 %v3105, %v3101
    %v3174 = vpack.c.b16 %v3106, %v3102
    %v3175 = vpack.c.b16 %v3107, %v3103
    %v3176 = vpack.c.b16 %v3108, %v3104
    %v3177 = vpack.c.b16 %v3113, %v3109
    %v3178 = vpack.c.b16 %v3114, %v3110
    %v3179 = vpack.c.b16 %v3115, %v3111
    %v3180 = vpack.c.b16 %v3116, %v3112
    %3245 = vmatpush.bf16.msra.mxu0 %v3145
    %3246 = vmatpush.bf16.msra.mxu0 %v3141
    %3247 = vmatpush.bf16.msra.mxu0 %v3137
    %3248 = vmatpush.bf16.msra.mxu0 %v3133
    %3249 = vmatpush.bf16.msra.mxu0 %v3129
    %3250 = vmatpush.bf16.msra.mxu0 %v3125
    %3251 = vmatpush.bf16.msra.mxu0 %v3121
    %3252 = vmatpush.bf16.msra.mxu0 %v3117
    %3253 = vmatmul.bf16.gmra.mxu0 %v2850
    %v3254 = vpop.f32.mrf.mxu0
    %v3255 = vadd.f32 %v2917, %v3254
    %v3256 = vpop.f32.mrf.mxu0
    %3257 = vdwg.mxu0
    %3258 = vmatpush.bf16.msra.mxu0 %v3177
    %3259 = vmatpush.bf16.msra.mxu0 %v3173
    %3260 = vmatpush.bf16.msra.mxu0 %v3169
    %3261 = vmatpush.bf16.msra.mxu0 %v3165
    %3262 = vmatpush.bf16.msra.mxu0 %v3161
    %3263 = vmatpush.bf16.msra.mxu0 %v3157
    %3264 = vmatpush.bf16.msra.mxu0 %v3153
    %3265 = vmatpush.bf16.msra.mxu0 %v3149
    %3266 = vmatmul.bf16.gmra.mxu0 %v2851
    %v3267 = vpop.f32.mrf.mxu0
    %v3268 = vadd.f32 %v3255, %v3267
    %v3269 = vpop.f32.mrf.mxu0
    %3270 = vdwg.mxu0
    %3271 = vmatpush.bf16.msra.mxu0 %v3146
    %3272 = vmatpush.bf16.msra.mxu0 %v3142
    %3273 = vmatpush.bf16.msra.mxu0 %v3138
    %3274 = vmatpush.bf16.msra.mxu0 %v3134
    %3275 = vmatpush.bf16.msra.mxu0 %v3130
    %3276 = vmatpush.bf16.msra.mxu0 %v3126
    %3277 = vmatpush.bf16.msra.mxu0 %v3122
    %3278 = vmatpush.bf16.msra.mxu0 %v3118
    %3279 = vmatmul.bf16.gmra.mxu0 %v2850
    %v3280 = vpop.f32.mrf.mxu0
    %v3281 = vadd.f32 %v2918, %v3280
    %v3282 = vpop.f32.mrf.mxu0
    %3283 = vdwg.mxu0
    %3284 = vmatpush.bf16.msra.mxu0 %v3178
    %3285 = vmatpush.bf16.msra.mxu0 %v3174
    %3286 = vmatpush.bf16.msra.mxu0 %v3170
    %3287 = vmatpush.bf16.msra.mxu0 %v3166
    %3288 = vmatpush.bf16.msra.mxu0 %v3162
    %3289 = vmatpush.bf16.msra.mxu0 %v3158
    %3290 = vmatpush.bf16.msra.mxu0 %v3154
    %3291 = vmatpush.bf16.msra.mxu0 %v3150
    %3292 = vmatmul.bf16.gmra.mxu0 %v2851
    %v3293 = vpop.f32.mrf.mxu0
    %v3294 = vadd.f32 %v3281, %v3293
    %v3295 = vpop.f32.mrf.mxu0
    %3296 = vdwg.mxu0
    %3297 = vmatpush.bf16.msra.mxu0 %v3147
    %3298 = vmatpush.bf16.msra.mxu0 %v3143
    %3299 = vmatpush.bf16.msra.mxu0 %v3139
    %3300 = vmatpush.bf16.msra.mxu0 %v3135
    %3301 = vmatpush.bf16.msra.mxu0 %v3131
    %3302 = vmatpush.bf16.msra.mxu0 %v3127
    %3303 = vmatpush.bf16.msra.mxu0 %v3123
    %3304 = vmatpush.bf16.msra.mxu0 %v3119
    %3305 = vmatmul.bf16.gmra.mxu0 %v2850
    %v3306 = vpop.f32.mrf.mxu0
    %v3307 = vadd.f32 %v2919, %v3306
    %v3308 = vpop.f32.mrf.mxu0
    %3309 = vdwg.mxu0
    %3310 = vmatpush.bf16.msra.mxu0 %v3179
    %3311 = vmatpush.bf16.msra.mxu0 %v3175
    %3312 = vmatpush.bf16.msra.mxu0 %v3171
    %3313 = vmatpush.bf16.msra.mxu0 %v3167
    %3314 = vmatpush.bf16.msra.mxu0 %v3163
    %3315 = vmatpush.bf16.msra.mxu0 %v3159
    %3316 = vmatpush.bf16.msra.mxu0 %v3155
    %3317 = vmatpush.bf16.msra.mxu0 %v3151
    %3318 = vmatmul.bf16.gmra.mxu0 %v2851
    %v3319 = vpop.f32.mrf.mxu0
    %v3320 = vadd.f32 %v3307, %v3319
    %v3321 = vpop.f32.mrf.mxu0
    %3322 = vdwg.mxu0
    %3323 = vmatpush.bf16.msra.mxu0 %v3148
    %3324 = vmatpush.bf16.msra.mxu0 %v3144
    %3325 = vmatpush.bf16.msra.mxu0 %v3140
    %3326 = vmatpush.bf16.msra.mxu0 %v3136
    %3327 = vmatpush.bf16.msra.mxu0 %v3132
    %3328 = vmatpush.bf16.msra.mxu0 %v3128
    %3329 = vmatpush.bf16.msra.mxu0 %v3124
    %3330 = vmatpush.bf16.msra.mxu0 %v3120
    %3331 = vmatmul.bf16.gmra.mxu0 %v2850
    %v3332 = vpop.f32.mrf.mxu0
    %v3333 = vadd.f32 %v2920, %v3332
    %v3334 = vpop.f32.mrf.mxu0
    %3335 = vdwg.mxu0
    %3336 = vmatpush.bf16.msra.mxu0 %v3180
    %3337 = vmatpush.bf16.msra.mxu0 %v3176
    %3338 = vmatpush.bf16.msra.mxu0 %v3172
    %3339 = vmatpush.bf16.msra.mxu0 %v3168
    %3340 = vmatpush.bf16.msra.mxu0 %v3164
    %3341 = vmatpush.bf16.msra.mxu0 %v3160
    %3342 = vmatpush.bf16.msra.mxu0 %v3156
    %3343 = vmatpush.bf16.msra.mxu0 %v3152
    %3344 = vmatmul.bf16.gmra.mxu0 %v2851
    %v3345 = vpop.f32.mrf.mxu0
    %v3346 = vadd.f32 %v3333, %v3345
    %v3347 = vpop.f32.mrf.mxu0
    %3348 = vdwg.mxu0
    %v3349 = vmax.f32 %v3268, 0.0
    %v3350 = vmax.f32 %v3294, 0.0
    %v3351 = vmax.f32 %v3320, 0.0
    %v3352 = vmax.f32 %v3346, 0.0
    %v3353 = vld [vmem:[%s18] sm:$0x3]
    %v3354 = vpack.c.bf16 %v3349, %v3349
    %v3355 = vpack.c.bf16 %v3350, %v3350
    %v3356 = vpack.c.bf16 %v3351, %v3351
    %v3357 = vpack.c.bf16 %v3352, %v3352
    %v3358 = vld [vmem:[#allocation12] sm:$0xff]
    %v3359 = vld [vmem:[#allocation12 + $0x8] sm:$0xff]
    %v3360 = vld [vmem:[#allocation12 + $0x10] sm:$0xff]
    %v3361 = vld [vmem:[#allocation12 + $0x18] sm:$0xff]
    %v3362 = vld [vmem:[#allocation12 + $0x20] sm:$0xff]
    %v3363 = vld [vmem:[#allocation12 + $0x28] sm:$0xff]
    %v3364 = vld [vmem:[#allocation12 + $0x30] sm:$0xff]
    %v3365 = vld [vmem:[#allocation12 + $0x38] sm:$0xff]
    %v3366 = vld [vmem:[#allocation12 + $0x40] sm:$0xff]
    %v3367 = vld [vmem:[#allocation12 + $0x48] sm:$0xff]
    %v3368 = vld [vmem:[#allocation12 + $0x50] sm:$0xff]
    %v3369 = vld [vmem:[#allocation12 + $0x58] sm:$0xff]
    %v3370 = vld [vmem:[#allocation12 + $0x60] sm:$0xff]
    %v3371 = vld [vmem:[#allocation12 + $0x68] sm:$0xff]
    %v3372 = vld [vmem:[#allocation12 + $0x70] sm:$0xff]
    %v3373 = vld [vmem:[#allocation12 + $0x78] sm:$0xff]
    %v3374 = vld [vmem:[#allocation12 + $0x80] sm:$0xff]
    %v3375 = vld [vmem:[#allocation12 + $0x88] sm:$0xff]
    %v3376 = vld [vmem:[#allocation12 + $0x90] sm:$0xff]
    %v3377 = vld [vmem:[#allocation12 + $0x98] sm:$0xff]
    %v3378 = vld [vmem:[#allocation12 + $0xa0] sm:$0xff]
    %v3379 = vld [vmem:[#allocation12 + $0xa8] sm:$0xff]
    %v3380 = vld [vmem:[#allocation12 + $0xb0] sm:$0xff]
    %v3381 = vld [vmem:[#allocation12 + $0xb8] sm:$0xff]
    %v3382 = vld [vmem:[#allocation12 + $0xc0] sm:$0xff]
    %v3383 = vld [vmem:[#allocation12 + $0xc8] sm:$0xff]
    %v3384 = vld [vmem:[#allocation12 + $0xd0] sm:$0xff]
    %v3385 = vld [vmem:[#allocation12 + $0xd8] sm:$0xff]
    %v3386 = vld [vmem:[#allocation12 + $0xe0] sm:$0xff]
    %v3387 = vld [vmem:[#allocation12 + $0xe8] sm:$0xff]
    %v3388 = vld [vmem:[#allocation12 + $0xf0] sm:$0xff]
    %v3389 = vld [vmem:[#allocation12 + $0xf8] sm:$0xff]
    %v3390 = vld [vmem:[#allocation12 + $0x100] sm:$0xff]
    %v3391 = vld [vmem:[#allocation12 + $0x108] sm:$0xff]
    %v3392 = vld [vmem:[#allocation12 + $0x110] sm:$0xff]
    %v3393 = vld [vmem:[#allocation12 + $0x118] sm:$0xff]
    %v3394 = vld [vmem:[#allocation12 + $0x120] sm:$0xff]
    %v3395 = vld [vmem:[#allocation12 + $0x128] sm:$0xff]
    %v3396 = vld [vmem:[#allocation12 + $0x130] sm:$0xff]
    %v3397 = vld [vmem:[#allocation12 + $0x138] sm:$0xff]
    %v3398 = vld [vmem:[#allocation12 + $0x140] sm:$0xff]
    %v3399 = vld [vmem:[#allocation12 + $0x148] sm:$0xff]
    %v3400 = vld [vmem:[#allocation12 + $0x150] sm:$0xff]
    %v3401 = vld [vmem:[#allocation12 + $0x158] sm:$0xff]
    %v3402 = vld [vmem:[#allocation12 + $0x160] sm:$0xff]
    %v3403 = vld [vmem:[#allocation12 + $0x168] sm:$0xff]
    %v3404 = vld [vmem:[#allocation12 + $0x170] sm:$0xff]
    %v3405 = vld [vmem:[#allocation12 + $0x178] sm:$0xff]
    %v3406 = vld [vmem:[#allocation12 + $0x180] sm:$0xff]
    %v3407 = vld [vmem:[#allocation12 + $0x188] sm:$0xff]
    %v3408 = vld [vmem:[#allocation12 + $0x190] sm:$0xff]
    %v3409 = vld [vmem:[#allocation12 + $0x198] sm:$0xff]
    %v3410 = vld [vmem:[#allocation12 + $0x1a0] sm:$0xff]
    %v3411 = vld [vmem:[#allocation12 + $0x1a8] sm:$0xff]
    %v3412 = vld [vmem:[#allocation12 + $0x1b0] sm:$0xff]
    %v3413 = vld [vmem:[#allocation12 + $0x1b8] sm:$0xff]
    %v3414 = vld [vmem:[#allocation12 + $0x1c0] sm:$0xff]
    %v3415 = vld [vmem:[#allocation12 + $0x1c8] sm:$0xff]
    %v3416 = vld [vmem:[#allocation12 + $0x1d0] sm:$0xff]
    %v3417 = vld [vmem:[#allocation12 + $0x1d8] sm:$0xff]
    %v3418 = vld [vmem:[#allocation12 + $0x1e0] sm:$0xff]
    %v3419 = vld [vmem:[#allocation12 + $0x1e8] sm:$0xff]
    %v3420 = vld [vmem:[#allocation12 + $0x1f0] sm:$0xff]
    %v3421 = vld [vmem:[#allocation12 + $0x1f8] sm:$0xff]
    %v3423 = vperm.slane %v3353, 0
    %v3424 = vperm.slane %v3353, 1
    %v3491 = vunpack.c.l.b16 %v3358
    %v3492 = vunpack.c.h.b16 %v3358
    %v3493 = vunpack.c.l.b16 %v3359
    %v3494 = vunpack.c.h.b16 %v3359
    %v3495 = vunpack.c.l.b16 %v3360
    %v3496 = vunpack.c.h.b16 %v3360
    %v3497 = vunpack.c.l.b16 %v3361
    %v3498 = vunpack.c.h.b16 %v3361
    %v3499 = vunpack.c.l.b16 %v3362
    %v3500 = vunpack.c.h.b16 %v3362
    %v3501 = vunpack.c.l.b16 %v3363
    %v3502 = vunpack.c.h.b16 %v3363
    %v3503 = vunpack.c.l.b16 %v3364
    %v3504 = vunpack.c.h.b16 %v3364
    %v3505 = vunpack.c.l.b16 %v3365
    %v3506 = vunpack.c.h.b16 %v3365
    %v3507 = vunpack.c.l.b16 %v3366
    %v3508 = vunpack.c.h.b16 %v3366
    %v3509 = vunpack.c.l.b16 %v3367
    %v3510 = vunpack.c.h.b16 %v3367
    %v3511 = vunpack.c.l.b16 %v3368
    %v3512 = vunpack.c.h.b16 %v3368
    %v3513 = vunpack.c.l.b16 %v3369
    %v3514 = vunpack.c.h.b16 %v3369
    %v3515 = vunpack.c.l.b16 %v3370
    %v3516 = vunpack.c.h.b16 %v3370
    %v3517 = vunpack.c.l.b16 %v3371
    %v3518 = vunpack.c.h.b16 %v3371
    %v3519 = vunpack.c.l.b16 %v3372
    %v3520 = vunpack.c.h.b16 %v3372
    %v3521 = vunpack.c.l.b16 %v3373
    %v3522 = vunpack.c.h.b16 %v3373
    %v3523 = vunpack.c.l.b16 %v3374
    %v3524 = vunpack.c.h.b16 %v3374
    %v3525 = vunpack.c.l.b16 %v3375
    %v3526 = vunpack.c.h.b16 %v3375
    %v3527 = vunpack.c.l.b16 %v3376
    %v3528 = vunpack.c.h.b16 %v3376
    %v3529 = vunpack.c.l.b16 %v3377
    %v3530 = vunpack.c.h.b16 %v3377
    %v3531 = vunpack.c.l.b16 %v3378
    %v3532 = vunpack.c.h.b16 %v3378
    %v3533 = vunpack.c.l.b16 %v3379
    %v3534 = vunpack.c.h.b16 %v3379
    %v3535 = vunpack.c.l.b16 %v3380
    %v3536 = vunpack.c.h.b16 %v3380
    %v3537 = vunpack.c.l.b16 %v3381
    %v3538 = vunpack.c.h.b16 %v3381
    %v3539 = vunpack.c.l.b16 %v3382
    %v3540 = vunpack.c.h.b16 %v3382
    %v3541 = vunpack.c.l.b16 %v3383
    %v3542 = vunpack.c.h.b16 %v3383
    %v3543 = vunpack.c.l.b16 %v3384
    %v3544 = vunpack.c.h.b16 %v3384
    %v3545 = vunpack.c.l.b16 %v3385
    %v3546 = vunpack.c.h.b16 %v3385
    %v3547 = vunpack.c.l.b16 %v3386
    %v3548 = vunpack.c.h.b16 %v3386
    %v3549 = vunpack.c.l.b16 %v3387
    %v3550 = vunpack.c.h.b16 %v3387
    %v3551 = vunpack.c.l.b16 %v3388
    %v3552 = vunpack.c.h.b16 %v3388
    %v3553 = vunpack.c.l.b16 %v3389
    %v3554 = vunpack.c.h.b16 %v3389
    %v3555 = vunpack.c.l.b16 %v3390
    %v3556 = vunpack.c.h.b16 %v3390
    %v3557 = vunpack.c.l.b16 %v3391
    %v3558 = vunpack.c.h.b16 %v3391
    %v3559 = vunpack.c.l.b16 %v3392
    %v3560 = vunpack.c.h.b16 %v3392
    %v3561 = vunpack.c.l.b16 %v3393
    %v3562 = vunpack.c.h.b16 %v3393
    %v3563 = vunpack.c.l.b16 %v3394
    %v3564 = vunpack.c.h.b16 %v3394
    %v3565 = vunpack.c.l.b16 %v3395
    %v3566 = vunpack.c.h.b16 %v3395
    %v3567 = vunpack.c.l.b16 %v3396
    %v3568 = vunpack.c.h.b16 %v3396
    %v3569 = vunpack.c.l.b16 %v3397
    %v3570 = vunpack.c.h.b16 %v3397
    %v3571 = vunpack.c.l.b16 %v3398
    %v3572 = vunpack.c.h.b16 %v3398
    %v3573 = vunpack.c.l.b16 %v3399
    %v3574 = vunpack.c.h.b16 %v3399
    %v3575 = vunpack.c.l.b16 %v3400
    %v3576 = vunpack.c.h.b16 %v3400
    %v3577 = vunpack.c.l.b16 %v3401
    %v3578 = vunpack.c.h.b16 %v3401
    %v3579 = vunpack.c.l.b16 %v3402
    %v3580 = vunpack.c.h.b16 %v3402
    %v3581 = vunpack.c.l.b16 %v3403
    %v3582 = vunpack.c.h.b16 %v3403
    %v3583 = vunpack.c.l.b16 %v3404
    %v3584 = vunpack.c.h.b16 %v3404
    %v3585 = vunpack.c.l.b16 %v3405
    %v3586 = vunpack.c.h.b16 %v3405
    %v3587 = vunpack.c.l.b16 %v3406
    %v3588 = vunpack.c.h.b16 %v3406
    %v3589 = vunpack.c.l.b16 %v3407
    %v3590 = vunpack.c.h.b16 %v3407
    %v3591 = vunpack.c.l.b16 %v3408
    %v3592 = vunpack.c.h.b16 %v3408
    %v3593 = vunpack.c.l.b16 %v3409
    %v3594 = vunpack.c.h.b16 %v3409
    %v3595 = vunpack.c.l.b16 %v3410
    %v3596 = vunpack.c.h.b16 %v3410
    %v3597 = vunpack.c.l.b16 %v3411
    %v3598 = vunpack.c.h.b16 %v3411
    %v3599 = vunpack.c.l.b16 %v3412
    %v3600 = vunpack.c.h.b16 %v3412
    %v3601 = vunpack.c.l.b16 %v3413
    %v3602 = vunpack.c.h.b16 %v3413
    %v3603 = vunpack.c.l.b16 %v3414
    %v3604 = vunpack.c.h.b16 %v3414
    %v3605 = vunpack.c.l.b16 %v3415
    %v3606 = vunpack.c.h.b16 %v3415
    %v3607 = vunpack.c.l.b16 %v3416
    %v3608 = vunpack.c.h.b16 %v3416
    %v3609 = vunpack.c.l.b16 %v3417
    %v3610 = vunpack.c.h.b16 %v3417
    %v3611 = vunpack.c.l.b16 %v3418
    %v3612 = vunpack.c.h.b16 %v3418
    %v3613 = vunpack.c.l.b16 %v3419
    %v3614 = vunpack.c.h.b16 %v3419
    %v3615 = vunpack.c.l.b16 %v3420
    %v3616 = vunpack.c.h.b16 %v3420
    %v3617 = vunpack.c.l.b16 %v3421
    %v3618 = vunpack.c.h.b16 %v3421
    %v3619 = vpack.c.b16 %v3493, %v3491
    %v3620 = vpack.c.b16 %v3494, %v3492
    %v3621 = vpack.c.b16 %v3497, %v3495
    %v3622 = vpack.c.b16 %v3498, %v3496
    %v3623 = vpack.c.b16 %v3501, %v3499
    %v3624 = vpack.c.b16 %v3502, %v3500
    %v3625 = vpack.c.b16 %v3505, %v3503
    %v3626 = vpack.c.b16 %v3506, %v3504
    %v3627 = vpack.c.b16 %v3509, %v3507
    %v3628 = vpack.c.b16 %v3510, %v3508
    %v3629 = vpack.c.b16 %v3513, %v3511
    %v3630 = vpack.c.b16 %v3514, %v3512
    %v3631 = vpack.c.b16 %v3517, %v3515
    %v3632 = vpack.c.b16 %v3518, %v3516
    %v3633 = vpack.c.b16 %v3521, %v3519
    %v3634 = vpack.c.b16 %v3522, %v3520
    %v3635 = vpack.c.b16 %v3525, %v3523
    %v3636 = vpack.c.b16 %v3526, %v3524
    %v3637 = vpack.c.b16 %v3529, %v3527
    %v3638 = vpack.c.b16 %v3530, %v3528
    %v3639 = vpack.c.b16 %v3533, %v3531
    %v3640 = vpack.c.b16 %v3534, %v3532
    %v3641 = vpack.c.b16 %v3537, %v3535
    %v3642 = vpack.c.b16 %v3538, %v3536
    %v3643 = vpack.c.b16 %v3541, %v3539
    %v3644 = vpack.c.b16 %v3542, %v3540
    %v3645 = vpack.c.b16 %v3545, %v3543
    %v3646 = vpack.c.b16 %v3546, %v3544
    %v3647 = vpack.c.b16 %v3549, %v3547
    %v3648 = vpack.c.b16 %v3550, %v3548
    %v3649 = vpack.c.b16 %v3553, %v3551
    %v3650 = vpack.c.b16 %v3554, %v3552
    %v3651 = vpack.c.b16 %v3557, %v3555
    %v3652 = vpack.c.b16 %v3558, %v3556
    %v3653 = vpack.c.b16 %v3561, %v3559
    %v3654 = vpack.c.b16 %v3562, %v3560
    %v3655 = vpack.c.b16 %v3565, %v3563
    %v3656 = vpack.c.b16 %v3566, %v3564
    %v3657 = vpack.c.b16 %v3569, %v3567
    %v3658 = vpack.c.b16 %v3570, %v3568
    %v3659 = vpack.c.b16 %v3573, %v3571
    %v3660 = vpack.c.b16 %v3574, %v3572
    %v3661 = vpack.c.b16 %v3577, %v3575
    %v3662 = vpack.c.b16 %v3578, %v3576
    %v3663 = vpack.c.b16 %v3581, %v3579
    %v3664 = vpack.c.b16 %v3582, %v3580
    %v3665 = vpack.c.b16 %v3585, %v3583
    %v3666 = vpack.c.b16 %v3586, %v3584
    %v3667 = vpack.c.b16 %v3589, %v3587
    %v3668 = vpack.c.b16 %v3590, %v3588
    %v3669 = vpack.c.b16 %v3593, %v3591
    %v3670 = vpack.c.b16 %v3594, %v3592
    %v3671 = vpack.c.b16 %v3597, %v3595
    %v3672 = vpack.c.b16 %v3598, %v3596
    %v3673 = vpack.c.b16 %v3601, %v3599
    %v3674 = vpack.c.b16 %v3602, %v3600
    %v3675 = vpack.c.b16 %v3605, %v3603
    %v3676 = vpack.c.b16 %v3606, %v3604
    %v3677 = vpack.c.b16 %v3609, %v3607
    %v3678 = vpack.c.b16 %v3610, %v3608
    %v3679 = vpack.c.b16 %v3613, %v3611
    %v3680 = vpack.c.b16 %v3614, %v3612
    %v3681 = vpack.c.b16 %v3617, %v3615
    %v3682 = vpack.c.b16 %v3618, %v3616
    %3747 = vmatpush.bf16.msra.mxu0 %v3633
    %3748 = vmatpush.bf16.msra.mxu0 %v3631
    %3749 = vmatpush.bf16.msra.mxu0 %v3629
    %3750 = vmatpush.bf16.msra.mxu0 %v3627
    %3751 = vmatpush.bf16.msra.mxu0 %v3625
    %3752 = vmatpush.bf16.msra.mxu0 %v3623
    %3753 = vmatpush.bf16.msra.mxu0 %v3621
    %3754 = vmatpush.bf16.msra.mxu0 %v3619
    %3755 = vmatmul.bf16.gmra.mxu0 %v3354
    %v3756 = vpop.f32.mrf.mxu0
    %v3757 = vadd.f32 %v3423, %v3756
    %v3758 = vpop.f32.mrf.mxu0
    %3759 = vdwg.mxu0
    %3760 = vmatpush.bf16.msra.mxu0 %v3649
    %3761 = vmatpush.bf16.msra.mxu0 %v3647
    %3762 = vmatpush.bf16.msra.mxu0 %v3645
    %3763 = vmatpush.bf16.msra.mxu0 %v3643
    %3764 = vmatpush.bf16.msra.mxu0 %v3641
    %3765 = vmatpush.bf16.msra.mxu0 %v3639
    %3766 = vmatpush.bf16.msra.mxu0 %v3637
    %3767 = vmatpush.bf16.msra.mxu0 %v3635
    %3768 = vmatmul.bf16.gmra.mxu0 %v3355
    %v3769 = vpop.f32.mrf.mxu0
    %v3770 = vadd.f32 %v3757, %v3769
    %v3771 = vpop.f32.mrf.mxu0
    %3772 = vdwg.mxu0
    %3773 = vmatpush.bf16.msra.mxu0 %v3665
    %3774 = vmatpush.bf16.msra.mxu0 %v3663
    %3775 = vmatpush.bf16.msra.mxu0 %v3661
    %3776 = vmatpush.bf16.msra.mxu0 %v3659
    %3777 = vmatpush.bf16.msra.mxu0 %v3657
    %3778 = vmatpush.bf16.msra.mxu0 %v3655
    %3779 = vmatpush.bf16.msra.mxu0 %v3653
    %3780 = vmatpush.bf16.msra.mxu0 %v3651
    %3781 = vmatmul.bf16.gmra.mxu0 %v3356
    %v3782 = vpop.f32.mrf.mxu0
    %v3783 = vadd.f32 %v3770, %v3782
    %v3784 = vpop.f32.mrf.mxu0
    %3785 = vdwg.mxu0
    %3786 = vmatpush.bf16.msra.mxu0 %v3681
    %3787 = vmatpush.bf16.msra.mxu0 %v3679
    %3788 = vmatpush.bf16.msra.mxu0 %v3677
    %3789 = vmatpush.bf16.msra.mxu0 %v3675
    %3790 = vmatpush.bf16.msra.mxu0 %v3673
    %3791 = vmatpush.bf16.msra.mxu0 %v3671
    %3792 = vmatpush.bf16.msra.mxu0 %v3669
    %3793 = vmatpush.bf16.msra.mxu0 %v3667
    %3794 = vmatmul.bf16.gmra.mxu0 %v3357
    %v3795 = vpop.f32.mrf.mxu0
    %v3796 = vadd.f32 %v3783, %v3795
    %v3797 = vpop.f32.mrf.mxu0
    %3798 = vdwg.mxu0
    %3799 = vmatpush.bf16.msra.mxu0 %v3634
    %3800 = vmatpush.bf16.msra.mxu0 %v3632
    %3801 = vmatpush.bf16.msra.mxu0 %v3630
    %3802 = vmatpush.bf16.msra.mxu0 %v3628
    %3803 = vmatpush.bf16.msra.mxu0 %v3626
    %3804 = vmatpush.bf16.msra.mxu0 %v3624
    %3805 = vmatpush.bf16.msra.mxu0 %v3622
    %3806 = vmatpush.bf16.msra.mxu0 %v3620
    %3807 = vmatmul.bf16.gmra.mxu0 %v3354
    %v3808 = vpop.f32.mrf.mxu0
    %v3809 = vadd.f32 %v3424, %v3808
    %v3810 = vpop.f32.mrf.mxu0
    %3811 = vdwg.mxu0
    %3812 = vmatpush.bf16.msra.mxu0 %v3650
    %3813 = vmatpush.bf16.msra.mxu0 %v3648
    %3814 = vmatpush.bf16.msra.mxu0 %v3646
    %3815 = vmatpush.bf16.msra.mxu0 %v3644
    %3816 = vmatpush.bf16.msra.mxu0 %v3642
    %3817 = vmatpush.bf16.msra.mxu0 %v3640
    %3818 = vmatpush.bf16.msra.mxu0 %v3638
    %3819 = vmatpush.bf16.msra.mxu0 %v3636
    %3820 = vmatmul.bf16.gmra.mxu0 %v3355
    %v3821 = vpop.f32.mrf.mxu0
    %v3822 = vadd.f32 %v3809, %v3821
    %v3823 = vpop.f32.mrf.mxu0
    %3824 = vdwg.mxu0
    %3825 = vmatpush.bf16.msra.mxu0 %v3666
    %3826 = vmatpush.bf16.msra.mxu0 %v3664
    %3827 = vmatpush.bf16.msra.mxu0 %v3662
    %3828 = vmatpush.bf16.msra.mxu0 %v3660
    %3829 = vmatpush.bf16.msra.mxu0 %v3658
    %3830 = vmatpush.bf16.msra.mxu0 %v3656
    %3831 = vmatpush.bf16.msra.mxu0 %v3654
    %3832 = vmatpush.bf16.msra.mxu0 %v3652
    %3833 = vmatmul.bf16.gmra.mxu0 %v3356
    %v3834 = vpop.f32.mrf.mxu0
    %v3835 = vadd.f32 %v3822, %v3834
    %v3836 = vpop.f32.mrf.mxu0
    %3837 = vdwg.mxu0
    %3838 = vmatpush.bf16.msra.mxu0 %v3682
    %3839 = vmatpush.bf16.msra.mxu0 %v3680
    %3840 = vmatpush.bf16.msra.mxu0 %v3678
    %3841 = vmatpush.bf16.msra.mxu0 %v3676
    %3842 = vmatpush.bf16.msra.mxu0 %v3674
    %3843 = vmatpush.bf16.msra.mxu0 %v3672
    %3844 = vmatpush.bf16.msra.mxu0 %v3670
    %3845 = vmatpush.bf16.msra.mxu0 %v3668
    %3846 = vmatmul.bf16.gmra.mxu0 %v3357
    %v3847 = vpop.f32.mrf.mxu0
    %v3848 = vadd.f32 %v3835, %v3847
    %v3849 = vpop.f32.mrf.mxu0
    %3850 = vdwg.mxu0
    %v3851 = vadd.f32 %v3796, %v2847
    %v3852 = vadd.f32 %v3848, %v2848
    %v3853 = vmax.f32 %v3851, 0.0
    %v3854 = vmax.f32 %v3852, 0.0
    %v3855 = vld [vmem:[%s20] sm:$0x3]
    %v3856 = vpack.c.bf16 %v3853, %v3853
    %v3857 = vpack.c.bf16 %v3854, %v3854
    %v3858 = vld [vmem:[#allocation13] sm:$0xff]
    %v3859 = vld [vmem:[#allocation13 + $0x8] sm:$0xff]
    %v3860 = vld [vmem:[#allocation13 + $0x10] sm:$0xff]
    %v3861 = vld [vmem:[#allocation13 + $0x18] sm:$0xff]
    %v3862 = vld [vmem:[#allocation13 + $0x20] sm:$0xff]
    %v3863 = vld [vmem:[#allocation13 + $0x28] sm:$0xff]
    %v3864 = vld [vmem:[#allocation13 + $0x30] sm:$0xff]
    %v3865 = vld [vmem:[#allocation13 + $0x38] sm:$0xff]
    %v3866 = vld [vmem:[#allocation13 + $0x40] sm:$0xff]
    %v3867 = vld [vmem:[#allocation13 + $0x48] sm:$0xff]
    %v3868 = vld [vmem:[#allocation13 + $0x50] sm:$0xff]
    %v3869 = vld [vmem:[#allocation13 + $0x58] sm:$0xff]
    %v3870 = vld [vmem:[#allocation13 + $0x60] sm:$0xff]
    %v3871 = vld [vmem:[#allocation13 + $0x68] sm:$0xff]
    %v3872 = vld [vmem:[#allocation13 + $0x70] sm:$0xff]
    %v3873 = vld [vmem:[#allocation13 + $0x78] sm:$0xff]
    %v3874 = vld [vmem:[#allocation13 + $0x80] sm:$0xff]
    %v3875 = vld [vmem:[#allocation13 + $0x88] sm:$0xff]
    %v3876 = vld [vmem:[#allocation13 + $0x90] sm:$0xff]
    %v3877 = vld [vmem:[#allocation13 + $0x98] sm:$0xff]
    %v3878 = vld [vmem:[#allocation13 + $0xa0] sm:$0xff]
    %v3879 = vld [vmem:[#allocation13 + $0xa8] sm:$0xff]
    %v3880 = vld [vmem:[#allocation13 + $0xb0] sm:$0xff]
    %v3881 = vld [vmem:[#allocation13 + $0xb8] sm:$0xff]
    %v3882 = vld [vmem:[#allocation13 + $0xc0] sm:$0xff]
    %v3883 = vld [vmem:[#allocation13 + $0xc8] sm:$0xff]
    %v3884 = vld [vmem:[#allocation13 + $0xd0] sm:$0xff]
    %v3885 = vld [vmem:[#allocation13 + $0xd8] sm:$0xff]
    %v3886 = vld [vmem:[#allocation13 + $0xe0] sm:$0xff]
    %v3887 = vld [vmem:[#allocation13 + $0xe8] sm:$0xff]
    %v3888 = vld [vmem:[#allocation13 + $0xf0] sm:$0xff]
    %v3889 = vld [vmem:[#allocation13 + $0xf8] sm:$0xff]
    %v3891 = vperm.slane %v3855, 0
    %v3892 = vperm.slane %v3855, 1
    %v3927 = vunpack.c.l.b16 %v3858
    %v3928 = vunpack.c.h.b16 %v3858
    %v3929 = vunpack.c.l.b16 %v3859
    %v3930 = vunpack.c.h.b16 %v3859
    %v3931 = vunpack.c.l.b16 %v3860
    %v3932 = vunpack.c.h.b16 %v3860
    %v3933 = vunpack.c.l.b16 %v3861
    %v3934 = vunpack.c.h.b16 %v3861
    %v3935 = vunpack.c.l.b16 %v3862
    %v3936 = vunpack.c.h.b16 %v3862
    %v3937 = vunpack.c.l.b16 %v3863
    %v3938 = vunpack.c.h.b16 %v3863
    %v3939 = vunpack.c.l.b16 %v3864
    %v3940 = vunpack.c.h.b16 %v3864
    %v3941 = vunpack.c.l.b16 %v3865
    %v3942 = vunpack.c.h.b16 %v3865
    %v3943 = vunpack.c.l.b16 %v3866
    %v3944 = vunpack.c.h.b16 %v3866
    %v3945 = vunpack.c.l.b16 %v3867
    %v3946 = vunpack.c.h.b16 %v3867
    %v3947 = vunpack.c.l.b16 %v3868
    %v3948 = vunpack.c.h.b16 %v3868
    %v3949 = vunpack.c.l.b16 %v3869
    %v3950 = vunpack.c.h.b16 %v3869
    %v3951 = vunpack.c.l.b16 %v3870
    %v3952 = vunpack.c.h.b16 %v3870
    %v3953 = vunpack.c.l.b16 %v3871
    %v3954 = vunpack.c.h.b16 %v3871
    %v3955 = vunpack.c.l.b16 %v3872
    %v3956 = vunpack.c.h.b16 %v3872
    %v3957 = vunpack.c.l.b16 %v3873
    %v3958 = vunpack.c.h.b16 %v3873
    %v3959 = vunpack.c.l.b16 %v3874
    %v3960 = vunpack.c.h.b16 %v3874
    %v3961 = vunpack.c.l.b16 %v3875
    %v3962 = vunpack.c.h.b16 %v3875
    %v3963 = vunpack.c.l.b16 %v3876
    %v3964 = vunpack.c.h.b16 %v3876
    %v3965 = vunpack.c.l.b16 %v3877
    %v3966 = vunpack.c.h.b16 %v3877
    %v3967 = vunpack.c.l.b16 %v3878
    %v3968 = vunpack.c.h.b16 %v3878
    %v3969 = vunpack.c.l.b16 %v3879
    %v3970 = vunpack.c.h.b16 %v3879
    %v3971 = vunpack.c.l.b16 %v3880
    %v3972 = vunpack.c.h.b16 %v3880
    %v3973 = vunpack.c.l.b16 %v3881
    %v3974 = vunpack.c.h.b16 %v3881
    %v3975 = vunpack.c.l.b16 %v3882
    %v3976 = vunpack.c.h.b16 %v3882
    %v3977 = vunpack.c.l.b16 %v3883
    %v3978 = vunpack.c.h.b16 %v3883
    %v3979 = vunpack.c.l.b16 %v3884
    %v3980 = vunpack.c.h.b16 %v3884
    %v3981 = vunpack.c.l.b16 %v3885
    %v3982 = vunpack.c.h.b16 %v3885
    %v3983 = vunpack.c.l.b16 %v3886
    %v3984 = vunpack.c.h.b16 %v3886
    %v3985 = vunpack.c.l.b16 %v3887
    %v3986 = vunpack.c.h.b16 %v3887
    %v3987 = vunpack.c.l.b16 %v3888
    %v3988 = vunpack.c.h.b16 %v3888
    %v3989 = vunpack.c.l.b16 %v3889
    %v3990 = vunpack.c.h.b16 %v3889
    %v3991 = vpack.c.b16 %v3929, %v3927
    %v3992 = vpack.c.b16 %v3930, %v3928
    %v3993 = vpack.c.b16 %v3933, %v3931
    %v3994 = vpack.c.b16 %v3934, %v3932
    %v3995 = vpack.c.b16 %v3937, %v3935
    %v3996 = vpack.c.b16 %v3938, %v3936
    %v3997 = vpack.c.b16 %v3941, %v3939
    %v3998 = vpack.c.b16 %v3942, %v3940
    %v3999 = vpack.c.b16 %v3945, %v3943
    %v4000 = vpack.c.b16 %v3946, %v3944
    %v4001 = vpack.c.b16 %v3949, %v3947
    %v4002 = vpack.c.b16 %v3950, %v3948
    %v4003 = vpack.c.b16 %v3953, %v3951
    %v4004 = vpack.c.b16 %v3954, %v3952
    %v4005 = vpack.c.b16 %v3957, %v3955
    %v4006 = vpack.c.b16 %v3958, %v3956
    %v4007 = vpack.c.b16 %v3961, %v3959
    %v4008 = vpack.c.b16 %v3962, %v3960
    %v4009 = vpack.c.b16 %v3965, %v3963
    %v4010 = vpack.c.b16 %v3966, %v3964
    %v4011 = vpack.c.b16 %v3969, %v3967
    %v4012 = vpack.c.b16 %v3970, %v3968
    %v4013 = vpack.c.b16 %v3973, %v3971
    %v4014 = vpack.c.b16 %v3974, %v3972
    %v4015 = vpack.c.b16 %v3977, %v3975
    %v4016 = vpack.c.b16 %v3978, %v3976
    %v4017 = vpack.c.b16 %v3981, %v3979
    %v4018 = vpack.c.b16 %v3982, %v3980
    %v4019 = vpack.c.b16 %v3985, %v3983
    %v4020 = vpack.c.b16 %v3986, %v3984
    %v4021 = vpack.c.b16 %v3989, %v3987
    %v4022 = vpack.c.b16 %v3990, %v3988
    %4055 = vmatpush.bf16.msra.mxu0 %v4005
    %4056 = vmatpush.bf16.msra.mxu0 %v4003
    %4057 = vmatpush.bf16.msra.mxu0 %v4001
    %4058 = vmatpush.bf16.msra.mxu0 %v3999
    %4059 = vmatpush.bf16.msra.mxu0 %v3997
    %4060 = vmatpush.bf16.msra.mxu0 %v3995
    %4061 = vmatpush.bf16.msra.mxu0 %v3993
    %4062 = vmatpush.bf16.msra.mxu0 %v3991
    %4063 = vmatmul.bf16.gmra.mxu0 %v3856
    %v4064 = vpop.f32.mrf.mxu0
    %v4065 = vadd.f32 %v3891, %v4064
    %v4066 = vpop.f32.mrf.mxu0
    %4067 = vdwg.mxu0
    %4068 = vmatpush.bf16.msra.mxu0 %v4021
    %4069 = vmatpush.bf16.msra.mxu0 %v4019
    %4070 = vmatpush.bf16.msra.mxu0 %v4017
    %4071 = vmatpush.bf16.msra.mxu0 %v4015
    %4072 = vmatpush.bf16.msra.mxu0 %v4013
    %4073 = vmatpush.bf16.msra.mxu0 %v4011
    %4074 = vmatpush.bf16.msra.mxu0 %v4009
    %4075 = vmatpush.bf16.msra.mxu0 %v4007
    %4076 = vmatmul.bf16.gmra.mxu0 %v3857
    %v4077 = vpop.f32.mrf.mxu0
    %v4078 = vadd.f32 %v4065, %v4077
    %v4079 = vpop.f32.mrf.mxu0
    %4080 = vdwg.mxu0
    %4081 = vmatpush.bf16.msra.mxu0 %v4006
    %4082 = vmatpush.bf16.msra.mxu0 %v4004
    %4083 = vmatpush.bf16.msra.mxu0 %v4002
    %4084 = vmatpush.bf16.msra.mxu0 %v4000
    %4085 = vmatpush.bf16.msra.mxu0 %v3998
    %4086 = vmatpush.bf16.msra.mxu0 %v3996
    %4087 = vmatpush.bf16.msra.mxu0 %v3994
    %4088 = vmatpush.bf16.msra.mxu0 %v3992
    %4089 = vmatmul.bf16.gmra.mxu0 %v3856
    %v4090 = vpop.f32.mrf.mxu0
    %v4091 = vadd.f32 %v3892, %v4090
    %v4092 = vpop.f32.mrf.mxu0
    %4093 = vdwg.mxu0
    %4094 = vmatpush.bf16.msra.mxu0 %v4022
    %4095 = vmatpush.bf16.msra.mxu0 %v4020
    %4096 = vmatpush.bf16.msra.mxu0 %v4018
    %4097 = vmatpush.bf16.msra.mxu0 %v4016
    %4098 = vmatpush.bf16.msra.mxu0 %v4014
    %4099 = vmatpush.bf16.msra.mxu0 %v4012
    %4100 = vmatpush.bf16.msra.mxu0 %v4010
    %4101 = vmatpush.bf16.msra.mxu0 %v4008
    %4102 = vmatmul.bf16.gmra.mxu0 %v3857
    %v4103 = vpop.f32.mrf.mxu0
    %v4104 = vadd.f32 %v4091, %v4103
    %v4105 = vpop.f32.mrf.mxu0
    %4106 = vdwg.mxu0
    %v4107 = vmax.f32 %v4078, 0.0
    %v4108 = vmax.f32 %v4104, 0.0
    %v4109 = vld [vmem:[%s22] sm:$0xf]
    %v4110 = vpack.c.bf16 %v4107, %v4107
    %v4111 = vpack.c.bf16 %v4108, %v4108
    %v4112 = vld [vmem:[#allocation15] sm:$0xff]
    %v4113 = vld [vmem:[#allocation15 + $0x8] sm:$0xff]
    %v4114 = vld [vmem:[#allocation15 + $0x10] sm:$0xff]
    %v4115 = vld [vmem:[#allocation15 + $0x18] sm:$0xff]
    %v4116 = vld [vmem:[#allocation15 + $0x20] sm:$0xff]
    %v4117 = vld [vmem:[#allocation15 + $0x28] sm:$0xff]
    %v4118 = vld [vmem:[#allocation15 + $0x30] sm:$0xff]
    %v4119 = vld [vmem:[#allocation15 + $0x38] sm:$0xff]
    %v4120 = vld [vmem:[#allocation15 + $0x40] sm:$0xff]
    %v4121 = vld [vmem:[#allocation15 + $0x48] sm:$0xff]
    %v4122 = vld [vmem:[#allocation15 + $0x50] sm:$0xff]
    %v4123 = vld [vmem:[#allocation15 + $0x58] sm:$0xff]
    %v4124 = vld [vmem:[#allocation15 + $0x60] sm:$0xff]
    %v4125 = vld [vmem:[#allocation15 + $0x68] sm:$0xff]
    %v4126 = vld [vmem:[#allocation15 + $0x70] sm:$0xff]
    %v4127 = vld [vmem:[#allocation15 + $0x78] sm:$0xff]
    %v4128 = vld [vmem:[#allocation15 + $0x80] sm:$0xff]
    %v4129 = vld [vmem:[#allocation15 + $0x88] sm:$0xff]
    %v4130 = vld [vmem:[#allocation15 + $0x90] sm:$0xff]
    %v4131 = vld [vmem:[#allocation15 + $0x98] sm:$0xff]
    %v4132 = vld [vmem:[#allocation15 + $0xa0] sm:$0xff]
    %v4133 = vld [vmem:[#allocation15 + $0xa8] sm:$0xff]
    %v4134 = vld [vmem:[#allocation15 + $0xb0] sm:$0xff]
    %v4135 = vld [vmem:[#allocation15 + $0xb8] sm:$0xff]
    %v4136 = vld [vmem:[#allocation15 + $0xc0] sm:$0xff]
    %v4137 = vld [vmem:[#allocation15 + $0xc8] sm:$0xff]
    %v4138 = vld [vmem:[#allocation15 + $0xd0] sm:$0xff]
    %v4139 = vld [vmem:[#allocation15 + $0xd8] sm:$0xff]
    %v4140 = vld [vmem:[#allocation15 + $0xe0] sm:$0xff]
    %v4141 = vld [vmem:[#allocation15 + $0xe8] sm:$0xff]
    %v4142 = vld [vmem:[#allocation15 + $0xf0] sm:$0xff]
    %v4143 = vld [vmem:[#allocation15 + $0xf8] sm:$0xff]
    %v4144 = vld [vmem:[#allocation15 + $0x100] sm:$0xff]
    %v4145 = vld [vmem:[#allocation15 + $0x108] sm:$0xff]
    %v4146 = vld [vmem:[#allocation15 + $0x110] sm:$0xff]
    %v4147 = vld [vmem:[#allocation15 + $0x118] sm:$0xff]
    %v4148 = vld [vmem:[#allocation15 + $0x120] sm:$0xff]
    %v4149 = vld [vmem:[#allocation15 + $0x128] sm:$0xff]
    %v4150 = vld [vmem:[#allocation15 + $0x130] sm:$0xff]
    %v4151 = vld [vmem:[#allocation15 + $0x138] sm:$0xff]
    %v4152 = vld [vmem:[#allocation15 + $0x140] sm:$0xff]
    %v4153 = vld [vmem:[#allocation15 + $0x148] sm:$0xff]
    %v4154 = vld [vmem:[#allocation15 + $0x150] sm:$0xff]
    %v4155 = vld [vmem:[#allocation15 + $0x158] sm:$0xff]
    %v4156 = vld [vmem:[#allocation15 + $0x160] sm:$0xff]
    %v4157 = vld [vmem:[#allocation15 + $0x168] sm:$0xff]
    %v4158 = vld [vmem:[#allocation15 + $0x170] sm:$0xff]
    %v4159 = vld [vmem:[#allocation15 + $0x178] sm:$0xff]
    %v4160 = vld [vmem:[#allocation15 + $0x180] sm:$0xff]
    %v4161 = vld [vmem:[#allocation15 + $0x188] sm:$0xff]
    %v4162 = vld [vmem:[#allocation15 + $0x190] sm:$0xff]
    %v4163 = vld [vmem:[#allocation15 + $0x198] sm:$0xff]
    %v4164 = vld [vmem:[#allocation15 + $0x1a0] sm:$0xff]
    %v4165 = vld [vmem:[#allocation15 + $0x1a8] sm:$0xff]
    %v4166 = vld [vmem:[#allocation15 + $0x1b0] sm:$0xff]
    %v4167 = vld [vmem:[#allocation15 + $0x1b8] sm:$0xff]
    %v4168 = vld [vmem:[#allocation15 + $0x1c0] sm:$0xff]
    %v4169 = vld [vmem:[#allocation15 + $0x1c8] sm:$0xff]
    %v4170 = vld [vmem:[#allocation15 + $0x1d0] sm:$0xff]
    %v4171 = vld [vmem:[#allocation15 + $0x1d8] sm:$0xff]
    %v4172 = vld [vmem:[#allocation15 + $0x1e0] sm:$0xff]
    %v4173 = vld [vmem:[#allocation15 + $0x1e8] sm:$0xff]
    %v4174 = vld [vmem:[#allocation15 + $0x1f0] sm:$0xff]
    %v4175 = vld [vmem:[#allocation15 + $0x1f8] sm:$0xff]
    %v4177 = vperm.slane %v4109, 0
    %v4178 = vperm.slane %v4109, 1
    %v4179 = vperm.slane %v4109, 2
    %v4180 = vperm.slane %v4109, 3
    %v4249 = vunpack.c.l.b16 %v4112
    %v4250 = vunpack.c.h.b16 %v4112
    %v4251 = vunpack.c.l.b16 %v4113
    %v4252 = vunpack.c.h.b16 %v4113
    %v4253 = vunpack.c.l.b16 %v4114
    %v4254 = vunpack.c.h.b16 %v4114
    %v4255 = vunpack.c.l.b16 %v4115
    %v4256 = vunpack.c.h.b16 %v4115
    %v4257 = vunpack.c.l.b16 %v4116
    %v4258 = vunpack.c.h.b16 %v4116
    %v4259 = vunpack.c.l.b16 %v4117
    %v4260 = vunpack.c.h.b16 %v4117
    %v4261 = vunpack.c.l.b16 %v4118
    %v4262 = vunpack.c.h.b16 %v4118
    %v4263 = vunpack.c.l.b16 %v4119
    %v4264 = vunpack.c.h.b16 %v4119
    %v4265 = vunpack.c.l.b16 %v4120
    %v4266 = vunpack.c.h.b16 %v4120
    %v4267 = vunpack.c.l.b16 %v4121
    %v4268 = vunpack.c.h.b16 %v4121
    %v4269 = vunpack.c.l.b16 %v4122
    %v4270 = vunpack.c.h.b16 %v4122
    %v4271 = vunpack.c.l.b16 %v4123
    %v4272 = vunpack.c.h.b16 %v4123
    %v4273 = vunpack.c.l.b16 %v4124
    %v4274 = vunpack.c.h.b16 %v4124
    %v4275 = vunpack.c.l.b16 %v4125
    %v4276 = vunpack.c.h.b16 %v4125
    %v4277 = vunpack.c.l.b16 %v4126
    %v4278 = vunpack.c.h.b16 %v4126
    %v4279 = vunpack.c.l.b16 %v4127
    %v4280 = vunpack.c.h.b16 %v4127
    %v4281 = vunpack.c.l.b16 %v4128
    %v4282 = vunpack.c.h.b16 %v4128
    %v4283 = vunpack.c.l.b16 %v4129
    %v4284 = vunpack.c.h.b16 %v4129
    %v4285 = vunpack.c.l.b16 %v4130
    %v4286 = vunpack.c.h.b16 %v4130
    %v4287 = vunpack.c.l.b16 %v4131
    %v4288 = vunpack.c.h.b16 %v4131
    %v4289 = vunpack.c.l.b16 %v4132
    %v4290 = vunpack.c.h.b16 %v4132
    %v4291 = vunpack.c.l.b16 %v4133
    %v4292 = vunpack.c.h.b16 %v4133
    %v4293 = vunpack.c.l.b16 %v4134
    %v4294 = vunpack.c.h.b16 %v4134
    %v4295 = vunpack.c.l.b16 %v4135
    %v4296 = vunpack.c.h.b16 %v4135
    %v4297 = vunpack.c.l.b16 %v4136
    %v4298 = vunpack.c.h.b16 %v4136
    %v4299 = vunpack.c.l.b16 %v4137
    %v4300 = vunpack.c.h.b16 %v4137
    %v4301 = vunpack.c.l.b16 %v4138
    %v4302 = vunpack.c.h.b16 %v4138
    %v4303 = vunpack.c.l.b16 %v4139
    %v4304 = vunpack.c.h.b16 %v4139
    %v4305 = vunpack.c.l.b16 %v4140
    %v4306 = vunpack.c.h.b16 %v4140
    %v4307 = vunpack.c.l.b16 %v4141
    %v4308 = vunpack.c.h.b16 %v4141
    %v4309 = vunpack.c.l.b16 %v4142
    %v4310 = vunpack.c.h.b16 %v4142
    %v4311 = vunpack.c.l.b16 %v4143
    %v4312 = vunpack.c.h.b16 %v4143
    %v4313 = vunpack.c.l.b16 %v4144
    %v4314 = vunpack.c.h.b16 %v4144
    %v4315 = vunpack.c.l.b16 %v4145
    %v4316 = vunpack.c.h.b16 %v4145
    %v4317 = vunpack.c.l.b16 %v4146
    %v4318 = vunpack.c.h.b16 %v4146
    %v4319 = vunpack.c.l.b16 %v4147
    %v4320 = vunpack.c.h.b16 %v4147
    %v4321 = vunpack.c.l.b16 %v4148
    %v4322 = vunpack.c.h.b16 %v4148
    %v4323 = vunpack.c.l.b16 %v4149
    %v4324 = vunpack.c.h.b16 %v4149
    %v4325 = vunpack.c.l.b16 %v4150
    %v4326 = vunpack.c.h.b16 %v4150
    %v4327 = vunpack.c.l.b16 %v4151
    %v4328 = vunpack.c.h.b16 %v4151
    %v4329 = vunpack.c.l.b16 %v4152
    %v4330 = vunpack.c.h.b16 %v4152
    %v4331 = vunpack.c.l.b16 %v4153
    %v4332 = vunpack.c.h.b16 %v4153
    %v4333 = vunpack.c.l.b16 %v4154
    %v4334 = vunpack.c.h.b16 %v4154
    %v4335 = vunpack.c.l.b16 %v4155
    %v4336 = vunpack.c.h.b16 %v4155
    %v4337 = vunpack.c.l.b16 %v4156
    %v4338 = vunpack.c.h.b16 %v4156
    %v4339 = vunpack.c.l.b16 %v4157
    %v4340 = vunpack.c.h.b16 %v4157
    %v4341 = vunpack.c.l.b16 %v4158
    %v4342 = vunpack.c.h.b16 %v4158
    %v4343 = vunpack.c.l.b16 %v4159
    %v4344 = vunpack.c.h.b16 %v4159
    %v4345 = vunpack.c.l.b16 %v4160
    %v4346 = vunpack.c.h.b16 %v4160
    %v4347 = vunpack.c.l.b16 %v4161
    %v4348 = vunpack.c.h.b16 %v4161
    %v4349 = vunpack.c.l.b16 %v4162
    %v4350 = vunpack.c.h.b16 %v4162
    %v4351 = vunpack.c.l.b16 %v4163
    %v4352 = vunpack.c.h.b16 %v4163
    %v4353 = vunpack.c.l.b16 %v4164
    %v4354 = vunpack.c.h.b16 %v4164
    %v4355 = vunpack.c.l.b16 %v4165
    %v4356 = vunpack.c.h.b16 %v4165
    %v4357 = vunpack.c.l.b16 %v4166
    %v4358 = vunpack.c.h.b16 %v4166
    %v4359 = vunpack.c.l.b16 %v4167
    %v4360 = vunpack.c.h.b16 %v4167
    %v4361 = vunpack.c.l.b16 %v4168
    %v4362 = vunpack.c.h.b16 %v4168
    %v4363 = vunpack.c.l.b16 %v4169
    %v4364 = vunpack.c.h.b16 %v4169
    %v4365 = vunpack.c.l.b16 %v4170
    %v4366 = vunpack.c.h.b16 %v4170
    %v4367 = vunpack.c.l.b16 %v4171
    %v4368 = vunpack.c.h.b16 %v4171
    %v4369 = vunpack.c.l.b16 %v4172
    %v4370 = vunpack.c.h.b16 %v4172
    %v4371 = vunpack.c.l.b16 %v4173
    %v4372 = vunpack.c.h.b16 %v4173
    %v4373 = vunpack.c.l.b16 %v4174
    %v4374 = vunpack.c.h.b16 %v4174
    %v4375 = vunpack.c.l.b16 %v4175
    %v4376 = vunpack.c.h.b16 %v4175
    %v4377 = vpack.c.b16 %v4253, %v4249
    %v4378 = vpack.c.b16 %v4254, %v4250
    %v4379 = vpack.c.b16 %v4255, %v4251
    %v4380 = vpack.c.b16 %v4256, %v4252
    %v4381 = vpack.c.b16 %v4261, %v4257
    %v4382 = vpack.c.b16 %v4262, %v4258
    %v4383 = vpack.c.b16 %v4263, %v4259
    %v4384 = vpack.c.b16 %v4264, %v4260
    %v4385 = vpack.c.b16 %v4269, %v4265
    %v4386 = vpack.c.b16 %v4270, %v4266
    %v4387 = vpack.c.b16 %v4271, %v4267
    %v4388 = vpack.c.b16 %v4272, %v4268
    %v4389 = vpack.c.b16 %v4277, %v4273
    %v4390 = vpack.c.b16 %v4278, %v4274
    %v4391 = vpack.c.b16 %v4279, %v4275
    %v4392 = vpack.c.b16 %v4280, %v4276
    %v4393 = vpack.c.b16 %v4285, %v4281
    %v4394 = vpack.c.b16 %v4286, %v4282
    %v4395 = vpack.c.b16 %v4287, %v4283
    %v4396 = vpack.c.b16 %v4288, %v4284
    %v4397 = vpack.c.b16 %v4293, %v4289
    %v4398 = vpack.c.b16 %v4294, %v4290
    %v4399 = vpack.c.b16 %v4295, %v4291
    %v4400 = vpack.c.b16 %v4296, %v4292
    %v4401 = vpack.c.b16 %v4301, %v4297
    %v4402 = vpack.c.b16 %v4302, %v4298
    %v4403 = vpack.c.b16 %v4303, %v4299
    %v4404 = vpack.c.b16 %v4304, %v4300
    %v4405 = vpack.c.b16 %v4309, %v4305
    %v4406 = vpack.c.b16 %v4310, %v4306
    %v4407 = vpack.c.b16 %v4311, %v4307
    %v4408 = vpack.c.b16 %v4312, %v4308
    %v4409 = vpack.c.b16 %v4317, %v4313
    %v4410 = vpack.c.b16 %v4318, %v4314
    %v4411 = vpack.c.b16 %v4319, %v4315
    %v4412 = vpack.c.b16 %v4320, %v4316
    %v4413 = vpack.c.b16 %v4325, %v4321
    %v4414 = vpack.c.b16 %v4326, %v4322
    %v4415 = vpack.c.b16 %v4327, %v4323
    %v4416 = vpack.c.b16 %v4328, %v4324
    %v4417 = vpack.c.b16 %v4333, %v4329
    %v4418 = vpack.c.b16 %v4334, %v4330
    %v4419 = vpack.c.b16 %v4335, %v4331
    %v4420 = vpack.c.b16 %v4336, %v4332
    %v4421 = vpack.c.b16 %v4341, %v4337
    %v4422 = vpack.c.b16 %v4342, %v4338
    %v4423 = vpack.c.b16 %v4343, %v4339
    %v4424 = vpack.c.b16 %v4344, %v4340
    %v4425 = vpack.c.b16 %v4349, %v4345
    %v4426 = vpack.c.b16 %v4350, %v4346
    %v4427 = vpack.c.b16 %v4351, %v4347
    %v4428 = vpack.c.b16 %v4352, %v4348
    %v4429 = vpack.c.b16 %v4357, %v4353
    %v4430 = vpack.c.b16 %v4358, %v4354
    %v4431 = vpack.c.b16 %v4359, %v4355
    %v4432 = vpack.c.b16 %v4360, %v4356
    %v4433 = vpack.c.b16 %v4365, %v4361
    %v4434 = vpack.c.b16 %v4366, %v4362
    %v4435 = vpack.c.b16 %v4367, %v4363
    %v4436 = vpack.c.b16 %v4368, %v4364
    %v4437 = vpack.c.b16 %v4373, %v4369
    %v4438 = vpack.c.b16 %v4374, %v4370
    %v4439 = vpack.c.b16 %v4375, %v4371
    %v4440 = vpack.c.b16 %v4376, %v4372
    %4505 = vmatpush.bf16.msra.mxu0 %v4405
    %4506 = vmatpush.bf16.msra.mxu0 %v4401
    %4507 = vmatpush.bf16.msra.mxu0 %v4397
    %4508 = vmatpush.bf16.msra.mxu0 %v4393
    %4509 = vmatpush.bf16.msra.mxu0 %v4389
    %4510 = vmatpush.bf16.msra.mxu0 %v4385
    %4511 = vmatpush.bf16.msra.mxu0 %v4381
    %4512 = vmatpush.bf16.msra.mxu0 %v4377
    %4513 = vmatmul.bf16.gmra.mxu0 %v4110
    %v4514 = vpop.f32.mrf.mxu0
    %v4515 = vadd.f32 %v4177, %v4514
    %v4516 = vpop.f32.mrf.mxu0
    %4517 = vdwg.mxu0
    %4518 = vmatpush.bf16.msra.mxu0 %v4437
    %4519 = vmatpush.bf16.msra.mxu0 %v4433
    %4520 = vmatpush.bf16.msra.mxu0 %v4429
    %4521 = vmatpush.bf16.msra.mxu0 %v4425
    %4522 = vmatpush.bf16.msra.mxu0 %v4421
    %4523 = vmatpush.bf16.msra.mxu0 %v4417
    %4524 = vmatpush.bf16.msra.mxu0 %v4413
    %4525 = vmatpush.bf16.msra.mxu0 %v4409
    %4526 = vmatmul.bf16.gmra.mxu0 %v4111
    %v4527 = vpop.f32.mrf.mxu0
    %v4528 = vadd.f32 %v4515, %v4527
    %v4529 = vpop.f32.mrf.mxu0
    %4530 = vdwg.mxu0
    %4531 = vmatpush.bf16.msra.mxu0 %v4406
    %4532 = vmatpush.bf16.msra.mxu0 %v4402
    %4533 = vmatpush.bf16.msra.mxu0 %v4398
    %4534 = vmatpush.bf16.msra.mxu0 %v4394
    %4535 = vmatpush.bf16.msra.mxu0 %v4390
    %4536 = vmatpush.bf16.msra.mxu0 %v4386
    %4537 = vmatpush.bf16.msra.mxu0 %v4382
    %4538 = vmatpush.bf16.msra.mxu0 %v4378
    %4539 = vmatmul.bf16.gmra.mxu0 %v4110
    %v4540 = vpop.f32.mrf.mxu0
    %v4541 = vadd.f32 %v4178, %v4540
    %v4542 = vpop.f32.mrf.mxu0
    %4543 = vdwg.mxu0
    %4544 = vmatpush.bf16.msra.mxu0 %v4438
    %4545 = vmatpush.bf16.msra.mxu0 %v4434
    %4546 = vmatpush.bf16.msra.mxu0 %v4430
    %4547 = vmatpush.bf16.msra.mxu0 %v4426
    %4548 = vmatpush.bf16.msra.mxu0 %v4422
    %4549 = vmatpush.bf16.msra.mxu0 %v4418
    %4550 = vmatpush.bf16.msra.mxu0 %v4414
    %4551 = vmatpush.bf16.msra.mxu0 %v4410
    %4552 = vmatmul.bf16.gmra.mxu0 %v4111
    %v4553 = vpop.f32.mrf.mxu0
    %v4554 = vadd.f32 %v4541, %v4553
    %v4555 = vpop.f32.mrf.mxu0
    %4556 = vdwg.mxu0
    %4557 = vmatpush.bf16.msra.mxu0 %v4407
    %4558 = vmatpush.bf16.msra.mxu0 %v4403
    %4559 = vmatpush.bf16.msra.mxu0 %v4399
    %4560 = vmatpush.bf16.msra.mxu0 %v4395
    %4561 = vmatpush.bf16.msra.mxu0 %v4391
    %4562 = vmatpush.bf16.msra.mxu0 %v4387
    %4563 = vmatpush.bf16.msra.mxu0 %v4383
    %4564 = vmatpush.bf16.msra.mxu0 %v4379
    %4565 = vmatmul.bf16.gmra.mxu0 %v4110
    %v4566 = vpop.f32.mrf.mxu0
    %v4567 = vadd.f32 %v4179, %v4566
    %v4568 = vpop.f32.mrf.mxu0
    %4569 = vdwg.mxu0
    %4570 = vmatpush.bf16.msra.mxu0 %v4439
    %4571 = vmatpush.bf16.msra.mxu0 %v4435
    %4572 = vmatpush.bf16.msra.mxu0 %v4431
    %4573 = vmatpush.bf16.msra.mxu0 %v4427
    %4574 = vmatpush.bf16.msra.mxu0 %v4423
    %4575 = vmatpush.bf16.msra.mxu0 %v4419
    %4576 = vmatpush.bf16.msra.mxu0 %v4415
    %4577 = vmatpush.bf16.msra.mxu0 %v4411
    %4578 = vmatmul.bf16.gmra.mxu0 %v4111
    %v4579 = vpop.f32.mrf.mxu0
    %v4580 = vadd.f32 %v4567, %v4579
    %v4581 = vpop.f32.mrf.mxu0
    %4582 = vdwg.mxu0
    %4583 = vmatpush.bf16.msra.mxu0 %v4408
    %4584 = vmatpush.bf16.msra.mxu0 %v4404
    %4585 = vmatpush.bf16.msra.mxu0 %v4400
    %4586 = vmatpush.bf16.msra.mxu0 %v4396
    %4587 = vmatpush.bf16.msra.mxu0 %v4392
    %4588 = vmatpush.bf16.msra.mxu0 %v4388
    %4589 = vmatpush.bf16.msra.mxu0 %v4384
    %4590 = vmatpush.bf16.msra.mxu0 %v4380
    %4591 = vmatmul.bf16.gmra.mxu0 %v4110
    %v4592 = vpop.f32.mrf.mxu0
    %v4593 = vadd.f32 %v4180, %v4592
    %v4594 = vpop.f32.mrf.mxu0
    %4595 = vdwg.mxu0
    %4596 = vmatpush.bf16.msra.mxu0 %v4440
    %4597 = vmatpush.bf16.msra.mxu0 %v4436
    %4598 = vmatpush.bf16.msra.mxu0 %v4432
    %4599 = vmatpush.bf16.msra.mxu0 %v4428
    %4600 = vmatpush.bf16.msra.mxu0 %v4424
    %4601 = vmatpush.bf16.msra.mxu0 %v4420
    %4602 = vmatpush.bf16.msra.mxu0 %v4416
    %4603 = vmatpush.bf16.msra.mxu0 %v4412
    %4604 = vmatmul.bf16.gmra.mxu0 %v4111
    %v4605 = vpop.f32.mrf.mxu0
    %v4606 = vadd.f32 %v4593, %v4605
    %v4607 = vpop.f32.mrf.mxu0
    %4608 = vdwg.mxu0
    %v4609 = vmax.f32 %v4528, 0.0
    %v4610 = vmax.f32 %v4554, 0.0
    %v4611 = vmax.f32 %v4580, 0.0
    %v4612 = vmax.f32 %v4606, 0.0
    %v4613 = vld [vmem:[%s24] sm:$0x3]
    %v4614 = vpack.c.bf16 %v4609, %v4609
    %v4615 = vpack.c.bf16 %v4610, %v4610
    %v4616 = vpack.c.bf16 %v4611, %v4611
    %v4617 = vpack.c.bf16 %v4612, %v4612
    %v4618 = vld [vmem:[#allocation16] sm:$0xff]
    %v4619 = vld [vmem:[#allocation16 + $0x8] sm:$0xff]
    %v4620 = vld [vmem:[#allocation16 + $0x10] sm:$0xff]
    %v4621 = vld [vmem:[#allocation16 + $0x18] sm:$0xff]
    %v4622 = vld [vmem:[#allocation16 + $0x20] sm:$0xff]
    %v4623 = vld [vmem:[#allocation16 + $0x28] sm:$0xff]
    %v4624 = vld [vmem:[#allocation16 + $0x30] sm:$0xff]
    %v4625 = vld [vmem:[#allocation16 + $0x38] sm:$0xff]
    %v4626 = vld [vmem:[#allocation16 + $0x40] sm:$0xff]
    %v4627 = vld [vmem:[#allocation16 + $0x48] sm:$0xff]
    %v4628 = vld [vmem:[#allocation16 + $0x50] sm:$0xff]
    %v4629 = vld [vmem:[#allocation16 + $0x58] sm:$0xff]
    %v4630 = vld [vmem:[#allocation16 + $0x60] sm:$0xff]
    %v4631 = vld [vmem:[#allocation16 + $0x68] sm:$0xff]
    %v4632 = vld [vmem:[#allocation16 + $0x70] sm:$0xff]
    %v4633 = vld [vmem:[#allocation16 + $0x78] sm:$0xff]
    %v4634 = vld [vmem:[#allocation16 + $0x80] sm:$0xff]
    %v4635 = vld [vmem:[#allocation16 + $0x88] sm:$0xff]
    %v4636 = vld [vmem:[#allocation16 + $0x90] sm:$0xff]
    %v4637 = vld [vmem:[#allocation16 + $0x98] sm:$0xff]
    %v4638 = vld [vmem:[#allocation16 + $0xa0] sm:$0xff]
    %v4639 = vld [vmem:[#allocation16 + $0xa8] sm:$0xff]
    %v4640 = vld [vmem:[#allocation16 + $0xb0] sm:$0xff]
    %v4641 = vld [vmem:[#allocation16 + $0xb8] sm:$0xff]
    %v4642 = vld [vmem:[#allocation16 + $0xc0] sm:$0xff]
    %v4643 = vld [vmem:[#allocation16 + $0xc8] sm:$0xff]
    %v4644 = vld [vmem:[#allocation16 + $0xd0] sm:$0xff]
    %v4645 = vld [vmem:[#allocation16 + $0xd8] sm:$0xff]
    %v4646 = vld [vmem:[#allocation16 + $0xe0] sm:$0xff]
    %v4647 = vld [vmem:[#allocation16 + $0xe8] sm:$0xff]
    %v4648 = vld [vmem:[#allocation16 + $0xf0] sm:$0xff]
    %v4649 = vld [vmem:[#allocation16 + $0xf8] sm:$0xff]
    %v4650 = vld [vmem:[#allocation16 + $0x100] sm:$0xff]
    %v4651 = vld [vmem:[#allocation16 + $0x108] sm:$0xff]
    %v4652 = vld [vmem:[#allocation16 + $0x110] sm:$0xff]
    %v4653 = vld [vmem:[#allocation16 + $0x118] sm:$0xff]
    %v4654 = vld [vmem:[#allocation16 + $0x120] sm:$0xff]
    %v4655 = vld [vmem:[#allocation16 + $0x128] sm:$0xff]
    %v4656 = vld [vmem:[#allocation16 + $0x130] sm:$0xff]
    %v4657 = vld [vmem:[#allocation16 + $0x138] sm:$0xff]
    %v4658 = vld [vmem:[#allocation16 + $0x140] sm:$0xff]
    %v4659 = vld [vmem:[#allocation16 + $0x148] sm:$0xff]
    %v4660 = vld [vmem:[#allocation16 + $0x150] sm:$0xff]
    %v4661 = vld [vmem:[#allocation16 + $0x158] sm:$0xff]
    %v4662 = vld [vmem:[#allocation16 + $0x160] sm:$0xff]
    %v4663 = vld [vmem:[#allocation16 + $0x168] sm:$0xff]
    %v4664 = vld [vmem:[#allocation16 + $0x170] sm:$0xff]
    %v4665 = vld [vmem:[#allocation16 + $0x178] sm:$0xff]
    %v4666 = vld [vmem:[#allocation16 + $0x180] sm:$0xff]
    %v4667 = vld [vmem:[#allocation16 + $0x188] sm:$0xff]
    %v4668 = vld [vmem:[#allocation16 + $0x190] sm:$0xff]
    %v4669 = vld [vmem:[#allocation16 + $0x198] sm:$0xff]
    %v4670 = vld [vmem:[#allocation16 + $0x1a0] sm:$0xff]
    %v4671 = vld [vmem:[#allocation16 + $0x1a8] sm:$0xff]
    %v4672 = vld [vmem:[#allocation16 + $0x1b0] sm:$0xff]
    %v4673 = vld [vmem:[#allocation16 + $0x1b8] sm:$0xff]
    %v4674 = vld [vmem:[#allocation16 + $0x1c0] sm:$0xff]
    %v4675 = vld [vmem:[#allocation16 + $0x1c8] sm:$0xff]
    %v4676 = vld [vmem:[#allocation16 + $0x1d0] sm:$0xff]
    %v4677 = vld [vmem:[#allocation16 + $0x1d8] sm:$0xff]
    %v4678 = vld [vmem:[#allocation16 + $0x1e0] sm:$0xff]
    %v4679 = vld [vmem:[#allocation16 + $0x1e8] sm:$0xff]
    %v4680 = vld [vmem:[#allocation16 + $0x1f0] sm:$0xff]
    %v4681 = vld [vmem:[#allocation16 + $0x1f8] sm:$0xff]
    %v4683 = vperm.slane %v4613, 0
    %v4684 = vperm.slane %v4613, 1
    %v4751 = vunpack.c.l.b16 %v4618
    %v4752 = vunpack.c.h.b16 %v4618
    %v4753 = vunpack.c.l.b16 %v4619
    %v4754 = vunpack.c.h.b16 %v4619
    %v4755 = vunpack.c.l.b16 %v4620
    %v4756 = vunpack.c.h.b16 %v4620
    %v4757 = vunpack.c.l.b16 %v4621
    %v4758 = vunpack.c.h.b16 %v4621
    %v4759 = vunpack.c.l.b16 %v4622
    %v4760 = vunpack.c.h.b16 %v4622
    %v4761 = vunpack.c.l.b16 %v4623
    %v4762 = vunpack.c.h.b16 %v4623
    %v4763 = vunpack.c.l.b16 %v4624
    %v4764 = vunpack.c.h.b16 %v4624
    %v4765 = vunpack.c.l.b16 %v4625
    %v4766 = vunpack.c.h.b16 %v4625
    %v4767 = vunpack.c.l.b16 %v4626
    %v4768 = vunpack.c.h.b16 %v4626
    %v4769 = vunpack.c.l.b16 %v4627
    %v4770 = vunpack.c.h.b16 %v4627
    %v4771 = vunpack.c.l.b16 %v4628
    %v4772 = vunpack.c.h.b16 %v4628
    %v4773 = vunpack.c.l.b16 %v4629
    %v4774 = vunpack.c.h.b16 %v4629
    %v4775 = vunpack.c.l.b16 %v4630
    %v4776 = vunpack.c.h.b16 %v4630
    %v4777 = vunpack.c.l.b16 %v4631
    %v4778 = vunpack.c.h.b16 %v4631
    %v4779 = vunpack.c.l.b16 %v4632
    %v4780 = vunpack.c.h.b16 %v4632
    %v4781 = vunpack.c.l.b16 %v4633
    %v4782 = vunpack.c.h.b16 %v4633
    %v4783 = vunpack.c.l.b16 %v4634
    %v4784 = vunpack.c.h.b16 %v4634
    %v4785 = vunpack.c.l.b16 %v4635
    %v4786 = vunpack.c.h.b16 %v4635
    %v4787 = vunpack.c.l.b16 %v4636
    %v4788 = vunpack.c.h.b16 %v4636
    %v4789 = vunpack.c.l.b16 %v4637
    %v4790 = vunpack.c.h.b16 %v4637
    %v4791 = vunpack.c.l.b16 %v4638
    %v4792 = vunpack.c.h.b16 %v4638
    %v4793 = vunpack.c.l.b16 %v4639
    %v4794 = vunpack.c.h.b16 %v4639
    %v4795 = vunpack.c.l.b16 %v4640
    %v4796 = vunpack.c.h.b16 %v4640
    %v4797 = vunpack.c.l.b16 %v4641
    %v4798 = vunpack.c.h.b16 %v4641
    %v4799 = vunpack.c.l.b16 %v4642
    %v4800 = vunpack.c.h.b16 %v4642
    %v4801 = vunpack.c.l.b16 %v4643
    %v4802 = vunpack.c.h.b16 %v4643
    %v4803 = vunpack.c.l.b16 %v4644
    %v4804 = vunpack.c.h.b16 %v4644
    %v4805 = vunpack.c.l.b16 %v4645
    %v4806 = vunpack.c.h.b16 %v4645
    %v4807 = vunpack.c.l.b16 %v4646
    %v4808 = vunpack.c.h.b16 %v4646
    %v4809 = vunpack.c.l.b16 %v4647
    %v4810 = vunpack.c.h.b16 %v4647
    %v4811 = vunpack.c.l.b16 %v4648
    %v4812 = vunpack.c.h.b16 %v4648
    %v4813 = vunpack.c.l.b16 %v4649
    %v4814 = vunpack.c.h.b16 %v4649
    %v4815 = vunpack.c.l.b16 %v4650
    %v4816 = vunpack.c.h.b16 %v4650
    %v4817 = vunpack.c.l.b16 %v4651
    %v4818 = vunpack.c.h.b16 %v4651
    %v4819 = vunpack.c.l.b16 %v4652
    %v4820 = vunpack.c.h.b16 %v4652
    %v4821 = vunpack.c.l.b16 %v4653
    %v4822 = vunpack.c.h.b16 %v4653
    %v4823 = vunpack.c.l.b16 %v4654
    %v4824 = vunpack.c.h.b16 %v4654
    %v4825 = vunpack.c.l.b16 %v4655
    %v4826 = vunpack.c.h.b16 %v4655
    %v4827 = vunpack.c.l.b16 %v4656
    %v4828 = vunpack.c.h.b16 %v4656
    %v4829 = vunpack.c.l.b16 %v4657
    %v4830 = vunpack.c.h.b16 %v4657
    %v4831 = vunpack.c.l.b16 %v4658
    %v4832 = vunpack.c.h.b16 %v4658
    %v4833 = vunpack.c.l.b16 %v4659
    %v4834 = vunpack.c.h.b16 %v4659
    %v4835 = vunpack.c.l.b16 %v4660
    %v4836 = vunpack.c.h.b16 %v4660
    %v4837 = vunpack.c.l.b16 %v4661
    %v4838 = vunpack.c.h.b16 %v4661
    %v4839 = vunpack.c.l.b16 %v4662
    %v4840 = vunpack.c.h.b16 %v4662
    %v4841 = vunpack.c.l.b16 %v4663
    %v4842 = vunpack.c.h.b16 %v4663
    %v4843 = vunpack.c.l.b16 %v4664
    %v4844 = vunpack.c.h.b16 %v4664
    %v4845 = vunpack.c.l.b16 %v4665
    %v4846 = vunpack.c.h.b16 %v4665
    %v4847 = vunpack.c.l.b16 %v4666
    %v4848 = vunpack.c.h.b16 %v4666
    %v4849 = vunpack.c.l.b16 %v4667
    %v4850 = vunpack.c.h.b16 %v4667
    %v4851 = vunpack.c.l.b16 %v4668
    %v4852 = vunpack.c.h.b16 %v4668
    %v4853 = vunpack.c.l.b16 %v4669
    %v4854 = vunpack.c.h.b16 %v4669
    %v4855 = vunpack.c.l.b16 %v4670
    %v4856 = vunpack.c.h.b16 %v4670
    %v4857 = vunpack.c.l.b16 %v4671
    %v4858 = vunpack.c.h.b16 %v4671
    %v4859 = vunpack.c.l.b16 %v4672
    %v4860 = vunpack.c.h.b16 %v4672
    %v4861 = vunpack.c.l.b16 %v4673
    %v4862 = vunpack.c.h.b16 %v4673
    %v4863 = vunpack.c.l.b16 %v4674
    %v4864 = vunpack.c.h.b16 %v4674
    %v4865 = vunpack.c.l.b16 %v4675
    %v4866 = vunpack.c.h.b16 %v4675
    %v4867 = vunpack.c.l.b16 %v4676
    %v4868 = vunpack.c.h.b16 %v4676
    %v4869 = vunpack.c.l.b16 %v4677
    %v4870 = vunpack.c.h.b16 %v4677
    %v4871 = vunpack.c.l.b16 %v4678
    %v4872 = vunpack.c.h.b16 %v4678
    %v4873 = vunpack.c.l.b16 %v4679
    %v4874 = vunpack.c.h.b16 %v4679
    %v4875 = vunpack.c.l.b16 %v4680
    %v4876 = vunpack.c.h.b16 %v4680
    %v4877 = vunpack.c.l.b16 %v4681
    %v4878 = vunpack.c.h.b16 %v4681
    %v4879 = vpack.c.b16 %v4753, %v4751
    %v4880 = vpack.c.b16 %v4754, %v4752
    %v4881 = vpack.c.b16 %v4757, %v4755
    %v4882 = vpack.c.b16 %v4758, %v4756
    %v4883 = vpack.c.b16 %v4761, %v4759
    %v4884 = vpack.c.b16 %v4762, %v4760
    %v4885 = vpack.c.b16 %v4765, %v4763
    %v4886 = vpack.c.b16 %v4766, %v4764
    %v4887 = vpack.c.b16 %v4769, %v4767
    %v4888 = vpack.c.b16 %v4770, %v4768
    %v4889 = vpack.c.b16 %v4773, %v4771
    %v4890 = vpack.c.b16 %v4774, %v4772
    %v4891 = vpack.c.b16 %v4777, %v4775
    %v4892 = vpack.c.b16 %v4778, %v4776
    %v4893 = vpack.c.b16 %v4781, %v4779
    %v4894 = vpack.c.b16 %v4782, %v4780
    %v4895 = vpack.c.b16 %v4785, %v4783
    %v4896 = vpack.c.b16 %v4786, %v4784
    %v4897 = vpack.c.b16 %v4789, %v4787
    %v4898 = vpack.c.b16 %v4790, %v4788
    %v4899 = vpack.c.b16 %v4793, %v4791
    %v4900 = vpack.c.b16 %v4794, %v4792
    %v4901 = vpack.c.b16 %v4797, %v4795
    %v4902 = vpack.c.b16 %v4798, %v4796
    %v4903 = vpack.c.b16 %v4801, %v4799
    %v4904 = vpack.c.b16 %v4802, %v4800
    %v4905 = vpack.c.b16 %v4805, %v4803
    %v4906 = vpack.c.b16 %v4806, %v4804
    %v4907 = vpack.c.b16 %v4809, %v4807
    %v4908 = vpack.c.b16 %v4810, %v4808
    %v4909 = vpack.c.b16 %v4813, %v4811
    %v4910 = vpack.c.b16 %v4814, %v4812
    %v4911 = vpack.c.b16 %v4817, %v4815
    %v4912 = vpack.c.b16 %v4818, %v4816
    %v4913 = vpack.c.b16 %v4821, %v4819
    %v4914 = vpack.c.b16 %v4822, %v4820
    %v4915 = vpack.c.b16 %v4825, %v4823
    %v4916 = vpack.c.b16 %v4826, %v4824
    %v4917 = vpack.c.b16 %v4829, %v4827
    %v4918 = vpack.c.b16 %v4830, %v4828
    %v4919 = vpack.c.b16 %v4833, %v4831
    %v4920 = vpack.c.b16 %v4834, %v4832
    %v4921 = vpack.c.b16 %v4837, %v4835
    %v4922 = vpack.c.b16 %v4838, %v4836
    %v4923 = vpack.c.b16 %v4841, %v4839
    %v4924 = vpack.c.b16 %v4842, %v4840
    %v4925 = vpack.c.b16 %v4845, %v4843
    %v4926 = vpack.c.b16 %v4846, %v4844
    %v4927 = vpack.c.b16 %v4849, %v4847
    %v4928 = vpack.c.b16 %v4850, %v4848
    %v4929 = vpack.c.b16 %v4853, %v4851
    %v4930 = vpack.c.b16 %v4854, %v4852
    %v4931 = vpack.c.b16 %v4857, %v4855
    %v4932 = vpack.c.b16 %v4858, %v4856
    %v4933 = vpack.c.b16 %v4861, %v4859
    %v4934 = vpack.c.b16 %v4862, %v4860
    %v4935 = vpack.c.b16 %v4865, %v4863
    %v4936 = vpack.c.b16 %v4866, %v4864
    %v4937 = vpack.c.b16 %v4869, %v4867
    %v4938 = vpack.c.b16 %v4870, %v4868
    %v4939 = vpack.c.b16 %v4873, %v4871
    %v4940 = vpack.c.b16 %v4874, %v4872
    %v4941 = vpack.c.b16 %v4877, %v4875
    %v4942 = vpack.c.b16 %v4878, %v4876
    %5007 = vmatpush.bf16.msra.mxu0 %v4893
    %5008 = vmatpush.bf16.msra.mxu0 %v4891
    %5009 = vmatpush.bf16.msra.mxu0 %v4889
    %5010 = vmatpush.bf16.msra.mxu0 %v4887
    %5011 = vmatpush.bf16.msra.mxu0 %v4885
    %5012 = vmatpush.bf16.msra.mxu0 %v4883
    %5013 = vmatpush.bf16.msra.mxu0 %v4881
    %5014 = vmatpush.bf16.msra.mxu0 %v4879
    %5015 = vmatmul.bf16.gmra.mxu0 %v4614
    %v5016 = vpop.f32.mrf.mxu0
    %v5017 = vadd.f32 %v4683, %v5016
    %v5018 = vpop.f32.mrf.mxu0
    %5019 = vdwg.mxu0
    %5020 = vmatpush.bf16.msra.mxu0 %v4909
    %5021 = vmatpush.bf16.msra.mxu0 %v4907
    %5022 = vmatpush.bf16.msra.mxu0 %v4905
    %5023 = vmatpush.bf16.msra.mxu0 %v4903
    %5024 = vmatpush.bf16.msra.mxu0 %v4901
    %5025 = vmatpush.bf16.msra.mxu0 %v4899
    %5026 = vmatpush.bf16.msra.mxu0 %v4897
    %5027 = vmatpush.bf16.msra.mxu0 %v4895
    %5028 = vmatmul.bf16.gmra.mxu0 %v4615
    %v5029 = vpop.f32.mrf.mxu0
    %v5030 = vadd.f32 %v5017, %v5029
    %v5031 = vpop.f32.mrf.mxu0
    %5032 = vdwg.mxu0
    %5033 = vmatpush.bf16.msra.mxu0 %v4925
    %5034 = vmatpush.bf16.msra.mxu0 %v4923
    %5035 = vmatpush.bf16.msra.mxu0 %v4921
    %5036 = vmatpush.bf16.msra.mxu0 %v4919
    %5037 = vmatpush.bf16.msra.mxu0 %v4917
    %5038 = vmatpush.bf16.msra.mxu0 %v4915
    %5039 = vmatpush.bf16.msra.mxu0 %v4913
    %5040 = vmatpush.bf16.msra.mxu0 %v4911
    %5041 = vmatmul.bf16.gmra.mxu0 %v4616
    %v5042 = vpop.f32.mrf.mxu0
    %v5043 = vadd.f32 %v5030, %v5042
    %v5044 = vpop.f32.mrf.mxu0
    %5045 = vdwg.mxu0
    %5046 = vmatpush.bf16.msra.mxu0 %v4941
    %5047 = vmatpush.bf16.msra.mxu0 %v4939
    %5048 = vmatpush.bf16.msra.mxu0 %v4937
    %5049 = vmatpush.bf16.msra.mxu0 %v4935
    %5050 = vmatpush.bf16.msra.mxu0 %v4933
    %5051 = vmatpush.bf16.msra.mxu0 %v4931
    %5052 = vmatpush.bf16.msra.mxu0 %v4929
    %5053 = vmatpush.bf16.msra.mxu0 %v4927
    %5054 = vmatmul.bf16.gmra.mxu0 %v4617
    %v5055 = vpop.f32.mrf.mxu0
    %v5056 = vadd.f32 %v5043, %v5055
    %v5057 = vpop.f32.mrf.mxu0
    %5058 = vdwg.mxu0
    %5059 = vmatpush.bf16.msra.mxu0 %v4894
    %5060 = vmatpush.bf16.msra.mxu0 %v4892
    %5061 = vmatpush.bf16.msra.mxu0 %v4890
    %5062 = vmatpush.bf16.msra.mxu0 %v4888
    %5063 = vmatpush.bf16.msra.mxu0 %v4886
    %5064 = vmatpush.bf16.msra.mxu0 %v4884
    %5065 = vmatpush.bf16.msra.mxu0 %v4882
    %5066 = vmatpush.bf16.msra.mxu0 %v4880
    %5067 = vmatmul.bf16.gmra.mxu0 %v4614
    %v5068 = vpop.f32.mrf.mxu0
    %v5069 = vadd.f32 %v4684, %v5068
    %v5070 = vpop.f32.mrf.mxu0
    %5071 = vdwg.mxu0
    %5072 = vmatpush.bf16.msra.mxu0 %v4910
    %5073 = vmatpush.bf16.msra.mxu0 %v4908
    %5074 = vmatpush.bf16.msra.mxu0 %v4906
    %5075 = vmatpush.bf16.msra.mxu0 %v4904
    %5076 = vmatpush.bf16.msra.mxu0 %v4902
    %5077 = vmatpush.bf16.msra.mxu0 %v4900
    %5078 = vmatpush.bf16.msra.mxu0 %v4898
    %5079 = vmatpush.bf16.msra.mxu0 %v4896
    %5080 = vmatmul.bf16.gmra.mxu0 %v4615
    %v5081 = vpop.f32.mrf.mxu0
    %v5082 = vadd.f32 %v5069, %v5081
    %v5083 = vpop.f32.mrf.mxu0
    %5084 = vdwg.mxu0
    %5085 = vmatpush.bf16.msra.mxu0 %v4926
    %5086 = vmatpush.bf16.msra.mxu0 %v4924
    %5087 = vmatpush.bf16.msra.mxu0 %v4922
    %5088 = vmatpush.bf16.msra.mxu0 %v4920
    %5089 = vmatpush.bf16.msra.mxu0 %v4918
    %5090 = vmatpush.bf16.msra.mxu0 %v4916
    %5091 = vmatpush.bf16.msra.mxu0 %v4914
    %5092 = vmatpush.bf16.msra.mxu0 %v4912
    %5093 = vmatmul.bf16.gmra.mxu0 %v4616
    %v5094 = vpop.f32.mrf.mxu0
    %v5095 = vadd.f32 %v5082, %v5094
    %v5096 = vpop.f32.mrf.mxu0
    %5097 = vdwg.mxu0
    %5098 = vmatpush.bf16.msra.mxu0 %v4942
    %5099 = vmatpush.bf16.msra.mxu0 %v4940
    %5100 = vmatpush.bf16.msra.mxu0 %v4938
    %5101 = vmatpush.bf16.msra.mxu0 %v4936
    %5102 = vmatpush.bf16.msra.mxu0 %v4934
    %5103 = vmatpush.bf16.msra.mxu0 %v4932
    %5104 = vmatpush.bf16.msra.mxu0 %v4930
    %5105 = vmatpush.bf16.msra.mxu0 %v4928
    %5106 = vmatmul.bf16.gmra.mxu0 %v4617
    %v5107 = vpop.f32.mrf.mxu0
    %v5108 = vadd.f32 %v5095, %v5107
    %v5109 = vpop.f32.mrf.mxu0
    %5110 = vdwg.mxu0
    %v5111 = vadd.f32 %v5056, %v4107
    %v5112 = vadd.f32 %v5108, %v4108
    %v5113 = vmax.f32 %v5111, 0.0
    %v5114 = vmax.f32 %v5112, 0.0
    %v5115 = vld [vmem:[%s26] sm:$0x1]
    %v5116 = vpack.c.bf16 %v5113, %v5113
    %v5117 = vpack.c.bf16 %v5114, %v5114
    %v5118 = vld [vmem:[%s25] sm:$0xf]
    %v5119 = vld [vmem:[%s25 + $0x4] sm:$0xf]
    %v5120 = vld [vmem:[%s25 + $0x8] sm:$0xf]
    %v5121 = vld [vmem:[%s25 + $0xc] sm:$0xf]
    %v5122 = vld [vmem:[%s25 + $0x10] sm:$0xf]
    %v5123 = vld [vmem:[%s25 + $0x14] sm:$0xf]
    %v5124 = vld [vmem:[%s25 + $0x18] sm:$0xf]
    %v5125 = vld [vmem:[%s25 + $0x1c] sm:$0xf]
    %v5126 = vld [vmem:[%s25 + $0x20] sm:$0xf]
    %v5127 = vld [vmem:[%s25 + $0x24] sm:$0xf]
    %v5128 = vld [vmem:[%s25 + $0x28] sm:$0xf]
    %v5129 = vld [vmem:[%s25 + $0x2c] sm:$0xf]
    %v5130 = vld [vmem:[%s25 + $0x30] sm:$0xf]
    %v5131 = vld [vmem:[%s25 + $0x34] sm:$0xf]
    %v5132 = vld [vmem:[%s25 + $0x38] sm:$0xf]
    %v5133 = vld [vmem:[%s25 + $0x3c] sm:$0xf]
    %v5134 = vld [vmem:[%s25 + $0x40] sm:$0xf]
    %v5135 = vld [vmem:[%s25 + $0x44] sm:$0xf]
    %v5136 = vld [vmem:[%s25 + $0x48] sm:$0xf]
    %v5137 = vld [vmem:[%s25 + $0x4c] sm:$0xf]
    %v5138 = vld [vmem:[%s25 + $0x50] sm:$0xf]
    %v5139 = vld [vmem:[%s25 + $0x54] sm:$0xf]
    %v5140 = vld [vmem:[%s25 + $0x58] sm:$0xf]
    %v5141 = vld [vmem:[%s25 + $0x5c] sm:$0xf]
    %v5142 = vld [vmem:[%s25 + $0x60] sm:$0xf]
    %v5143 = vld [vmem:[%s25 + $0x64] sm:$0xf]
    %v5144 = vld [vmem:[%s25 + $0x68] sm:$0xf]
    %v5145 = vld [vmem:[%s25 + $0x6c] sm:$0xf]
    %v5146 = vld [vmem:[%s25 + $0x70] sm:$0xf]
    %v5147 = vld [vmem:[%s25 + $0x74] sm:$0xf]
    %v5148 = vld [vmem:[%s25 + $0x78] sm:$0xf]
    %v5149 = vld [vmem:[%s25 + $0x7c] sm:$0xf]
    %v5151 = vperm.slane %v5115, 0
    %v5185 = vunpack.c.l.b16 %v5118
    %v5186 = vunpack.c.l.b16 %v5119
    %v5187 = vunpack.c.l.b16 %v5120
    %v5188 = vunpack.c.l.b16 %v5121
    %v5189 = vunpack.c.l.b16 %v5122
    %v5190 = vunpack.c.l.b16 %v5123
    %v5191 = vunpack.c.l.b16 %v5124
    %v5192 = vunpack.c.l.b16 %v5125
    %v5193 = vunpack.c.l.b16 %v5126
    %v5194 = vunpack.c.l.b16 %v5127
    %v5195 = vunpack.c.l.b16 %v5128
    %v5196 = vunpack.c.l.b16 %v5129
    %v5197 = vunpack.c.l.b16 %v5130
    %v5198 = vunpack.c.l.b16 %v5131
    %v5199 = vunpack.c.l.b16 %v5132
    %v5200 = vunpack.c.l.b16 %v5133
    %v5201 = vunpack.c.l.b16 %v5134
    %v5202 = vunpack.c.l.b16 %v5135
    %v5203 = vunpack.c.l.b16 %v5136
    %v5204 = vunpack.c.l.b16 %v5137
    %v5205 = vunpack.c.l.b16 %v5138
    %v5206 = vunpack.c.l.b16 %v5139
    %v5207 = vunpack.c.l.b16 %v5140
    %v5208 = vunpack.c.l.b16 %v5141
    %v5209 = vunpack.c.l.b16 %v5142
    %v5210 = vunpack.c.l.b16 %v5143
    %v5211 = vunpack.c.l.b16 %v5144
    %v5212 = vunpack.c.l.b16 %v5145
    %v5213 = vunpack.c.l.b16 %v5146
    %v5214 = vunpack.c.l.b16 %v5147
    %v5215 = vunpack.c.l.b16 %v5148
    %v5216 = vunpack.c.l.b16 %v5149
    %v5217 = vpack.c.b16 %v5186, %v5185
    %v5218 = vpack.c.b16 %v5188, %v5187
    %v5219 = vpack.c.b16 %v5190, %v5189
    %v5220 = vpack.c.b16 %v5192, %v5191
    %v5221 = vpack.c.b16 %v5194, %v5193
    %v5222 = vpack.c.b16 %v5196, %v5195
    %v5223 = vpack.c.b16 %v5198, %v5197
    %v5224 = vpack.c.b16 %v5200, %v5199
    %v5225 = vpack.c.b16 %v5202, %v5201
    %v5226 = vpack.c.b16 %v5204, %v5203
    %v5227 = vpack.c.b16 %v5206, %v5205
    %v5228 = vpack.c.b16 %v5208, %v5207
    %v5229 = vpack.c.b16 %v5210, %v5209
    %v5230 = vpack.c.b16 %v5212, %v5211
    %v5231 = vpack.c.b16 %v5214, %v5213
    %v5232 = vpack.c.b16 %v5216, %v5215
    %5249 = vmatpush.bf16.msra.mxu0 %v5224
    %5250 = vmatpush.bf16.msra.mxu0 %v5223
    %5251 = vmatpush.bf16.msra.mxu0 %v5222
    %5252 = vmatpush.bf16.msra.mxu0 %v5221
    %5253 = vmatpush.bf16.msra.mxu0 %v5220
    %5254 = vmatpush.bf16.msra.mxu0 %v5219
    %5255 = vmatpush.bf16.msra.mxu0 %v5218
    %5256 = vmatpush.bf16.msra.mxu0 %v5217
    %5257 = vmatmul.bf16.gmra.mxu0 %v5116
    %v5258 = vpop.f32.mrf.mxu0
    %v5259 = vadd.f32 %v5151, %v5258
    %v5260 = vpop.f32.mrf.mxu0
    %5261 = vdwg.mxu0
    %5262 = vmatpush.bf16.msra.mxu0 %v5232
    %5263 = vmatpush.bf16.msra.mxu0 %v5231
    %5264 = vmatpush.bf16.msra.mxu0 %v5230
    %5265 = vmatpush.bf16.msra.mxu0 %v5229
    %5266 = vmatpush.bf16.msra.mxu0 %v5228
    %5267 = vmatpush.bf16.msra.mxu0 %v5227
    %5268 = vmatpush.bf16.msra.mxu0 %v5226
    %5269 = vmatpush.bf16.msra.mxu0 %v5225
    %5270 = vmatmul.bf16.gmra.mxu0 %v5117
    %v5271 = vpop.f32.mrf.mxu0
    %v5272 = vadd.f32 %v5259, %v5271
    %v5273 = vpop.f32.mrf.mxu0
    %5274 = vdwg.mxu0
    %vm5275 = vcmask 130048
    %5276 = vst.msk [vmem:[%s27] sm:$0xff] %vm5275, %v5272
    // Predicated region
    $region150: #{fcn_forward.1} parent=1 // pred_check
      _
    $region151: #{fcn_forward.1} parent=1 // pred_check_branch
      %5278 = sbr.rel (0) target = $region153
    $region152: #{fcn_forward.1} parent=1 // pred_region
      _
    $region153: #{fcn_forward.1} parent=1 // pred_fallthru
      _
    // Predicated region
    $region154: #{fcn_forward.1} parent=1 // pred_check
      _
    $region155: #{fcn_forward.1} parent=1 // pred_check_branch
      %5280 = sbr.rel (0) target = $region157
    $region156: #{fcn_forward.1} parent=1 // pred_region
      _
    $region157: #{fcn_forward.1} parent=1 // pred_fallthru
      _
    %5281 = vsyncpa [#allocation3], 1
    %5282 = vsyncpa [#allocation5], 1
    %5283 = vsyncpa [#allocation8], 1
    %5284 = vsyncpa [#allocation11], 1
    %5285 = vsyncpa [#allocation14], 1
    %5286 = vsyncpa [#allocation17], 1

</llo_original>
